<compile_context>
chip_gen: v5e
topology: v5e:2x2
jax: 0.10.0
libtpu: 0.0.40
codegen_flags: <defaults>
</compile_context>

<pallas_src>
import functools
import math

import numpy as np
import jax
import jax.numpy as jnp
from jax.experimental import pallas as pl
from jax.experimental.pallas import tpu as pltpu

# ----------------------- module configuration (small) -----------------------
BATCH = 2
CHANNELS = 8                 # depth_block_channel (token / conv channel count)
DIM = 64                     # per-token dim C; must be a perfect square
SPATIAL = int(math.isqrt(DIM))   # 8 -> tokens viewed as 8x8 "images"
NUM_HEADS = 4                # only enters through the attention scale
MLP_RATIO = 4.0
HIDDEN = int(DIM * MLP_RATIO)
LN_EPS = 1e-5                # nn.LayerNorm default
LEAKY_SLOPE = 0.01           # nn.LeakyReLU default


# ------------------- constant 3x3 shift matrices (numpy) --------------------
@functools.lru_cache(maxsize=None)
def _shift_cols(S):
    """(P, 9P) matrix; x_row @ block_t == tap-t shifted (zero padded) image."""
    P = S * S
    taps = []
    for dh in (-1, 0, 1):
        for dw in (-1, 0, 1):
            t = np.zeros((P, P), np.float32)
            for i in range(S):
                ii = i + dh
                if not 0 <= ii < S:
                    continue
                for j in range(S):
                    jj = j + dw
                    if not 0 <= jj < S:
                        continue
                    t[ii * S + jj, i * S + j] = 1.0
            taps.append(t)
    return np.concatenate(taps, axis=1)


# ------------------------------ kernel helpers -------------------------------
def _layernorm(x, g, b, eps):
    mean = jnp.mean(x, axis=-1, keepdims=True)
    xc = x - mean
    var = jnp.mean(xc * xc, axis=-1, keepdims=True)
    return xc * jax.lax.rsqrt(var + eps) * g + b


def _dw_taps(sh_all, w, b, P):
    """Depthwise 3x3 conv: per-channel weighted sum of the 9 shifted copies."""
    acc = w[:, 0:1] * sh_all[:, 0:P]
    for t in range(1, 9):
        acc = acc + w[:, t:t + 1] * sh_all[:, t * P:(t + 1) * P]
    return acc + b


def _gelu_erf(x):
    # exact (erf-based) nn.GELU; erf via Abramowitz & Stegun 7.1.26, |err|<1.5e-7
    z = x * 0.7071067811865476
    a = jnp.abs(z)
    t = 1.0 / (1.0 + 0.3275911 * a)
    poly = t * (0.254829592 + t * (-0.284496736 + t * (1.421413741
               + t * (-1.453152027 + t * 1.061405429))))
    erf = 1.0 - poly * jnp.exp(-a * a)
    erf = jnp.where(z >= 0, erf, -erf)
    return 0.5 * x * (1.0 + erf)


# ------------------------------ Pallas kernels -------------------------------
def _pre_attn_kernel(x_ref, g1_ref, b1_ref, tt_ref,
                     wq_ref, bq_ref, wk_ref, bk_ref, wv_ref, bv_ref,
                     wdw_ref, bdw_ref,
                     q_ref, k_ref, v_ref, xc_ref, *, P, eps):
    x = x_ref[0]                                          # (N, P) one batch slab
    tt = tt_ref[...]                                      # (P, 9P) shift matrix
    h = _layernorm(x, g1_ref[...], b1_ref[...], eps)      # norm1
    sh_h = jnp.dot(h, tt, preferred_element_type=jnp.float32)   # shifts of norm1(x)
    sh_x = jnp.dot(x, tt, preferred_element_type=jnp.float32)   # shifts of raw x
    q_ref[0] = _dw_taps(sh_h, wq_ref[...], bq_ref[...], P)
    k_ref[0] = _dw_taps(sh_h, wk_ref[...], bk_ref[...], P)
    v_ref[0] = _dw_taps(sh_h, wv_ref[...], bv_ref[...], P)
    xc_ref[0] = _dw_taps(sh_x, wdw_ref[...], bdw_ref[...], P)   # block's depthwise branch


def _attn_core_kernel(q_ref, k_ref, v_ref, o_ref, *, scale):
    q = q_ref[0]                                          # (N, S, S)
    k = k_ref[0]
    v = v_ref[0]
    s = jnp.einsum("nij,nkj->nik", q, k,
                   preferred_element_type=jnp.float32) * scale
    m = jnp.max(s, axis=-1, keepdims=True)
    e = jnp.exp(s - m)
    a = e / jnp.sum(e, axis=-1, keepdims=True)
    o_ref[0] = jnp.einsum("nik,nkj->nij", a, v,
                          preferred_element_type=jnp.float32)


def _post_kernel(x_ref, yat_ref, xconv_ref,
                 pw_ref, pb_ref, g2_ref, b2_ref,
                 f1w_ref, f1b_ref, f2w_ref, f2b_ref,
                 w1a_ref, w1b_ref, c1b_ref, w3_ref, c3b_ref, tt_ref,
                 o_ref, *, P, eps):
    x = x_ref[0]                                          # (N, C) block input tokens
    yat = yat_ref[0]                                      # (N, C) attention out (token layout)
    x_conv = xconv_ref[0]                                 # (N, P) depthwise branch
    # proj + residual
    xa = x + jnp.dot(yat, pw_ref[...],
                     preferred_element_type=jnp.float32) + pb_ref[...]
    # norm2 + MLP (GELU fused into the fc1 epilogue) + residual
    h = _layernorm(xa, g2_ref[...], b2_ref[...], eps)
    hid = _gelu_erf(jnp.dot(h, f1w_ref[...],
                            preferred_element_type=jnp.float32) + f1b_ref[...])
    x_trans = xa + jnp.dot(hid, f2w_ref[...],
                           preferred_element_type=jnp.float32) + f2b_ref[...]
    # conv_1x1 over concat([x_conv, x_trans], channel) -> folded into two matmuls
    y1 = (jnp.dot(w1a_ref[...], x_conv, preferred_element_type=jnp.float32)
          + jnp.dot(w1b_ref[...], x_trans, preferred_element_type=jnp.float32)
          + c1b_ref[...])
    # conv_3x3 (pad=1): shift matmul + per-tap channel mixing
    sh = jnp.dot(y1, tt_ref[...], preferred_element_type=jnp.float32)   # (N, 9P)
    w3 = w3_ref[...]                                      # (9, N, N)
    y = c3b_ref[...] + jnp.dot(w3[0], sh[:, 0:P],
                               preferred_element_type=jnp.float32)
    for t in range(1, 9):
        y = y + jnp.dot(w3[t], sh[:, t * P:(t + 1) * P],
                        preferred_element_type=jnp.float32)
    # LeakyReLU (slope 0.01); dropout is identity (p = 0 / eval)
    o_ref[0] = jnp.where(y >= 0, y, LEAKY_SLOPE * y)


# ------------------------------ pallas_call wrappers -------------------------
def _full_spec(a):
    return pl.BlockSpec(a.shape, lambda b, nd=a.ndim: (0,) * nd)


def _pre_attention(x_tok, g1, b1, tt, wq, bq, wk, bk, wv, bv, wdw, bdw, *, eps):
    B, N, C = x_tok.shape
    args = (x_tok, g1, b1, tt, wq, bq, wk, bk, wv, bv, wdw, bdw)
    in_specs = [pl.BlockSpec((1, N, C), lambda b: (b, 0, 0))] + \
               [_full_spec(a) for a in args[1:]]
    return pl.pallas_call(
        functools.partial(_pre_attn_kernel, P=C, eps=eps),
        out_shape=tuple(jax.ShapeDtypeStruct((B, N, C), jnp.float32)
                        for _ in range(4)),
        grid=(B,),
        in_specs=in_specs,
        out_specs=tuple(pl.BlockSpec((1, N, C), lambda b: (b, 0, 0))
                        for _ in range(4)),
        compiler_params=pltpu.CompilerParams(dimension_semantics=("parallel",)),
    )(*args)


def _attention_core(q4, k4, v4, scale):
    B, N, S, _ = q4.shape
    spec = lambda: pl.BlockSpec((1, N, S, S), lambda b: (b, 0, 0, 0))
    return pl.pallas_call(
        functools.partial(_attn_core_kernel, scale=scale),
        out_shape=jax.ShapeDtypeStruct((B, N, S, S), jnp.float32),
        grid=(B,),
        in_specs=[spec(), spec(), spec()],
        out_specs=spec(),
        compiler_params=pltpu.CompilerParams(dimension_semantics=("parallel",)),
    )(q4, k4, v4)


def _post_block(x_tok, y_tok, x_conv, pw, pb, g2, b2, f1w, f1b, f2w, f2b,
                w1a, w1b, c1b, w3t, c3b, tt, *, eps):
    B, N, C = x_tok.shape
    args = (x_tok, y_tok, x_conv, pw, pb, g2, b2, f1w, f1b, f2w, f2b,
            w1a, w1b, c1b, w3t, c3b, tt)
    in_specs = [pl.BlockSpec((1, N, C), lambda b: (b, 0, 0)) for _ in range(3)] + \
               [_full_spec(a) for a in args[3:]]
    return pl.pallas_call(
        functools.partial(_post_kernel, P=C, eps=eps),
        out_shape=jax.ShapeDtypeStruct((B, N, C), jnp.float32),
        grid=(B,),
        in_specs=in_specs,
        out_specs=pl.BlockSpec((1, N, C), lambda b: (b, 0, 0)),
        compiler_params=pltpu.CompilerParams(dimension_semantics=("parallel",)),
    )(*args)


# ------------------------------ module forward -------------------------------
def conv_attention_block(x, p, num_heads=NUM_HEADS, eps=LN_EPS):
    """Conv_Attention_Block.forward.  x: (B, N, C) tokens or (B, N, S, S)."""
    if x.ndim == 3:
        B, N, C = x.shape
        S = int(math.isqrt(C))
        x_tok = x
        dw = p["dw1"]                       # self.depthwise_conv
    else:
        B, N, S, S2 = x.shape
        assert S == S2
        C = S * S2
        x_tok = x.reshape(B, N, C)
        dw = p["dw2"]                       # self.depthwise_conv2
    scale = float((C // num_heads) ** -0.5)
    tt = jnp.asarray(_shift_cols(S))        # (P, 9P) constant

    # K1: norm1 + fused q/k/v depthwise convs + standalone depthwise conv
    q, k, v, x_conv = _pre_attention(
        x_tok,
        p["ln1_g"].reshape(1, C), p["ln1_b"].reshape(1, C), tt,
        p["q"]["w"].reshape(N, 9), p["q"]["b"].reshape(N, 1),
        p["k"]["w"].reshape(N, 9), p["k"]["b"].reshape(N, 1),
        p["v"]["w"].reshape(N, 9), p["v"]["b"].reshape(N, 1),
        dw["w"].reshape(N, 9), dw["b"].reshape(N, 1),
        eps=eps)

    # K2: attention core (all channels of a batch in one grid step)
    av = _attention_core(q.reshape(B, N, S, S), k.reshape(B, N, S, S),
                         v.reshape(B, N, S, S), scale)

    # torch: (attn @ v).transpose(1, 2).reshape(B, N, C)  -> tiny XLA layout glue
    y_tok = jnp.transpose(av, (0, 2, 1, 3)).reshape(B, N, C)

    # K3: proj + residuals + norm2 + MLP(GELU) + conv1x1 + conv3x3 + LeakyReLU
    w1 = p["c1_w"].reshape(N, 2 * N)
    out = _post_block(
        x_tok, y_tok, x_conv,
        p["proj_w"].T, p["proj_b"].reshape(1, C),
        p["ln2_g"].reshape(1, C), p["ln2_b"].reshape(1, C),
        p["fc1_w"].T, p["fc1_b"].reshape(1, -1),
        p["fc2_w"].T, p["fc2_b"].reshape(1, C),
        w1[:, :N], w1[:, N:], p["c1_b"].reshape(N, 1),
        p["c3_w"].reshape(N, N, 9).transpose(2, 0, 1), p["c3_b"].reshape(N, 1),
        tt, eps=eps)
    return out.reshape(B, N, S, S)


# ------------------------------ deterministic init ---------------------------
def init_params(key):
    ks = iter(jax.random.split(key, 32))

    def nrm(shape, s=0.05):
        return s * jax.random.normal(next(ks), shape, jnp.float32)

    def dwp():
        return {"w": nrm((CHANNELS, 1, 3, 3)), "b": nrm((CHANNELS,))}

    return {
        "ln1_g": jnp.ones((DIM,), jnp.float32),
        "ln1_b": jnp.zeros((DIM,), jnp.float32),
        "q": dwp(), "k": dwp(), "v": dwp(),
        "proj_w": nrm((DIM, DIM)), "proj_b": nrm((DIM,)),
        "ln2_g": jnp.ones((DIM,), jnp.float32),
        "ln2_b": jnp.zeros((DIM,), jnp.float32),
        "fc1_w": nrm((HIDDEN, DIM)), "fc1_b": nrm((HIDDEN,)),
        "fc2_w": nrm((DIM, HIDDEN)), "fc2_b": nrm((DIM,)),
        "dw1": dwp(),                       # depthwise_conv   (3-D input branch)
        "dw2": dwp(),                       # depthwise_conv2  (4-D input branch)
        "c1_w": nrm((CHANNELS, 2 * CHANNELS, 1, 1)), "c1_b": nrm((CHANNELS,)),
        "c3_w": nrm((CHANNELS, CHANNELS, 3, 3)), "c3_b": nrm((CHANNELS,)),
    }


# ----------------------------------- main ------------------------------------
if __name__ == "__main__":
    key = jax.random.PRNGKey(0)
    kp, k3, k4 = jax.random.split(key, 3)
    params = init_params(kp)

    x3 = jax.random.normal(k3, (BATCH, CHANNELS, DIM), jnp.float32)            # 3-D branch
    x4 = jax.random.normal(k4, (BATCH, CHANNELS, SPATIAL, SPATIAL), jnp.float32)  # 4-D branch

    fwd = jax.jit(conv_attention_block)
    y3 = fwd(x3, params)
    y4 = fwd(x4, params)
    jax.block_until_ready((y3, y4))

    assert y3.shape == (BATCH, CHANNELS, SPATIAL, SPATIAL)
    assert y4.shape == (BATCH, CHANNELS, SPATIAL, SPATIAL)
    assert bool(jnp.all(jnp.isfinite(y3))) and bool(jnp.all(jnp.isfinite(y4)))
    print("KERNEL_OK")
</pallas_src>

<mosaic_0001>
module attributes {stable_mosaic.version = 11 : i64} {
  func.func @_pre_attn_kernel(%arg0: i32, %arg1: memref<1x8x64xf32, #tpu.memory_space<vmem>>, %arg2: memref<1x64xf32, #tpu.memory_space<vmem>>, %arg3: memref<1x64xf32, #tpu.memory_space<vmem>>, %arg4: memref<64x576xf32, #tpu.memory_space<vmem>>, %arg5: memref<8x9xf32, #tpu.memory_space<vmem>>, %arg6: memref<8x1xf32, #tpu.memory_space<vmem>>, %arg7: memref<8x9xf32, #tpu.memory_space<vmem>>, %arg8: memref<8x1xf32, #tpu.memory_space<vmem>>, %arg9: memref<8x9xf32, #tpu.memory_space<vmem>>, %arg10: memref<8x1xf32, #tpu.memory_space<vmem>>, %arg11: memref<8x9xf32, #tpu.memory_space<vmem>>, %arg12: memref<8x1xf32, #tpu.memory_space<vmem>>, %arg13: memref<1x8x64xf32, #tpu.memory_space<vmem>>, %arg14: memref<1x8x64xf32, #tpu.memory_space<vmem>>, %arg15: memref<1x8x64xf32, #tpu.memory_space<vmem>>, %arg16: memref<1x8x64xf32, #tpu.memory_space<vmem>>) attributes {dimension_semantics = [#tpu.dimension_semantics<parallel>], iteration_bounds = array<i64: 2>, scalar_prefetch = 0 : i64, scratch_operands = 0 : i64, tpu.core_type = #tpu.core_type<tc>, window_params = [{transform_indices = @transform_0, window_bounds = array<i64: 1, 8, 64>}, {pipeline_mode = #tpu.pipeline_mode<synchronous>, transform_indices = @transform_1, window_bounds = array<i64: 1, 64>}, {pipeline_mode = #tpu.pipeline_mode<synchronous>, transform_indices = @transform_2, window_bounds = array<i64: 1, 64>}, {pipeline_mode = #tpu.pipeline_mode<synchronous>, transform_indices = @transform_3, window_bounds = array<i64: 64, 576>}, {pipeline_mode = #tpu.pipeline_mode<synchronous>, transform_indices = @transform_4, window_bounds = array<i64: 8, 9>}, {pipeline_mode = #tpu.pipeline_mode<synchronous>, transform_indices = @transform_5, window_bounds = array<i64: 8, 1>}, {pipeline_mode = #tpu.pipeline_mode<synchronous>, transform_indices = @transform_6, window_bounds = array<i64: 8, 9>}, {pipeline_mode = #tpu.pipeline_mode<synchronous>, transform_indices = @transform_7, window_bounds = array<i64: 8, 1>}, {pipeline_mode = #tpu.pipeline_mode<synchronous>, transform_indices = @transform_8, window_bounds = array<i64: 8, 9>}, {pipeline_mode = #tpu.pipeline_mode<synchronous>, transform_indices = @transform_9, window_bounds = array<i64: 8, 1>}, {pipeline_mode = #tpu.pipeline_mode<synchronous>, transform_indices = @transform_10, window_bounds = array<i64: 8, 9>}, {pipeline_mode = #tpu.pipeline_mode<synchronous>, transform_indices = @transform_11, window_bounds = array<i64: 8, 1>}, {transform_indices = @transform_12, window_bounds = array<i64: 1, 8, 64>}, {transform_indices = @transform_13, window_bounds = array<i64: 1, 8, 64>}, {transform_indices = @transform_14, window_bounds = array<i64: 1, 8, 64>}, {transform_indices = @transform_15, window_bounds = array<i64: 1, 8, 64>}]} {
    %c0 = arith.constant 0 : index
    %c0_0 = arith.constant 0 : index
    %c0_1 = arith.constant 0 : index
    %0 = vector.load %arg1[%c0, %c0_0, %c0_1] : memref<1x8x64xf32, #tpu.memory_space<vmem>>, vector<1x8x64xf32>
    %1 = vector.shape_cast %0 : vector<1x8x64xf32> to vector<8x64xf32>
    %c0_2 = arith.constant 0 : index
    %c0_3 = arith.constant 0 : index
    %2 = vector.load %arg4[%c0_2, %c0_3] : memref<64x576xf32, #tpu.memory_space<vmem>>, vector<64x576xf32>
    %c0_4 = arith.constant 0 : index
    %c0_5 = arith.constant 0 : index
    %3 = vector.load %arg2[%c0_4, %c0_5] : memref<1x64xf32, #tpu.memory_space<vmem>>, vector<1x64xf32>
    %c0_6 = arith.constant 0 : index
    %c0_7 = arith.constant 0 : index
    %4 = vector.load %arg3[%c0_6, %c0_7] : memref<1x64xf32, #tpu.memory_space<vmem>>, vector<1x64xf32>
    %cst = arith.constant dense<0.000000e+00> : vector<8xf32>
    %5 = vector.multi_reduction <add>, %1, %cst [1] : vector<8x64xf32> to vector<8xf32>
    %6 = vector.shape_cast %5 : vector<8xf32> to vector<8x1xf32>
    %cst_8 = arith.constant 6.400000e+01 : f32
    %7 = vector.broadcast %cst_8 : f32 to vector<8x1xf32>
    %8 = arith.divf %6, %7 : vector<8x1xf32>
    %9 = vector.broadcast %8 : vector<8x1xf32> to vector<8x64xf32>
    %10 = arith.subf %1, %9 : vector<8x64xf32>
    %11 = arith.mulf %10, %10 : vector<8x64xf32>
    %cst_9 = arith.constant dense<0.000000e+00> : vector<8xf32>
    %12 = vector.multi_reduction <add>, %11, %cst_9 [1] : vector<8x64xf32> to vector<8xf32>
    %13 = vector.shape_cast %12 : vector<8xf32> to vector<8x1xf32>
    %cst_10 = arith.constant 6.400000e+01 : f32
    %14 = vector.broadcast %cst_10 : f32 to vector<8x1xf32>
    %15 = arith.divf %13, %14 : vector<8x1xf32>
    %cst_11 = arith.constant 9.99999974E-6 : f32
    %16 = vector.broadcast %cst_11 : f32 to vector<8x1xf32>
    %17 = arith.addf %15, %16 : vector<8x1xf32>
    %18 = math.rsqrt %17 : vector<8x1xf32>
    %19 = vector.broadcast %18 : vector<8x1xf32> to vector<8x64xf32>
    %20 = arith.mulf %10, %19 : vector<8x64xf32>
    %21 = vector.broadcast %3 : vector<1x64xf32> to vector<8x64xf32>
    %22 = arith.mulf %20, %21 : vector<8x64xf32>
    %23 = vector.broadcast %4 : vector<1x64xf32> to vector<8x64xf32>
    %24 = arith.addf %22, %23 : vector<8x64xf32>
    %cst_12 = arith.constant dense<0.000000e+00> : vector<8x576xf32>
    %25 = tpu.matmul %24, %2, %cst_12 {dimension_numbers = #tpu.dot_dimension_numbers<[1], [0], [0], [1], [0, 0, 1, 1], [], []>} : vector<8x64xf32>, vector<64x576xf32>, vector<8x576xf32> -> vector<8x576xf32>
    %cst_13 = arith.constant dense<0.000000e+00> : vector<8x576xf32>
    %26 = tpu.matmul %1, %2, %cst_13 {dimension_numbers = #tpu.dot_dimension_numbers<[1], [0], [0], [1], [0, 0, 1, 1], [], []>} : vector<8x64xf32>, vector<64x576xf32>, vector<8x576xf32> -> vector<8x576xf32>
    %c0_14 = arith.constant 0 : index
    %c0_15 = arith.constant 0 : index
    %27 = vector.load %arg5[%c0_14, %c0_15] : memref<8x9xf32, #tpu.memory_space<vmem>>, vector<8x9xf32>
    %c0_16 = arith.constant 0 : index
    %c0_17 = arith.constant 0 : index
    %28 = vector.load %arg6[%c0_16, %c0_17] : memref<8x1xf32, #tpu.memory_space<vmem>>, vector<8x1xf32>
    %29 = vector.extract_strided_slice %27 {offsets = [0, 0], sizes = [8, 1], strides = [1, 1]} : vector<8x9xf32> to vector<8x1xf32>
    %30 = vector.extract_strided_slice %25 {offsets = [0, 0], sizes = [8, 64], strides = [1, 1]} : vector<8x576xf32> to vector<8x64xf32>
    %31 = vector.broadcast %29 : vector<8x1xf32> to vector<8x64xf32>
    %32 = arith.mulf %31, %30 : vector<8x64xf32>
    %33 = vector.extract_strided_slice %27 {offsets = [0, 1], sizes = [8, 1], strides = [1, 1]} : vector<8x9xf32> to vector<8x1xf32>
    %34 = vector.extract_strided_slice %25 {offsets = [0, 64], sizes = [8, 64], strides = [1, 1]} : vector<8x576xf32> to vector<8x64xf32>
    %35 = vector.broadcast %33 : vector<8x1xf32> to vector<8x64xf32>
    %36 = arith.mulf %35, %34 : vector<8x64xf32>
    %37 = arith.addf %32, %36 : vector<8x64xf32>
    %38 = vector.extract_strided_slice %27 {offsets = [0, 2], sizes = [8, 1], strides = [1, 1]} : vector<8x9xf32> to vector<8x1xf32>
    %39 = vector.extract_strided_slice %25 {offsets = [0, 128], sizes = [8, 64], strides = [1, 1]} : vector<8x576xf32> to vector<8x64xf32>
    %40 = vector.broadcast %38 : vector<8x1xf32> to vector<8x64xf32>
    %41 = arith.mulf %40, %39 : vector<8x64xf32>
    %42 = arith.addf %37, %41 : vector<8x64xf32>
    %43 = vector.extract_strided_slice %27 {offsets = [0, 3], sizes = [8, 1], strides = [1, 1]} : vector<8x9xf32> to vector<8x1xf32>
    %44 = vector.extract_strided_slice %25 {offsets = [0, 192], sizes = [8, 64], strides = [1, 1]} : vector<8x576xf32> to vector<8x64xf32>
    %45 = vector.broadcast %43 : vector<8x1xf32> to vector<8x64xf32>
    %46 = arith.mulf %45, %44 : vector<8x64xf32>
    %47 = arith.addf %42, %46 : vector<8x64xf32>
    %48 = vector.extract_strided_slice %27 {offsets = [0, 4], sizes = [8, 1], strides = [1, 1]} : vector<8x9xf32> to vector<8x1xf32>
    %49 = vector.extract_strided_slice %25 {offsets = [0, 256], sizes = [8, 64], strides = [1, 1]} : vector<8x576xf32> to vector<8x64xf32>
    %50 = vector.broadcast %48 : vector<8x1xf32> to vector<8x64xf32>
    %51 = arith.mulf %50, %49 : vector<8x64xf32>
    %52 = arith.addf %47, %51 : vector<8x64xf32>
    %53 = vector.extract_strided_slice %27 {offsets = [0, 5], sizes = [8, 1], strides = [1, 1]} : vector<8x9xf32> to vector<8x1xf32>
    %54 = vector.extract_strided_slice %25 {offsets = [0, 320], sizes = [8, 64], strides = [1, 1]} : vector<8x576xf32> to vector<8x64xf32>
    %55 = vector.broadcast %53 : vector<8x1xf32> to vector<8x64xf32>
    %56 = arith.mulf %55, %54 : vector<8x64xf32>
    %57 = arith.addf %52, %56 : vector<8x64xf32>
    %58 = vector.extract_strided_slice %27 {offsets = [0, 6], sizes = [8, 1], strides = [1, 1]} : vector<8x9xf32> to vector<8x1xf32>
    %59 = vector.extract_strided_slice %25 {offsets = [0, 384], sizes = [8, 64], strides = [1, 1]} : vector<8x576xf32> to vector<8x64xf32>
    %60 = vector.broadcast %58 : vector<8x1xf32> to vector<8x64xf32>
    %61 = arith.mulf %60, %59 : vector<8x64xf32>
    %62 = arith.addf %57, %61 : vector<8x64xf32>
    %63 = vector.extract_strided_slice %27 {offsets = [0, 7], sizes = [8, 1], strides = [1, 1]} : vector<8x9xf32> to vector<8x1xf32>
    %64 = vector.extract_strided_slice %25 {offsets = [0, 448], sizes = [8, 64], strides = [1, 1]} : vector<8x576xf32> to vector<8x64xf32>
    %65 = vector.broadcast %63 : vector<8x1xf32> to vector<8x64xf32>
    %66 = arith.mulf %65, %64 : vector<8x64xf32>
    %67 = arith.addf %62, %66 : vector<8x64xf32>
    %68 = vector.extract_strided_slice %27 {offsets = [0, 8], sizes = [8, 1], strides = [1, 1]} : vector<8x9xf32> to vector<8x1xf32>
    %69 = vector.extract_strided_slice %25 {offsets = [0, 512], sizes = [8, 64], strides = [1, 1]} : vector<8x576xf32> to vector<8x64xf32>
    %70 = vector.broadcast %68 : vector<8x1xf32> to vector<8x64xf32>
    %71 = arith.mulf %70, %69 : vector<8x64xf32>
    %72 = arith.addf %67, %71 : vector<8x64xf32>
    %73 = vector.broadcast %28 : vector<8x1xf32> to vector<8x64xf32>
    %74 = arith.addf %72, %73 : vector<8x64xf32>
    %c0_18 = arith.constant 0 : index
    %c0_19 = arith.constant 0 : index
    %c0_20 = arith.constant 0 : index
    %75 = vector.load %arg13[%c0_18, %c0_19, %c0_20] : memref<1x8x64xf32, #tpu.memory_space<vmem>>, vector<1x8x64xf32>
    %76 = vector.shape_cast %75 : vector<1x8x64xf32> to vector<8x64xf32>
    %77 = vector.shape_cast %74 : vector<8x64xf32> to vector<1x8x64xf32>
    tpu.vector_store %arg13[%c0_18, %c0_19, %c0_20], %77 {strides = array<i32>} : memref<1x8x64xf32, #tpu.memory_space<vmem>>, vector<1x8x64xf32>,
    %c0_21 = arith.constant 0 : index
    %c0_22 = arith.constant 0 : index
    %78 = vector.load %arg7[%c0_21, %c0_22] : memref<8x9xf32, #tpu.memory_space<vmem>>, vector<8x9xf32>
    %c0_23 = arith.constant 0 : index
    %c0_24 = arith.constant 0 : index
    %79 = vector.load %arg8[%c0_23, %c0_24] : memref<8x1xf32, #tpu.memory_space<vmem>>, vector<8x1xf32>
    %80 = vector.extract_strided_slice %78 {offsets = [0, 0], sizes = [8, 1], strides = [1, 1]} : vector<8x9xf32> to vector<8x1xf32>
    %81 = vector.extract_strided_slice %25 {offsets = [0, 0], sizes = [8, 64], strides = [1, 1]} : vector<8x576xf32> to vector<8x64xf32>
    %82 = vector.broadcast %80 : vector<8x1xf32> to vector<8x64xf32>
    %83 = arith.mulf %82, %81 : vector<8x64xf32>
    %84 = vector.extract_strided_slice %78 {offsets = [0, 1], sizes = [8, 1], strides = [1, 1]} : vector<8x9xf32> to vector<8x1xf32>
    %85 = vector.extract_strided_slice %25 {offsets = [0, 64], sizes = [8, 64], strides = [1, 1]} : vector<8x576xf32> to vector<8x64xf32>
    %86 = vector.broadcast %84 : vector<8x1xf32> to vector<8x64xf32>
    %87 = arith.mulf %86, %85 : vector<8x64xf32>
    %88 = arith.addf %83, %87 : vector<8x64xf32>
    %89 = vector.extract_strided_slice %78 {offsets = [0, 2], sizes = [8, 1], strides = [1, 1]} : vector<8x9xf32> to vector<8x1xf32>
    %90 = vector.extract_strided_slice %25 {offsets = [0, 128], sizes = [8, 64], strides = [1, 1]} : vector<8x576xf32> to vector<8x64xf32>
    %91 = vector.broadcast %89 : vector<8x1xf32> to vector<8x64xf32>
    %92 = arith.mulf %91, %90 : vector<8x64xf32>
    %93 = arith.addf %88, %92 : vector<8x64xf32>
    %94 = vector.extract_strided_slice %78 {offsets = [0, 3], sizes = [8, 1], strides = [1, 1]} : vector<8x9xf32> to vector<8x1xf32>
    %95 = vector.extract_strided_slice %25 {offsets = [0, 192], sizes = [8, 64], strides = [1, 1]} : vector<8x576xf32> to vector<8x64xf32>
    %96 = vector.broadcast %94 : vector<8x1xf32> to vector<8x64xf32>
    %97 = arith.mulf %96, %95 : vector<8x64xf32>
    %98 = arith.addf %93, %97 : vector<8x64xf32>
    %99 = vector.extract_strided_slice %78 {offsets = [0, 4], sizes = [8, 1], strides = [1, 1]} : vector<8x9xf32> to vector<8x1xf32>
    %100 = vector.extract_strided_slice %25 {offsets = [0, 256], sizes = [8, 64], strides = [1, 1]} : vector<8x576xf32> to vector<8x64xf32>
    %101 = vector.broadcast %99 : vector<8x1xf32> to vector<8x64xf32>
    %102 = arith.mulf %101, %100 : vector<8x64xf32>
    %103 = arith.addf %98, %102 : vector<8x64xf32>
    %104 = vector.extract_strided_slice %78 {offsets = [0, 5], sizes = [8, 1], strides = [1, 1]} : vector<8x9xf32> to vector<8x1xf32>
    %105 = vector.extract_strided_slice %25 {offsets = [0, 320], sizes = [8, 64], strides = [1, 1]} : vector<8x576xf32> to vector<8x64xf32>
    %106 = vector.broadcast %104 : vector<8x1xf32> to vector<8x64xf32>
    %107 = arith.mulf %106, %105 : vector<8x64xf32>
    %108 = arith.addf %103, %107 : vector<8x64xf32>
    %109 = vector.extract_strided_slice %78 {offsets = [0, 6], sizes = [8, 1], strides = [1, 1]} : vector<8x9xf32> to vector<8x1xf32>
    %110 = vector.extract_strided_slice %25 {offsets = [0, 384], sizes = [8, 64], strides = [1, 1]} : vector<8x576xf32> to vector<8x64xf32>
    %111 = vector.broadcast %109 : vector<8x1xf32> to vector<8x64xf32>
    %112 = arith.mulf %111, %110 : vector<8x64xf32>
    %113 = arith.addf %108, %112 : vector<8x64xf32>
    %114 = vector.extract_strided_slice %78 {offsets = [0, 7], sizes = [8, 1], strides = [1, 1]} : vector<8x9xf32> to vector<8x1xf32>
    %115 = vector.extract_strided_slice %25 {offsets = [0, 448], sizes = [8, 64], strides = [1, 1]} : vector<8x576xf32> to vector<8x64xf32>
    %116 = vector.broadcast %114 : vector<8x1xf32> to vector<8x64xf32>
    %117 = arith.mulf %116, %115 : vector<8x64xf32>
    %118 = arith.addf %113, %117 : vector<8x64xf32>
    %119 = vector.extract_strided_slice %78 {offsets = [0, 8], sizes = [8, 1], strides = [1, 1]} : vector<8x9xf32> to vector<8x1xf32>
    %120 = vector.extract_strided_slice %25 {offsets = [0, 512], sizes = [8, 64], strides = [1, 1]} : vector<8x576xf32> to vector<8x64xf32>
    %121 = vector.broadcast %119 : vector<8x1xf32> to vector<8x64xf32>
    %122 = arith.mulf %121, %120 : vector<8x64xf32>
    %123 = arith.addf %118, %122 : vector<8x64xf32>
    %124 = vector.broadcast %79 : vector<8x1xf32> to vector<8x64xf32>
    %125 = arith.addf %123, %124 : vector<8x64xf32>
    %c0_25 = arith.constant 0 : index
    %c0_26 = arith.constant 0 : index
    %c0_27 = arith.constant 0 : index
    %126 = vector.load %arg14[%c0_25, %c0_26, %c0_27] : memref<1x8x64xf32, #tpu.memory_space<vmem>>, vector<1x8x64xf32>
    %127 = vector.shape_cast %126 : vector<1x8x64xf32> to vector<8x64xf32>
    %128 = vector.shape_cast %125 : vector<8x64xf32> to vector<1x8x64xf32>
    tpu.vector_store %arg14[%c0_25, %c0_26, %c0_27], %128 {strides = array<i32>} : memref<1x8x64xf32, #tpu.memory_space<vmem>>, vector<1x8x64xf32>,
    %c0_28 = arith.constant 0 : index
    %c0_29 = arith.constant 0 : index
    %129 = vector.load %arg9[%c0_28, %c0_29] : memref<8x9xf32, #tpu.memory_space<vmem>>, vector<8x9xf32>
    %c0_30 = arith.constant 0 : index
    %c0_31 = arith.constant 0 : index
    %130 = vector.load %arg10[%c0_30, %c0_31] : memref<8x1xf32, #tpu.memory_space<vmem>>, vector<8x1xf32>
    %131 = vector.extract_strided_slice %129 {offsets = [0, 0], sizes = [8, 1], strides = [1, 1]} : vector<8x9xf32> to vector<8x1xf32>
    %132 = vector.extract_strided_slice %25 {offsets = [0, 0], sizes = [8, 64], strides = [1, 1]} : vector<8x576xf32> to vector<8x64xf32>
    %133 = vector.broadcast %131 : vector<8x1xf32> to vector<8x64xf32>
    %134 = arith.mulf %133, %132 : vector<8x64xf32>
    %135 = vector.extract_strided_slice %129 {offsets = [0, 1], sizes = [8, 1], strides = [1, 1]} : vector<8x9xf32> to vector<8x1xf32>
    %136 = vector.extract_strided_slice %25 {offsets = [0, 64], sizes = [8, 64], strides = [1, 1]} : vector<8x576xf32> to vector<8x64xf32>
    %137 = vector.broadcast %135 : vector<8x1xf32> to vector<8x64xf32>
    %138 = arith.mulf %137, %136 : vector<8x64xf32>
    %139 = arith.addf %134, %138 : vector<8x64xf32>
    %140 = vector.extract_strided_slice %129 {offsets = [0, 2], sizes = [8, 1], strides = [1, 1]} : vector<8x9xf32> to vector<8x1xf32>
    %141 = vector.extract_strided_slice %25 {offsets = [0, 128], sizes = [8, 64], strides = [1, 1]} : vector<8x576xf32> to vector<8x64xf32>
    %142 = vector.broadcast %140 : vector<8x1xf32> to vector<8x64xf32>
    %143 = arith.mulf %142, %141 : vector<8x64xf32>
    %144 = arith.addf %139, %143 : vector<8x64xf32>
    %145 = vector.extract_strided_slice %129 {offsets = [0, 3], sizes = [8, 1], strides = [1, 1]} : vector<8x9xf32> to vector<8x1xf32>
    %146 = vector.extract_strided_slice %25 {offsets = [0, 192], sizes = [8, 64], strides = [1, 1]} : vector<8x576xf32> to vector<8x64xf32>
    %147 = vector.broadcast %145 : vector<8x1xf32> to vector<8x64xf32>
    %148 = arith.mulf %147, %146 : vector<8x64xf32>
    %149 = arith.addf %144, %148 : vector<8x64xf32>
    %150 = vector.extract_strided_slice %129 {offsets = [0, 4], sizes = [8, 1], strides = [1, 1]} : vector<8x9xf32> to vector<8x1xf32>
    %151 = vector.extract_strided_slice %25 {offsets = [0, 256], sizes = [8, 64], strides = [1, 1]} : vector<8x576xf32> to vector<8x64xf32>
    %152 = vector.broadcast %150 : vector<8x1xf32> to vector<8x64xf32>
    %153 = arith.mulf %152, %151 : vector<8x64xf32>
    %154 = arith.addf %149, %153 : vector<8x64xf32>
    %155 = vector.extract_strided_slice %129 {offsets = [0, 5], sizes = [8, 1], strides = [1, 1]} : vector<8x9xf32> to vector<8x1xf32>
    %156 = vector.extract_strided_slice %25 {offsets = [0, 320], sizes = [8, 64], strides = [1, 1]} : vector<8x576xf32> to vector<8x64xf32>
    %157 = vector.broadcast %155 : vector<8x1xf32> to vector<8x64xf32>
    %158 = arith.mulf %157, %156 : vector<8x64xf32>
    %159 = arith.addf %154, %158 : vector<8x64xf32>
    %160 = vector.extract_strided_slice %129 {offsets = [0, 6], sizes = [8, 1], strides = [1, 1]} : vector<8x9xf32> to vector<8x1xf32>
    %161 = vector.extract_strided_slice %25 {offsets = [0, 384], sizes = [8, 64], strides = [1, 1]} : vector<8x576xf32> to vector<8x64xf32>
    %162 = vector.broadcast %160 : vector<8x1xf32> to vector<8x64xf32>
    %163 = arith.mulf %162, %161 : vector<8x64xf32>
    %164 = arith.addf %159, %163 : vector<8x64xf32>
    %165 = vector.extract_strided_slice %129 {offsets = [0, 7], sizes = [8, 1], strides = [1, 1]} : vector<8x9xf32> to vector<8x1xf32>
    %166 = vector.extract_strided_slice %25 {offsets = [0, 448], sizes = [8, 64], strides = [1, 1]} : vector<8x576xf32> to vector<8x64xf32>
    %167 = vector.broadcast %165 : vector<8x1xf32> to vector<8x64xf32>
    %168 = arith.mulf %167, %166 : vector<8x64xf32>
    %169 = arith.addf %164, %168 : vector<8x64xf32>
    %170 = vector.extract_strided_slice %129 {offsets = [0, 8], sizes = [8, 1], strides = [1, 1]} : vector<8x9xf32> to vector<8x1xf32>
    %171 = vector.extract_strided_slice %25 {offsets = [0, 512], sizes = [8, 64], strides = [1, 1]} : vector<8x576xf32> to vector<8x64xf32>
    %172 = vector.broadcast %170 : vector<8x1xf32> to vector<8x64xf32>
    %173 = arith.mulf %172, %171 : vector<8x64xf32>
    %174 = arith.addf %169, %173 : vector<8x64xf32>
    %175 = vector.broadcast %130 : vector<8x1xf32> to vector<8x64xf32>
    %176 = arith.addf %174, %175 : vector<8x64xf32>
    %c0_32 = arith.constant 0 : index
    %c0_33 = arith.constant 0 : index
    %c0_34 = arith.constant 0 : index
    %177 = vector.load %arg15[%c0_32, %c0_33, %c0_34] : memref<1x8x64xf32, #tpu.memory_space<vmem>>, vector<1x8x64xf32>
    %178 = vector.shape_cast %177 : vector<1x8x64xf32> to vector<8x64xf32>
    %179 = vector.shape_cast %176 : vector<8x64xf32> to vector<1x8x64xf32>
    tpu.vector_store %arg15[%c0_32, %c0_33, %c0_34], %179 {strides = array<i32>} : memref<1x8x64xf32, #tpu.memory_space<vmem>>, vector<1x8x64xf32>,
    %c0_35 = arith.constant 0 : index
    %c0_36 = arith.constant 0 : index
    %180 = vector.load %arg11[%c0_35, %c0_36] : memref<8x9xf32, #tpu.memory_space<vmem>>, vector<8x9xf32>
    %c0_37 = arith.constant 0 : index
    %c0_38 = arith.constant 0 : index
    %181 = vector.load %arg12[%c0_37, %c0_38] : memref<8x1xf32, #tpu.memory_space<vmem>>, vector<8x1xf32>
    %182 = vector.extract_strided_slice %180 {offsets = [0, 0], sizes = [8, 1], strides = [1, 1]} : vector<8x9xf32> to vector<8x1xf32>
    %183 = vector.extract_strided_slice %26 {offsets = [0, 0], sizes = [8, 64], strides = [1, 1]} : vector<8x576xf32> to vector<8x64xf32>
    %184 = vector.broadcast %182 : vector<8x1xf32> to vector<8x64xf32>
    %185 = arith.mulf %184, %183 : vector<8x64xf32>
    %186 = vector.extract_strided_slice %180 {offsets = [0, 1], sizes = [8, 1], strides = [1, 1]} : vector<8x9xf32> to vector<8x1xf32>
    %187 = vector.extract_strided_slice %26 {offsets = [0, 64], sizes = [8, 64], strides = [1, 1]} : vector<8x576xf32> to vector<8x64xf32>
    %188 = vector.broadcast %186 : vector<8x1xf32> to vector<8x64xf32>
    %189 = arith.mulf %188, %187 : vector<8x64xf32>
    %190 = arith.addf %185, %189 : vector<8x64xf32>
    %191 = vector.extract_strided_slice %180 {offsets = [0, 2], sizes = [8, 1], strides = [1, 1]} : vector<8x9xf32> to vector<8x1xf32>
    %192 = vector.extract_strided_slice %26 {offsets = [0, 128], sizes = [8, 64], strides = [1, 1]} : vector<8x576xf32> to vector<8x64xf32>
    %193 = vector.broadcast %191 : vector<8x1xf32> to vector<8x64xf32>
    %194 = arith.mulf %193, %192 : vector<8x64xf32>
    %195 = arith.addf %190, %194 : vector<8x64xf32>
    %196 = vector.extract_strided_slice %180 {offsets = [0, 3], sizes = [8, 1], strides = [1, 1]} : vector<8x9xf32> to vector<8x1xf32>
    %197 = vector.extract_strided_slice %26 {offsets = [0, 192], sizes = [8, 64], strides = [1, 1]} : vector<8x576xf32> to vector<8x64xf32>
    %198 = vector.broadcast %196 : vector<8x1xf32> to vector<8x64xf32>
    %199 = arith.mulf %198, %197 : vector<8x64xf32>
    %200 = arith.addf %195, %199 : vector<8x64xf32>
    %201 = vector.extract_strided_slice %180 {offsets = [0, 4], sizes = [8, 1], strides = [1, 1]} : vector<8x9xf32> to vector<8x1xf32>
    %202 = vector.extract_strided_slice %26 {offsets = [0, 256], sizes = [8, 64], strides = [1, 1]} : vector<8x576xf32> to vector<8x64xf32>
    %203 = vector.broadcast %201 : vector<8x1xf32> to vector<8x64xf32>
    %204 = arith.mulf %203, %202 : vector<8x64xf32>
    %205 = arith.addf %200, %204 : vector<8x64xf32>
    %206 = vector.extract_strided_slice %180 {offsets = [0, 5], sizes = [8, 1], strides = [1, 1]} : vector<8x9xf32> to vector<8x1xf32>
    %207 = vector.extract_strided_slice %26 {offsets = [0, 320], sizes = [8, 64], strides = [1, 1]} : vector<8x576xf32> to vector<8x64xf32>
    %208 = vector.broadcast %206 : vector<8x1xf32> to vector<8x64xf32>
    %209 = arith.mulf %208, %207 : vector<8x64xf32>
    %210 = arith.addf %205, %209 : vector<8x64xf32>
    %211 = vector.extract_strided_slice %180 {offsets = [0, 6], sizes = [8, 1], strides = [1, 1]} : vector<8x9xf32> to vector<8x1xf32>
    %212 = vector.extract_strided_slice %26 {offsets = [0, 384], sizes = [8, 64], strides = [1, 1]} : vector<8x576xf32> to vector<8x64xf32>
    %213 = vector.broadcast %211 : vector<8x1xf32> to vector<8x64xf32>
    %214 = arith.mulf %213, %212 : vector<8x64xf32>
    %215 = arith.addf %210, %214 : vector<8x64xf32>
    %216 = vector.extract_strided_slice %180 {offsets = [0, 7], sizes = [8, 1], strides = [1, 1]} : vector<8x9xf32> to vector<8x1xf32>
    %217 = vector.extract_strided_slice %26 {offsets = [0, 448], sizes = [8, 64], strides = [1, 1]} : vector<8x576xf32> to vector<8x64xf32>
    %218 = vector.broadcast %216 : vector<8x1xf32> to vector<8x64xf32>
    %219 = arith.mulf %218, %217 : vector<8x64xf32>
    %220 = arith.addf %215, %219 : vector<8x64xf32>
    %221 = vector.extract_strided_slice %180 {offsets = [0, 8], sizes = [8, 1], strides = [1, 1]} : vector<8x9xf32> to vector<8x1xf32>
    %222 = vector.extract_strided_slice %26 {offsets = [0, 512], sizes = [8, 64], strides = [1, 1]} : vector<8x576xf32> to vector<8x64xf32>
    %223 = vector.broadcast %221 : vector<8x1xf32> to vector<8x64xf32>
    %224 = arith.mulf %223, %222 : vector<8x64xf32>
    %225 = arith.addf %220, %224 : vector<8x64xf32>
    %226 = vector.broadcast %181 : vector<8x1xf32> to vector<8x64xf32>
    %227 = arith.addf %225, %226 : vector<8x64xf32>
    %c0_39 = arith.constant 0 : index
    %c0_40 = arith.constant 0 : index
    %c0_41 = arith.constant 0 : index
    %228 = vector.load %arg16[%c0_39, %c0_40, %c0_41] : memref<1x8x64xf32, #tpu.memory_space<vmem>>, vector<1x8x64xf32>
    %229 = vector.shape_cast %228 : vector<1x8x64xf32> to vector<8x64xf32>
    %230 = vector.shape_cast %227 : vector<8x64xf32> to vector<1x8x64xf32>
    tpu.vector_store %arg16[%c0_39, %c0_40, %c0_41], %230 {strides = array<i32>} : memref<1x8x64xf32, #tpu.memory_space<vmem>>, vector<1x8x64xf32>,
    return
  }
  func.func @transform_0(%arg0: i32) -> (i32, i32, i32) {
    %c0_i32 = arith.constant 0 : i32
    %c0_i32_0 = arith.constant 0 : i32
    %c0_i32_1 = arith.constant 0 : i32
    return %arg0, %c0_i32, %c0_i32_0 : i32, i32, i32
  }
  func.func @transform_1(%arg0: i32) -> (i32, i32) {
    %c0_i32 = arith.constant 0 : i32
    %c0_i32_0 = arith.constant 0 : i32
    %c0_i32_1 = arith.constant 0 : i32
    return %c0_i32, %c0_i32_0 : i32, i32
  }
  func.func @transform_2(%arg0: i32) -> (i32, i32) {
    %c0_i32 = arith.constant 0 : i32
    %c0_i32_0 = arith.constant 0 : i32
    %c0_i32_1 = arith.constant 0 : i32
    return %c0_i32, %c0_i32_0 : i32, i32
  }
  func.func @transform_3(%arg0: i32) -> (i32, i32) {
    %c0_i32 = arith.constant 0 : i32
    %c0_i32_0 = arith.constant 0 : i32
    %c0_i32_1 = arith.constant 0 : i32
    return %c0_i32, %c0_i32_0 : i32, i32
  }
  func.func @transform_4(%arg0: i32) -> (i32, i32) {
    %c0_i32 = arith.constant 0 : i32
    %c0_i32_0 = arith.constant 0 : i32
    %c0_i32_1 = arith.constant 0 : i32
    return %c0_i32, %c0_i32_0 : i32, i32
  }
  func.func @transform_5(%arg0: i32) -> (i32, i32) {
    %c0_i32 = arith.constant 0 : i32
    %c0_i32_0 = arith.constant 0 : i32
    %c0_i32_1 = arith.constant 0 : i32
    return %c0_i32, %c0_i32_0 : i32, i32
  }
  func.func @transform_6(%arg0: i32) -> (i32, i32) {
    %c0_i32 = arith.constant 0 : i32
    %c0_i32_0 = arith.constant 0 : i32
    %c0_i32_1 = arith.constant 0 : i32
    return %c0_i32, %c0_i32_0 : i32, i32
  }
  func.func @transform_7(%arg0: i32) -> (i32, i32) {
    %c0_i32 = arith.constant 0 : i32
    %c0_i32_0 = arith.constant 0 : i32
    %c0_i32_1 = arith.constant 0 : i32
    return %c0_i32, %c0_i32_0 : i32, i32
  }
  func.func @transform_8(%arg0: i32) -> (i32, i32) {
    %c0_i32 = arith.constant 0 : i32
    %c0_i32_0 = arith.constant 0 : i32
    %c0_i32_1 = arith.constant 0 : i32
    return %c0_i32, %c0_i32_0 : i32, i32
  }
  func.func @transform_9(%arg0: i32) -> (i32, i32) {
    %c0_i32 = arith.constant 0 : i32
    %c0_i32_0 = arith.constant 0 : i32
    %c0_i32_1 = arith.constant 0 : i32
    return %c0_i32, %c0_i32_0 : i32, i32
  }
  func.func @transform_10(%arg0: i32) -> (i32, i32) {
    %c0_i32 = arith.constant 0 : i32
    %c0_i32_0 = arith.constant 0 : i32
    %c0_i32_1 = arith.constant 0 : i32
    return %c0_i32, %c0_i32_0 : i32, i32
  }
  func.func @transform_11(%arg0: i32) -> (i32, i32) {
    %c0_i32 = arith.constant 0 : i32
    %c0_i32_0 = arith.constant 0 : i32
    %c0_i32_1 = arith.constant 0 : i32
    return %c0_i32, %c0_i32_0 : i32, i32
  }
  func.func @transform_12(%arg0: i32) -> (i32, i32, i32) {
    %c0_i32 = arith.constant 0 : i32
    %c0_i32_0 = arith.constant 0 : i32
    %c0_i32_1 = arith.constant 0 : i32
    return %arg0, %c0_i32, %c0_i32_0 : i32, i32, i32
  }
  func.func @transform_13(%arg0: i32) -> (i32, i32, i32) {
    %c0_i32 = arith.constant 0 : i32
    %c0_i32_0 = arith.constant 0 : i32
    %c0_i32_1 = arith.constant 0 : i32
    return %arg0, %c0_i32, %c0_i32_0 : i32, i32, i32
  }
  func.func @transform_14(%arg0: i32) -> (i32, i32, i32) {
    %c0_i32 = arith.constant 0 : i32
    %c0_i32_0 = arith.constant 0 : i32
    %c0_i32_1 = arith.constant 0 : i32
    return %arg0, %c0_i32, %c0_i32_0 : i32, i32, i32
  }
  func.func @transform_15(%arg0: i32) -> (i32, i32, i32) {
    %c0_i32 = arith.constant 0 : i32
    %c0_i32_0 = arith.constant 0 : i32
    %c0_i32_1 = arith.constant 0 : i32
    return %arg0, %c0_i32, %c0_i32_0 : i32, i32, i32
  }
}

module attributes {stable_mosaic.version = 11 : i64} {
  func.func @_attn_core_kernel(%arg0: i32, %arg1: memref<1x8x8x8xf32, #tpu.memory_space<vmem>>, %arg2: memref<1x8x8x8xf32, #tpu.memory_space<vmem>>, %arg3: memref<1x8x8x8xf32, #tpu.memory_space<vmem>>, %arg4: memref<1x8x8x8xf32, #tpu.memory_space<vmem>>) attributes {dimension_semantics = [#tpu.dimension_semantics<parallel>], iteration_bounds = array<i64: 2>, scalar_prefetch = 0 : i64, scratch_operands = 0 : i64, tpu.core_type = #tpu.core_type<tc>, window_params = [{transform_indices = @transform_0, window_bounds = array<i64: 1, 8, 8, 8>}, {transform_indices = @transform_1, window_bounds = array<i64: 1, 8, 8, 8>}, {transform_indices = @transform_2, window_bounds = array<i64: 1, 8, 8, 8>}, {transform_indices = @transform_3, window_bounds = array<i64: 1, 8, 8, 8>}]} {
    %c0 = arith.constant 0 : index
    %c0_0 = arith.constant 0 : index
    %c0_1 = arith.constant 0 : index
    %c0_2 = arith.constant 0 : index
    %0 = vector.load %arg1[%c0, %c0_0, %c0_1, %c0_2] : memref<1x8x8x8xf32, #tpu.memory_space<vmem>>, vector<1x8x8x8xf32>
    %1 = vector.shape_cast %0 : vector<1x8x8x8xf32> to vector<8x8x8xf32>
    %c0_3 = arith.constant 0 : index
    %c0_4 = arith.constant 0 : index
    %c0_5 = arith.constant 0 : index
    %c0_6 = arith.constant 0 : index
    %2 = vector.load %arg2[%c0_3, %c0_4, %c0_5, %c0_6] : memref<1x8x8x8xf32, #tpu.memory_space<vmem>>, vector<1x8x8x8xf32>
    %3 = vector.shape_cast %2 : vector<1x8x8x8xf32> to vector<8x8x8xf32>
    %c0_7 = arith.constant 0 : index
    %c0_8 = arith.constant 0 : index
    %c0_9 = arith.constant 0 : index
    %c0_10 = arith.constant 0 : index
    %4 = vector.load %arg3[%c0_7, %c0_8, %c0_9, %c0_10] : memref<1x8x8x8xf32, #tpu.memory_space<vmem>>, vector<1x8x8x8xf32>
    %5 = vector.shape_cast %4 : vector<1x8x8x8xf32> to vector<8x8x8xf32>
    "tpu.trace_start"() <{level = 10 : i32, message = "nij,nkj->nik"}> : () -> ()
    %cst = arith.constant dense<0.000000e+00> : vector<8x8x8xf32>
    %6 = tpu.matmul %1, %3, %cst {dimension_numbers = #tpu.dot_dimension_numbers<[2], [2], [1], [1], [0, 0, 0, 1, 1, 1], [0], [0]>} : vector<8x8x8xf32>, vector<8x8x8xf32>, vector<8x8x8xf32> -> vector<8x8x8xf32>
    "tpu.trace_stop"() : () -> ()
    %cst_11 = arith.constant 2.500000e-01 : f32
    %7 = vector.broadcast %cst_11 : f32 to vector<8x8x8xf32>
    %8 = arith.mulf %6, %7 : vector<8x8x8xf32>
    %cst_12 = arith.constant dense<0xFF800000> : vector<8x8xf32>
    %9 = vector.multi_reduction <maximumf>, %8, %cst_12 [2] : vector<8x8x8xf32> to vector<8x8xf32>
    %10 = vector.shape_cast %9 : vector<8x8xf32> to vector<8x8x1xf32>
    %11 = vector.broadcast %10 : vector<8x8x1xf32> to vector<8x8x8xf32>
    %12 = arith.subf %8, %11 : vector<8x8x8xf32>
    %13 = math.exp %12 : vector<8x8x8xf32>
    %cst_13 = arith.constant dense<0.000000e+00> : vector<8x8xf32>
    %14 = vector.multi_reduction <add>, %13, %cst_13 [2] : vector<8x8x8xf32> to vector<8x8xf32>
    %15 = vector.shape_cast %14 : vector<8x8xf32> to vector<8x8x1xf32>
    %16 = vector.broadcast %15 : vector<8x8x1xf32> to vector<8x8x8xf32>
    %17 = arith.divf %13, %16 : vector<8x8x8xf32>
    "tpu.trace_start"() <{level = 10 : i32, message = "nik,nkj->nij"}> : () -> ()
    %cst_14 = arith.constant dense<0.000000e+00> : vector<8x8x8xf32>
    %18 = tpu.matmul %17, %5, %cst_14 {dimension_numbers = #tpu.dot_dimension_numbers<[2], [1], [1], [2], [0, 0, 0, 1, 1, 2], [0], [0]>} : vector<8x8x8xf32>, vector<8x8x8xf32>, vector<8x8x8xf32> -> vector<8x8x8xf32>
    "tpu.trace_stop"() : () -> ()
    %c0_15 = arith.constant 0 : index
    %c0_16 = arith.constant 0 : index
    %c0_17 = arith.constant 0 : index
    %c0_18 = arith.constant 0 : index
    %19 = vector.load %arg4[%c0_15, %c0_16, %c0_17, %c0_18] : memref<1x8x8x8xf32, #tpu.memory_space<vmem>>, vector<1x8x8x8xf32>
    %20 = vector.shape_cast %19 : vector<1x8x8x8xf32> to vector<8x8x8xf32>
    %21 = vector.shape_cast %18 : vector<8x8x8xf32> to vector<1x8x8x8xf32>
    tpu.vector_store %arg4[%c0_15, %c0_16, %c0_17, %c0_18], %21 {strides = array<i32>} : memref<1x8x8x8xf32, #tpu.memory_space<vmem>>, vector<1x8x8x8xf32>,
    return
  }
  func.func @transform_0(%arg0: i32) -> (i32, i32, i32, i32) {
    %c0_i32 = arith.constant 0 : i32
    %c0_i32_0 = arith.constant 0 : i32
    %c0_i32_1 = arith.constant 0 : i32
    %c0_i32_2 = arith.constant 0 : i32
    return %arg0, %c0_i32, %c0_i32_0, %c0_i32_1 : i32, i32, i32, i32
  }
  func.func @transform_1(%arg0: i32) -> (i32, i32, i32, i32) {
    %c0_i32 = arith.constant 0 : i32
    %c0_i32_0 = arith.constant 0 : i32
    %c0_i32_1 = arith.constant 0 : i32
    %c0_i32_2 = arith.constant 0 : i32
    return %arg0, %c0_i32, %c0_i32_0, %c0_i32_1 : i32, i32, i32, i32
  }
  func.func @transform_2(%arg0: i32) -> (i32, i32, i32, i32) {
    %c0_i32 = arith.constant 0 : i32
    %c0_i32_0 = arith.constant 0 : i32
    %c0_i32_1 = arith.constant 0 : i32
    %c0_i32_2 = arith.constant 0 : i32
    return %arg0, %c0_i32, %c0_i32_0, %c0_i32_1 : i32, i32, i32, i32
  }
  func.func @transform_3(%arg0: i32) -> (i32, i32, i32, i32) {
    %c0_i32 = arith.constant 0 : i32
    %c0_i32_0 = arith.constant 0 : i32
    %c0_i32_1 = arith.constant 0 : i32
    %c0_i32_2 = arith.constant 0 : i32
    return %arg0, %c0_i32, %c0_i32_0, %c0_i32_1 : i32, i32, i32, i32
  }
}

module attributes {stable_mosaic.version = 11 : i64} {
  func.func @_post_kernel(%arg0: i32, %arg1: memref<1x8x64xf32, #tpu.memory_space<vmem>>, %arg2: memref<1x8x64xf32, #tpu.memory_space<vmem>>, %arg3: memref<1x8x64xf32, #tpu.memory_space<vmem>>, %arg4: memref<64x64xf32, #tpu.memory_space<vmem>>, %arg5: memref<1x64xf32, #tpu.memory_space<vmem>>, %arg6: memref<1x64xf32, #tpu.memory_space<vmem>>, %arg7: memref<1x64xf32, #tpu.memory_space<vmem>>, %arg8: memref<64x256xf32, #tpu.memory_space<vmem>>, %arg9: memref<1x256xf32, #tpu.memory_space<vmem>>, %arg10: memref<256x64xf32, #tpu.memory_space<vmem>>, %arg11: memref<1x64xf32, #tpu.memory_space<vmem>>, %arg12: memref<8x8xf32, #tpu.memory_space<vmem>>, %arg13: memref<8x8xf32, #tpu.memory_space<vmem>>, %arg14: memref<8x1xf32, #tpu.memory_space<vmem>>, %arg15: memref<9x8x8xf32, #tpu.memory_space<vmem>>, %arg16: memref<8x1xf32, #tpu.memory_space<vmem>>, %arg17: memref<64x576xf32, #tpu.memory_space<vmem>>, %arg18: memref<1x8x64xf32, #tpu.memory_space<vmem>>) attributes {dimension_semantics = [#tpu.dimension_semantics<parallel>], iteration_bounds = array<i64: 2>, scalar_prefetch = 0 : i64, scratch_operands = 0 : i64, tpu.core_type = #tpu.core_type<tc>, window_params = [{transform_indices = @transform_0, window_bounds = array<i64: 1, 8, 64>}, {transform_indices = @transform_1, window_bounds = array<i64: 1, 8, 64>}, {transform_indices = @transform_2, window_bounds = array<i64: 1, 8, 64>}, {pipeline_mode = #tpu.pipeline_mode<synchronous>, transform_indices = @transform_3, window_bounds = array<i64: 64, 64>}, {pipeline_mode = #tpu.pipeline_mode<synchronous>, transform_indices = @transform_4, window_bounds = array<i64: 1, 64>}, {pipeline_mode = #tpu.pipeline_mode<synchronous>, transform_indices = @transform_5, window_bounds = array<i64: 1, 64>}, {pipeline_mode = #tpu.pipeline_mode<synchronous>, transform_indices = @transform_6, window_bounds = array<i64: 1, 64>}, {pipeline_mode = #tpu.pipeline_mode<synchronous>, transform_indices = @transform_7, window_bounds = array<i64: 64, 256>}, {pipeline_mode = #tpu.pipeline_mode<synchronous>, transform_indices = @transform_8, window_bounds = array<i64: 1, 256>}, {pipeline_mode = #tpu.pipeline_mode<synchronous>, transform_indices = @transform_9, window_bounds = array<i64: 256, 64>}, {pipeline_mode = #tpu.pipeline_mode<synchronous>, transform_indices = @transform_10, window_bounds = array<i64: 1, 64>}, {pipeline_mode = #tpu.pipeline_mode<synchronous>, transform_indices = @transform_11, window_bounds = array<i64: 8, 8>}, {pipeline_mode = #tpu.pipeline_mode<synchronous>, transform_indices = @transform_12, window_bounds = array<i64: 8, 8>}, {pipeline_mode = #tpu.pipeline_mode<synchronous>, transform_indices = @transform_13, window_bounds = array<i64: 8, 1>}, {pipeline_mode = #tpu.pipeline_mode<synchronous>, transform_indices = @transform_14, window_bounds = array<i64: 9, 8, 8>}, {pipeline_mode = #tpu.pipeline_mode<synchronous>, transform_indices = @transform_15, window_bounds = array<i64: 8, 1>}, {pipeline_mode = #tpu.pipeline_mode<synchronous>, transform_indices = @transform_16, window_bounds = array<i64: 64, 576>}, {transform_indices = @transform_17, window_bounds = array<i64: 1, 8, 64>}]} {
    %c0 = arith.constant 0 : index
    %c0_0 = arith.constant 0 : index
    %c0_1 = arith.constant 0 : index
    %0 = vector.load %arg1[%c0, %c0_0, %c0_1] : memref<1x8x64xf32, #tpu.memory_space<vmem>>, vector<1x8x64xf32>
    %1 = vector.shape_cast %0 : vector<1x8x64xf32> to vector<8x64xf32>
    %c0_2 = arith.constant 0 : index
    %c0_3 = arith.constant 0 : index
    %c0_4 = arith.constant 0 : index
    %2 = vector.load %arg2[%c0_2, %c0_3, %c0_4] : memref<1x8x64xf32, #tpu.memory_space<vmem>>, vector<1x8x64xf32>
    %3 = vector.shape_cast %2 : vector<1x8x64xf32> to vector<8x64xf32>
    %c0_5 = arith.constant 0 : index
    %c0_6 = arith.constant 0 : index
    %c0_7 = arith.constant 0 : index
    %4 = vector.load %arg3[%c0_5, %c0_6, %c0_7] : memref<1x8x64xf32, #tpu.memory_space<vmem>>, vector<1x8x64xf32>
    %5 = vector.shape_cast %4 : vector<1x8x64xf32> to vector<8x64xf32>
    %c0_8 = arith.constant 0 : index
    %c0_9 = arith.constant 0 : index
    %6 = vector.load %arg4[%c0_8, %c0_9] : memref<64x64xf32, #tpu.memory_space<vmem>>, vector<64x64xf32>
    %cst = arith.constant dense<0.000000e+00> : vector<8x64xf32>
    %7 = tpu.matmul %3, %6, %cst {dimension_numbers = #tpu.dot_dimension_numbers<[1], [0], [0], [1], [0, 0, 1, 1], [], []>} : vector<8x64xf32>, vector<64x64xf32>, vector<8x64xf32> -> vector<8x64xf32>
    %8 = arith.addf %1, %7 : vector<8x64xf32>
    %c0_10 = arith.constant 0 : index
    %c0_11 = arith.constant 0 : index
    %9 = vector.load %arg5[%c0_10, %c0_11] : memref<1x64xf32, #tpu.memory_space<vmem>>, vector<1x64xf32>
    %10 = vector.broadcast %9 : vector<1x64xf32> to vector<8x64xf32>
    %11 = arith.addf %8, %10 : vector<8x64xf32>
    %c0_12 = arith.constant 0 : index
    %c0_13 = arith.constant 0 : index
    %12 = vector.load %arg6[%c0_12, %c0_13] : memref<1x64xf32, #tpu.memory_space<vmem>>, vector<1x64xf32>
    %c0_14 = arith.constant 0 : index
    %c0_15 = arith.constant 0 : index
    %13 = vector.load %arg7[%c0_14, %c0_15] : memref<1x64xf32, #tpu.memory_space<vmem>>, vector<1x64xf32>
    %cst_16 = arith.constant dense<0.000000e+00> : vector<8xf32>
    %14 = vector.multi_reduction <add>, %11, %cst_16 [1] : vector<8x64xf32> to vector<8xf32>
    %15 = vector.shape_cast %14 : vector<8xf32> to vector<8x1xf32>
    %cst_17 = arith.constant 6.400000e+01 : f32
    %16 = vector.broadcast %cst_17 : f32 to vector<8x1xf32>
    %17 = arith.divf %15, %16 : vector<8x1xf32>
    %18 = vector.broadcast %17 : vector<8x1xf32> to vector<8x64xf32>
    %19 = arith.subf %11, %18 : vector<8x64xf32>
    %20 = arith.mulf %19, %19 : vector<8x64xf32>
    %cst_18 = arith.constant dense<0.000000e+00> : vector<8xf32>
    %21 = vector.multi_reduction <add>, %20, %cst_18 [1] : vector<8x64xf32> to vector<8xf32>
    %22 = vector.shape_cast %21 : vector<8xf32> to vector<8x1xf32>
    %cst_19 = arith.constant 6.400000e+01 : f32
    %23 = vector.broadcast %cst_19 : f32 to vector<8x1xf32>
    %24 = arith.divf %22, %23 : vector<8x1xf32>
    %cst_20 = arith.constant 9.99999974E-6 : f32
    %25 = vector.broadcast %cst_20 : f32 to vector<8x1xf32>
    %26 = arith.addf %24, %25 : vector<8x1xf32>
    %27 = math.rsqrt %26 : vector<8x1xf32>
    %28 = vector.broadcast %27 : vector<8x1xf32> to vector<8x64xf32>
    %29 = arith.mulf %19, %28 : vector<8x64xf32>
    %30 = vector.broadcast %12 : vector<1x64xf32> to vector<8x64xf32>
    %31 = arith.mulf %29, %30 : vector<8x64xf32>
    %32 = vector.broadcast %13 : vector<1x64xf32> to vector<8x64xf32>
    %33 = arith.addf %31, %32 : vector<8x64xf32>
    %c0_21 = arith.constant 0 : index
    %c0_22 = arith.constant 0 : index
    %34 = vector.load %arg8[%c0_21, %c0_22] : memref<64x256xf32, #tpu.memory_space<vmem>>, vector<64x256xf32>
    %cst_23 = arith.constant dense<0.000000e+00> : vector<8x256xf32>
    %35 = tpu.matmul %33, %34, %cst_23 {dimension_numbers = #tpu.dot_dimension_numbers<[1], [0], [0], [1], [0, 0, 1, 1], [], []>} : vector<8x64xf32>, vector<64x256xf32>, vector<8x256xf32> -> vector<8x256xf32>
    %c0_24 = arith.constant 0 : index
    %c0_25 = arith.constant 0 : index
    %36 = vector.load %arg9[%c0_24, %c0_25] : memref<1x256xf32, #tpu.memory_space<vmem>>, vector<1x256xf32>
    %37 = vector.broadcast %36 : vector<1x256xf32> to vector<8x256xf32>
    %38 = arith.addf %35, %37 : vector<8x256xf32>
    %cst_26 = arith.constant 0.707106769 : f32
    %39 = vector.broadcast %cst_26 : f32 to vector<8x256xf32>
    %40 = arith.mulf %38, %39 : vector<8x256xf32>
    %41 = math.absf %40 : vector<8x256xf32>
    %cst_27 = arith.constant 0.327591091 : f32
    %42 = vector.broadcast %cst_27 : f32 to vector<8x256xf32>
    %43 = arith.mulf %42, %41 : vector<8x256xf32>
    %cst_28 = arith.constant 1.000000e+00 : f32
    %44 = vector.broadcast %cst_28 : f32 to vector<8x256xf32>
    %45 = arith.addf %44, %43 : vector<8x256xf32>
    %cst_29 = arith.constant 1.000000e+00 : f32
    %46 = vector.broadcast %cst_29 : f32 to vector<8x256xf32>
    %47 = arith.divf %46, %45 : vector<8x256xf32>
    %cst_30 = arith.constant 1.06140542 : f32
    %48 = vector.broadcast %cst_30 : f32 to vector<8x256xf32>
    %49 = arith.mulf %47, %48 : vector<8x256xf32>
    %cst_31 = arith.constant -1.45315206 : f32
    %50 = vector.broadcast %cst_31 : f32 to vector<8x256xf32>
    %51 = arith.addf %50, %49 : vector<8x256xf32>
    %52 = arith.mulf %47, %51 : vector<8x256xf32>
    %cst_32 = arith.constant 1.42141378 : f32
    %53 = vector.broadcast %cst_32 : f32 to vector<8x256xf32>
    %54 = arith.addf %53, %52 : vector<8x256xf32>
    %55 = arith.mulf %47, %54 : vector<8x256xf32>
    %cst_33 = arith.constant -0.284496725 : f32
    %56 = vector.broadcast %cst_33 : f32 to vector<8x256xf32>
    %57 = arith.addf %56, %55 : vector<8x256xf32>
    %58 = arith.mulf %47, %57 : vector<8x256xf32>
    %cst_34 = arith.constant 0.254829586 : f32
    %59 = vector.broadcast %cst_34 : f32 to vector<8x256xf32>
    %60 = arith.addf %59, %58 : vector<8x256xf32>
    %61 = arith.mulf %47, %60 : vector<8x256xf32>
    %cst_35 = arith.constant 0.000000e+00 : f32
    %62 = vector.broadcast %cst_35 : f32 to vector<8x256xf32>
    %63 = arith.subf %62, %41 : vector<8x256xf32>
    %64 = arith.mulf %63, %41 : vector<8x256xf32>
    %65 = math.exp %64 : vector<8x256xf32>
    %66 = arith.mulf %61, %65 : vector<8x256xf32>
    %cst_36 = arith.constant 1.000000e+00 : f32
    %67 = vector.broadcast %cst_36 : f32 to vector<8x256xf32>
    %68 = arith.subf %67, %66 : vector<8x256xf32>
    %cst_37 = arith.constant 0.000000e+00 : f32
    %69 = vector.broadcast %cst_37 : f32 to vector<8x256xf32>
    %70 = arith.cmpf oge, %40, %69 : vector<8x256xf32>
    %cst_38 = arith.constant 0.000000e+00 : f32
    %71 = vector.broadcast %cst_38 : f32 to vector<8x256xf32>
    %72 = arith.subf %71, %68 : vector<8x256xf32>
    %73 = arith.select %70, %68, %72 : vector<8x256xi1>, vector<8x256xf32>
    %cst_39 = arith.constant 5.000000e-01 : f32
    %74 = vector.broadcast %cst_39 : f32 to vector<8x256xf32>
    %75 = arith.mulf %74, %38 : vector<8x256xf32>
    %cst_40 = arith.constant 1.000000e+00 : f32
    %76 = vector.broadcast %cst_40 : f32 to vector<8x256xf32>
    %77 = arith.addf %76, %73 : vector<8x256xf32>
    %78 = arith.mulf %75, %77 : vector<8x256xf32>
    %c0_41 = arith.constant 0 : index
    %c0_42 = arith.constant 0 : index
    %79 = vector.load %arg10[%c0_41, %c0_42] : memref<256x64xf32, #tpu.memory_space<vmem>>, vector<256x64xf32>
    %cst_43 = arith.constant dense<0.000000e+00> : vector<8x64xf32>
    %80 = tpu.matmul %78, %79, %cst_43 {dimension_numbers = #tpu.dot_dimension_numbers<[1], [0], [0], [1], [0, 0, 1, 1], [], []>} : vector<8x256xf32>, vector<256x64xf32>, vector<8x64xf32> -> vector<8x64xf32>
    %81 = arith.addf %11, %80 : vector<8x64xf32>
    %c0_44 = arith.constant 0 : index
    %c0_45 = arith.constant 0 : index
    %82 = vector.load %arg11[%c0_44, %c0_45] : memref<1x64xf32, #tpu.memory_space<vmem>>, vector<1x64xf32>
    %83 = vector.broadcast %82 : vector<1x64xf32> to vector<8x64xf32>
    %84 = arith.addf %81, %83 : vector<8x64xf32>
    %c0_46 = arith.constant 0 : index
    %c0_47 = arith.constant 0 : index
    %85 = vector.load %arg12[%c0_46, %c0_47] : memref<8x8xf32, #tpu.memory_space<vmem>>, vector<8x8xf32>
    %cst_48 = arith.constant dense<0.000000e+00> : vector<8x64xf32>
    %86 = tpu.matmul %85, %5, %cst_48 {dimension_numbers = #tpu.dot_dimension_numbers<[1], [0], [0], [1], [0, 0, 1, 1], [], []>} : vector<8x8xf32>, vector<8x64xf32>, vector<8x64xf32> -> vector<8x64xf32>
    %c0_49 = arith.constant 0 : index
    %c0_50 = arith.constant 0 : index
    %87 = vector.load %arg13[%c0_49, %c0_50] : memref<8x8xf32, #tpu.memory_space<vmem>>, vector<8x8xf32>
    %cst_51 = arith.constant dense<0.000000e+00> : vector<8x64xf32>
    %88 = tpu.matmul %87, %84, %cst_51 {dimension_numbers = #tpu.dot_dimension_numbers<[1], [0], [0], [1], [0, 0, 1, 1], [], []>} : vector<8x8xf32>, vector<8x64xf32>, vector<8x64xf32> -> vector<8x64xf32>
    %89 = arith.addf %86, %88 : vector<8x64xf32>
    %c0_52 = arith.constant 0 : index
    %c0_53 = arith.constant 0 : index
    %90 = vector.load %arg14[%c0_52, %c0_53] : memref<8x1xf32, #tpu.memory_space<vmem>>, vector<8x1xf32>
    %91 = vector.broadcast %90 : vector<8x1xf32> to vector<8x64xf32>
    %92 = arith.addf %89, %91 : vector<8x64xf32>
    %c0_54 = arith.constant 0 : index
    %c0_55 = arith.constant 0 : index
    %93 = vector.load %arg17[%c0_54, %c0_55] : memref<64x576xf32, #tpu.memory_space<vmem>>, vector<64x576xf32>
    %cst_56 = arith.constant dense<0.000000e+00> : vector<8x576xf32>
    %94 = tpu.matmul %92, %93, %cst_56 {dimension_numbers = #tpu.dot_dimension_numbers<[1], [0], [0], [1], [0, 0, 1, 1], [], []>} : vector<8x64xf32>, vector<64x576xf32>, vector<8x576xf32> -> vector<8x576xf32>
    %c0_57 = arith.constant 0 : index
    %c0_58 = arith.constant 0 : index
    %c0_59 = arith.constant 0 : index
    %95 = vector.load %arg15[%c0_57, %c0_58, %c0_59] : memref<9x8x8xf32, #tpu.memory_space<vmem>>, vector<9x8x8xf32>
    %c0_60 = arith.constant 0 : index
    %c0_61 = arith.constant 0 : index
    %96 = vector.load %arg16[%c0_60, %c0_61] : memref<8x1xf32, #tpu.memory_space<vmem>>, vector<8x1xf32>
    %97 = vector.extract_strided_slice %95 {offsets = [0, 0, 0], sizes = [1, 8, 8], strides = [1, 1, 1]} : vector<9x8x8xf32> to vector<1x8x8xf32>
    %98 = vector.shape_cast %97 : vector<1x8x8xf32> to vector<8x8xf32>
    %99 = vector.extract_strided_slice %94 {offsets = [0, 0], sizes = [8, 64], strides = [1, 1]} : vector<8x576xf32> to vector<8x64xf32>
    %cst_62 = arith.constant dense<0.000000e+00> : vector<8x64xf32>
    %100 = tpu.matmul %98, %99, %cst_62 {dimension_numbers = #tpu.dot_dimension_numbers<[1], [0], [0], [1], [0, 0, 1, 1], [], []>} : vector<8x8xf32>, vector<8x64xf32>, vector<8x64xf32> -> vector<8x64xf32>
    %101 = vector.broadcast %96 : vector<8x1xf32> to vector<8x64xf32>
    %102 = arith.addf %101, %100 : vector<8x64xf32>
    %103 = vector.extract_strided_slice %95 {offsets = [1, 0, 0], sizes = [1, 8, 8], strides = [1, 1, 1]} : vector<9x8x8xf32> to vector<1x8x8xf32>
    %104 = vector.shape_cast %103 : vector<1x8x8xf32> to vector<8x8xf32>
    %105 = vector.extract_strided_slice %94 {offsets = [0, 64], sizes = [8, 64], strides = [1, 1]} : vector<8x576xf32> to vector<8x64xf32>
    %cst_63 = arith.constant dense<0.000000e+00> : vector<8x64xf32>
    %106 = tpu.matmul %104, %105, %cst_63 {dimension_numbers = #tpu.dot_dimension_numbers<[1], [0], [0], [1], [0, 0, 1, 1], [], []>} : vector<8x8xf32>, vector<8x64xf32>, vector<8x64xf32> -> vector<8x64xf32>
    %107 = arith.addf %102, %106 : vector<8x64xf32>
    %108 = vector.extract_strided_slice %95 {offsets = [2, 0, 0], sizes = [1, 8, 8], strides = [1, 1, 1]} : vector<9x8x8xf32> to vector<1x8x8xf32>
    %109 = vector.shape_cast %108 : vector<1x8x8xf32> to vector<8x8xf32>
    %110 = vector.extract_strided_slice %94 {offsets = [0, 128], sizes = [8, 64], strides = [1, 1]} : vector<8x576xf32> to vector<8x64xf32>
    %cst_64 = arith.constant dense<0.000000e+00> : vector<8x64xf32>
    %111 = tpu.matmul %109, %110, %cst_64 {dimension_numbers = #tpu.dot_dimension_numbers<[1], [0], [0], [1], [0, 0, 1, 1], [], []>} : vector<8x8xf32>, vector<8x64xf32>, vector<8x64xf32> -> vector<8x64xf32>
    %112 = arith.addf %107, %111 : vector<8x64xf32>
    %113 = vector.extract_strided_slice %95 {offsets = [3, 0, 0], sizes = [1, 8, 8], strides = [1, 1, 1]} : vector<9x8x8xf32> to vector<1x8x8xf32>
    %114 = vector.shape_cast %113 : vector<1x8x8xf32> to vector<8x8xf32>
    %115 = vector.extract_strided_slice %94 {offsets = [0, 192], sizes = [8, 64], strides = [1, 1]} : vector<8x576xf32> to vector<8x64xf32>
    %cst_65 = arith.constant dense<0.000000e+00> : vector<8x64xf32>
    %116 = tpu.matmul %114, %115, %cst_65 {dimension_numbers = #tpu.dot_dimension_numbers<[1], [0], [0], [1], [0, 0, 1, 1], [], []>} : vector<8x8xf32>, vector<8x64xf32>, vector<8x64xf32> -> vector<8x64xf32>
    %117 = arith.addf %112, %116 : vector<8x64xf32>
    %118 = vector.extract_strided_slice %95 {offsets = [4, 0, 0], sizes = [1, 8, 8], strides = [1, 1, 1]} : vector<9x8x8xf32> to vector<1x8x8xf32>
    %119 = vector.shape_cast %118 : vector<1x8x8xf32> to vector<8x8xf32>
    %120 = vector.extract_strided_slice %94 {offsets = [0, 256], sizes = [8, 64], strides = [1, 1]} : vector<8x576xf32> to vector<8x64xf32>
    %cst_66 = arith.constant dense<0.000000e+00> : vector<8x64xf32>
    %121 = tpu.matmul %119, %120, %cst_66 {dimension_numbers = #tpu.dot_dimension_numbers<[1], [0], [0], [1], [0, 0, 1, 1], [], []>} : vector<8x8xf32>, vector<8x64xf32>, vector<8x64xf32> -> vector<8x64xf32>
    %122 = arith.addf %117, %121 : vector<8x64xf32>
    %123 = vector.extract_strided_slice %95 {offsets = [5, 0, 0], sizes = [1, 8, 8], strides = [1, 1, 1]} : vector<9x8x8xf32> to vector<1x8x8xf32>
    %124 = vector.shape_cast %123 : vector<1x8x8xf32> to vector<8x8xf32>
    %125 = vector.extract_strided_slice %94 {offsets = [0, 320], sizes = [8, 64], strides = [1, 1]} : vector<8x576xf32> to vector<8x64xf32>
    %cst_67 = arith.constant dense<0.000000e+00> : vector<8x64xf32>
    %126 = tpu.matmul %124, %125, %cst_67 {dimension_numbers = #tpu.dot_dimension_numbers<[1], [0], [0], [1], [0, 0, 1, 1], [], []>} : vector<8x8xf32>, vector<8x64xf32>, vector<8x64xf32> -> vector<8x64xf32>
    %127 = arith.addf %122, %126 : vector<8x64xf32>
    %128 = vector.extract_strided_slice %95 {offsets = [6, 0, 0], sizes = [1, 8, 8], strides = [1, 1, 1]} : vector<9x8x8xf32> to vector<1x8x8xf32>
    %129 = vector.shape_cast %128 : vector<1x8x8xf32> to vector<8x8xf32>
    %130 = vector.extract_strided_slice %94 {offsets = [0, 384], sizes = [8, 64], strides = [1, 1]} : vector<8x576xf32> to vector<8x64xf32>
    %cst_68 = arith.constant dense<0.000000e+00> : vector<8x64xf32>
    %131 = tpu.matmul %129, %130, %cst_68 {dimension_numbers = #tpu.dot_dimension_numbers<[1], [0], [0], [1], [0, 0, 1, 1], [], []>} : vector<8x8xf32>, vector<8x64xf32>, vector<8x64xf32> -> vector<8x64xf32>
    %132 = arith.addf %127, %131 : vector<8x64xf32>
    %133 = vector.extract_strided_slice %95 {offsets = [7, 0, 0], sizes = [1, 8, 8], strides = [1, 1, 1]} : vector<9x8x8xf32> to vector<1x8x8xf32>
    %134 = vector.shape_cast %133 : vector<1x8x8xf32> to vector<8x8xf32>
    %135 = vector.extract_strided_slice %94 {offsets = [0, 448], sizes = [8, 64], strides = [1, 1]} : vector<8x576xf32> to vector<8x64xf32>
    %cst_69 = arith.constant dense<0.000000e+00> : vector<8x64xf32>
    %136 = tpu.matmul %134, %135, %cst_69 {dimension_numbers = #tpu.dot_dimension_numbers<[1], [0], [0], [1], [0, 0, 1, 1], [], []>} : vector<8x8xf32>, vector<8x64xf32>, vector<8x64xf32> -> vector<8x64xf32>
    %137 = arith.addf %132, %136 : vector<8x64xf32>
    %138 = vector.extract_strided_slice %95 {offsets = [8, 0, 0], sizes = [1, 8, 8], strides = [1, 1, 1]} : vector<9x8x8xf32> to vector<1x8x8xf32>
    %139 = vector.shape_cast %138 : vector<1x8x8xf32> to vector<8x8xf32>
    %140 = vector.extract_strided_slice %94 {offsets = [0, 512], sizes = [8, 64], strides = [1, 1]} : vector<8x576xf32> to vector<8x64xf32>
    %cst_70 = arith.constant dense<0.000000e+00> : vector<8x64xf32>
    %141 = tpu.matmul %139, %140, %cst_70 {dimension_numbers = #tpu.dot_dimension_numbers<[1], [0], [0], [1], [0, 0, 1, 1], [], []>} : vector<8x8xf32>, vector<8x64xf32>, vector<8x64xf32> -> vector<8x64xf32>
    %142 = arith.addf %137, %141 : vector<8x64xf32>
    %cst_71 = arith.constant 0.000000e+00 : f32
    %143 = vector.broadcast %cst_71 : f32 to vector<8x64xf32>
    %144 = arith.cmpf oge, %142, %143 : vector<8x64xf32>
    %cst_72 = arith.constant 0.00999999977 : f32
    %145 = vector.broadcast %cst_72 : f32 to vector<8x64xf32>
    %146 = arith.mulf %145, %142 : vector<8x64xf32>
    %147 = arith.select %144, %142, %146 : vector<8x64xi1>, vector<8x64xf32>
    %c0_73 = arith.constant 0 : index
    %c0_74 = arith.constant 0 : index
    %c0_75 = arith.constant 0 : index
    %148 = vector.load %arg18[%c0_73, %c0_74, %c0_75] : memref<1x8x64xf32, #tpu.memory_space<vmem>>, vector<1x8x64xf32>
    %149 = vector.shape_cast %148 : vector<1x8x64xf32> to vector<8x64xf32>
    %150 = vector.shape_cast %147 : vector<8x64xf32> to vector<1x8x64xf32>
    tpu.vector_store %arg18[%c0_73, %c0_74, %c0_75], %150 {strides = array<i32>} : memref<1x8x64xf32, #tpu.memory_space<vmem>>, vector<1x8x64xf32>,
    return
  }
  func.func @transform_0(%arg0: i32) -> (i32, i32, i32) {
    %c0_i32 = arith.constant 0 : i32
    %c0_i32_0 = arith.constant 0 : i32
    %c0_i32_1 = arith.constant 0 : i32
    return %arg0, %c0_i32, %c0_i32_0 : i32, i32, i32
  }
  func.func @transform_1(%arg0: i32) -> (i32, i32, i32) {
    %c0_i32 = arith.constant 0 : i32
    %c0_i32_0 = arith.constant 0 : i32
    %c0_i32_1 = arith.constant 0 : i32
    return %arg0, %c0_i32, %c0_i32_0 : i32, i32, i32
  }
  func.func @transform_2(%arg0: i32) -> (i32, i32, i32) {
    %c0_i32 = arith.constant 0 : i32
    %c0_i32_0 = arith.constant 0 : i32
    %c0_i32_1 = arith.constant 0 : i32
    return %arg0, %c0_i32, %c0_i32_0 : i32, i32, i32
  }
  func.func @transform_3(%arg0: i32) -> (i32, i32) {
    %c0_i32 = arith.constant 0 : i32
    %c0_i32_0 = arith.constant 0 : i32
    %c0_i32_1 = arith.constant 0 : i32
    return %c0_i32, %c0_i32_0 : i32, i32
  }
  func.func @transform_4(%arg0: i32) -> (i32, i32) {
    %c0_i32 = arith.constant 0 : i32
    %c0_i32_0 = arith.constant 0 : i32
    %c0_i32_1 = arith.constant 0 : i32
    return %c0_i32, %c0_i32_0 : i32, i32
  }
  func.func @transform_5(%arg0: i32) -> (i32, i32) {
    %c0_i32 = arith.constant 0 : i32
    %c0_i32_0 = arith.constant 0 : i32
    %c0_i32_1 = arith.constant 0 : i32
    return %c0_i32, %c0_i32_0 : i32, i32
  }
  func.func @transform_6(%arg0: i32) -> (i32, i32) {
    %c0_i32 = arith.constant 0 : i32
    %c0_i32_0 = arith.constant 0 : i32
    %c0_i32_1 = arith.constant 0 : i32
    return %c0_i32, %c0_i32_0 : i32, i32
  }
  func.func @transform_7(%arg0: i32) -> (i32, i32) {
    %c0_i32 = arith.constant 0 : i32
    %c0_i32_0 = arith.constant 0 : i32
    %c0_i32_1 = arith.constant 0 : i32
    return %c0_i32, %c0_i32_0 : i32, i32
  }
  func.func @transform_8(%arg0: i32) -> (i32, i32) {
    %c0_i32 = arith.constant 0 : i32
    %c0_i32_0 = arith.constant 0 : i32
    %c0_i32_1 = arith.constant 0 : i32
    return %c0_i32, %c0_i32_0 : i32, i32
  }
  func.func @transform_9(%arg0: i32) -> (i32, i32) {
    %c0_i32 = arith.constant 0 : i32
    %c0_i32_0 = arith.constant 0 : i32
    %c0_i32_1 = arith.constant 0 : i32
    return %c0_i32, %c0_i32_0 : i32, i32
  }
  func.func @transform_10(%arg0: i32) -> (i32, i32) {
    %c0_i32 = arith.constant 0 : i32
    %c0_i32_0 = arith.constant 0 : i32
    %c0_i32_1 = arith.constant 0 : i32
    return %c0_i32, %c0_i32_0 : i32, i32
  }
  func.func @transform_11(%arg0: i32) -> (i32, i32) {
    %c0_i32 = arith.constant 0 : i32
    %c0_i32_0 = arith.constant 0 : i32
    %c0_i32_1 = arith.constant 0 : i32
    return %c0_i32, %c0_i32_0 : i32, i32
  }
  func.func @transform_12(%arg0: i32) -> (i32, i32) {
    %c0_i32 = arith.constant 0 : i32
    %c0_i32_0 = arith.constant 0 : i32
    %c0_i32_1 = arith.constant 0 : i32
    return %c0_i32, %c0_i32_0 : i32, i32
  }
  func.func @transform_13(%arg0: i32) -> (i32, i32) {
    %c0_i32 = arith.constant 0 : i32
    %c0_i32_0 = arith.constant 0 : i32
    %c0_i32_1 = arith.constant 0 : i32
    return %c0_i32, %c0_i32_0 : i32, i32
  }
  func.func @transform_14(%arg0: i32) -> (i32, i32, i32) {
    %c0_i32 = arith.constant 0 : i32
    %c0_i32_0 = arith.constant 0 : i32
    %c0_i32_1 = arith.constant 0 : i32
    %c0_i32_2 = arith.constant 0 : i32
    return %c0_i32, %c0_i32_0, %c0_i32_1 : i32, i32, i32
  }
  func.func @transform_15(%arg0: i32) -> (i32, i32) {
    %c0_i32 = arith.constant 0 : i32
    %c0_i32_0 = arith.constant 0 : i32
    %c0_i32_1 = arith.constant 0 : i32
    return %c0_i32, %c0_i32_0 : i32, i32
  }
  func.func @transform_16(%arg0: i32) -> (i32, i32) {
    %c0_i32 = arith.constant 0 : i32
    %c0_i32_0 = arith.constant 0 : i32
    %c0_i32_1 = arith.constant 0 : i32
    return %c0_i32, %c0_i32_0 : i32, i32
  }
  func.func @transform_17(%arg0: i32) -> (i32, i32, i32) {
    %c0_i32 = arith.constant 0 : i32
    %c0_i32_0 = arith.constant 0 : i32
    %c0_i32_1 = arith.constant 0 : i32
    return %arg0, %c0_i32, %c0_i32_0 : i32, i32, i32
  }
}

</mosaic_0001>

<llo_original>
// kernel: conv_attention_block.3
$region0: #{conv_attention_block.3}
  #allocation0 [shape = 'u32[]', space=smem, size = 0x4, offset = 0x4, fixed_abs, tag = 'smem constant byte address 0x4 - core index']
  #allocation1 [shape = 'u32[72,128]{1,0:T(1,128)}', space=vmem, size = 0x9000, scoped, tag = 'internal scratch']
  %s0 = inlined_call_operand.vmem [shape: f32[2,8,64], index: 0, kind: input, shape index: {}]
  %s1 = inlined_call_operand.vmem [shape: f32[1,64], index: 1, kind: input, shape index: {}]
  %s2 = inlined_call_operand.vmem [shape: f32[1,64], index: 2, kind: input, shape index: {}]
  %s3 = inlined_call_operand.hbm [shape: f32[64,576], index: 3, kind: input, shape index: {}]
  %s4 = inlined_call_operand.vmem [shape: f32[8,9], index: 4, kind: input, shape index: {}]
  %s5 = inlined_call_operand.vmem [shape: f32[8,1], index: 5, kind: input, shape index: {}]
  %s6 = inlined_call_operand.vmem [shape: f32[8,9], index: 6, kind: input, shape index: {}]
  %s7 = inlined_call_operand.vmem [shape: f32[8,1], index: 7, kind: input, shape index: {}]
  %s8 = inlined_call_operand.vmem [shape: f32[8,9], index: 8, kind: input, shape index: {}]
  %s9 = inlined_call_operand.vmem [shape: f32[8,1], index: 9, kind: input, shape index: {}]
  %s10 = inlined_call_operand.vmem [shape: f32[8,9], index: 10, kind: input, shape index: {}]
  %s11 = inlined_call_operand.vmem [shape: f32[8,1], index: 11, kind: input, shape index: {}]
  %s12 = inlined_call_operand.vmem [shape: f32[2,8,64], index: 12, kind: output, shape index: {0}]
  %s13 = inlined_call_operand.vmem [shape: f32[2,8,64], index: 13, kind: output, shape index: {1}]
  %s14 = inlined_call_operand.vmem [shape: f32[2,8,64], index: 14, kind: output, shape index: {2}]
  %s15 = inlined_call_operand.vmem [shape: f32[2,8,64], index: 15, kind: output, shape index: {3}]
  %16 = xla_tuple %s12, %s13, %s14, %s15
  %s17 = sld [smem:[#allocation0]]
  $region109: #{conv_attention_block.3} parent=0
    _
  %s19 = ssub.s32 1, %s17
  %s20 = scalar_select 0, %s19, %s17
  $region1: #{conv_attention_block.3} parent=0
    #allocation2 [shape = 'u8[163840]{0}', space=vmem, size = 0x28000, scoped, tag = 'input window, operand 3, single buffered']
    #allocation3 [shape = 's32[2]{0}', space=sflag, size = 0x8, scoped, tag = 'scoped memory for conv_attention_block.3']
    %21 = vsyncpa [#allocation3], 0
    loop: start=0, step=1, limit=4
    $region2: #{conv_attention_block.3} parent=1 // loop_pre_header
      _
    $region3: #{conv_attention_block.3} parent=1 // loop_header
      %s23 = sphi 0, %s27
      %p24 = scmp.ge.s32.totalorder %s23, 4
      %s33 = sphi 0, %s35
      %s36 = sphi 0, %s33
      %s37 = sphi 0, %s36
      %s53 = sphi 0, %s37
      %s57 = sphi 0, %s57
      %s59 = sphi 0, %s57
      %s60 = sphi 0, %s59
      %s74 = sphi 0, %s60
      %s78 = sphi 0, %s78
      %s80 = sphi 0, %s78
      %s81 = sphi 0, %s80
      %s95 = sphi 0, %s81
      %s99 = sphi 0, %s99
      %s101 = sphi 0, %s99
      %s102 = sphi 0, %s101
      %s116 = sphi 0, %s102
      %s120 = sphi 0, %s120
      %s122 = sphi 0, %s120
      %s123 = sphi 0, %s122
      %s137 = sphi 0, %s123
      %s141 = sphi 0, %s141
      %s143 = sphi 0, %s141
      %s144 = sphi 0, %s143
      %s158 = sphi 0, %s144
      %s162 = sphi 0, %s162
      %s164 = sphi 0, %s162
      %s165 = sphi 0, %s164
      %s179 = sphi 0, %s165
      %s183 = sphi 0, %s183
      %s185 = sphi 0, %s183
      %s186 = sphi 0, %s185
      %s200 = sphi 0, %s186
      %s204 = sphi 0, %s204
      %s206 = sphi 0, %s204
      %s207 = sphi 0, %s206
      %s221 = sphi 0, %s207
      %s225 = sphi 0, %s225
      %s227 = sphi 0, %s225
      %s228 = sphi 0, %s227
      %s242 = sphi 0, %s228
      %s246 = sphi 0, %s246
      %s248 = sphi 0, %s246
      %s249 = sphi 0, %s248
      %s263 = sphi 0, %s249
      %s267 = sphi 0, %s267
      %s269 = sphi 0, %s267
      %s270 = sphi 0, %s269
      %s284 = sphi 0, %s270
      %s290 = sphi 0, %s292
      %s293 = sphi 0, %s290
      %s294 = sphi 0, %s293
      %s310 = sphi 0, %s294
      %s316 = sphi 0, %s318
      %s319 = sphi 0, %s316
      %s320 = sphi 0, %s319
      %s336 = sphi 0, %s320
      %s342 = sphi 0, %s344
      %s345 = sphi 0, %s342
      %s346 = sphi 0, %s345
      %s362 = sphi 0, %s346
      %s368 = sphi 0, %s370
      %s371 = sphi 0, %s368
      %s372 = sphi 0, %s371
      %s388 = sphi 0, %s372
    $region4: #{conv_attention_block.3} parent=1 // loop_header_branch
      %26 = sbr.rel (%p24) target = $region8
    $region5: #{conv_attention_block.3} parent=1 // loop_body
      %s28 = ssub.s32 %s23, 1
      %s29 = ssub.s32 %s23, 2
      %s30 = sadd.s32 %s23, 1
      %s31 = ssub.s32 %s23, %s30
      %p32 = scmp.eq.s32.totalorder %s31, 0
      %s34 = sadd.s32 %s33, 1
      %s35 = scalar_select %p32, %s33, %s34
      %p38 = pneg %p32
      %p39 = scmp.eq.s32.totalorder %s23, 1
      %p40 = por %p38, %p39
      %p41 = scmp.ne.s32.totalorder %s33, %s36
      %p42 = scmp.eq.s32.totalorder %s23, 0
      %p43 = por %p41, %p42
      %p44 = scmp.ne.s32.totalorder %s33, %s36
      %p45 = scmp.eq.s32.totalorder %s28, 1
      %p46 = por %p44, %p45
      %p47 = scmp.ne.s32.totalorder %s36, %s37
      %p48 = scmp.eq.s32.totalorder %s28, 0
      %p49 = por %p47, %p48
      %p50 = scmp.ne.s32.totalorder %s36, %s37
      %p51 = scmp.eq.s32.totalorder %s29, 1
      %p52 = por %p50, %p51
      %p54 = scmp.ne.s32.totalorder %s37, %s53
      %p55 = scmp.eq.s32.totalorder %s29, 0
      %p56 = por %p54, %p55
      %s58 = sadd.s32 %s57, 1
      %p61 = scmp.eq.s32.totalorder %s23, 1
      %p62 = scmp.ne.s32.totalorder %s57, %s59
      %p63 = scmp.eq.s32.totalorder %s23, 0
      %p64 = por %p62, %p63
      %p65 = scmp.ne.s32.totalorder %s57, %s59
      %p66 = scmp.eq.s32.totalorder %s28, 1
      %p67 = por %p65, %p66
      %p68 = scmp.ne.s32.totalorder %s59, %s60
      %p69 = scmp.eq.s32.totalorder %s28, 0
      %p70 = por %p68, %p69
      %p71 = scmp.ne.s32.totalorder %s59, %s60
      %p72 = scmp.eq.s32.totalorder %s29, 1
      %p73 = por %p71, %p72
      %p75 = scmp.ne.s32.totalorder %s60, %s74
      %p76 = scmp.eq.s32.totalorder %s29, 0
      %p77 = por %p75, %p76
      %s79 = sadd.s32 %s78, 1
      %p82 = scmp.eq.s32.totalorder %s23, 1
      %p83 = scmp.ne.s32.totalorder %s78, %s80
      %p84 = scmp.eq.s32.totalorder %s23, 0
      %p85 = por %p83, %p84
      %p86 = scmp.ne.s32.totalorder %s78, %s80
      %p87 = scmp.eq.s32.totalorder %s28, 1
      %p88 = por %p86, %p87
      %p89 = scmp.ne.s32.totalorder %s80, %s81
      %p90 = scmp.eq.s32.totalorder %s28, 0
      %p91 = por %p89, %p90
      %p92 = scmp.ne.s32.totalorder %s80, %s81
      %p93 = scmp.eq.s32.totalorder %s29, 1
      %p94 = por %p92, %p93
      %p96 = scmp.ne.s32.totalorder %s81, %s95
      %p97 = scmp.eq.s32.totalorder %s29, 0
      %p98 = por %p96, %p97
      %s100 = sadd.s32 %s99, 1
      %p103 = scmp.eq.s32.totalorder %s23, 1
      %p104 = scmp.ne.s32.totalorder %s99, %s101
      %p105 = scmp.eq.s32.totalorder %s23, 0
      %p106 = por %p104, %p105
      %p107 = scmp.ne.s32.totalorder %s99, %s101
      %p108 = scmp.eq.s32.totalorder %s28, 1
      %p109 = por %p107, %p108
      %p110 = scmp.ne.s32.totalorder %s101, %s102
      %p111 = scmp.eq.s32.totalorder %s28, 0
      %p112 = por %p110, %p111
      %p113 = scmp.ne.s32.totalorder %s101, %s102
      %p114 = scmp.eq.s32.totalorder %s29, 1
      %p115 = por %p113, %p114
      %p117 = scmp.ne.s32.totalorder %s102, %s116
      %p118 = scmp.eq.s32.totalorder %s29, 0
      %p119 = por %p117, %p118
      %s121 = sadd.s32 %s120, 1
      %p124 = scmp.eq.s32.totalorder %s23, 1
      %p125 = scmp.ne.s32.totalorder %s120, %s122
      %p126 = scmp.eq.s32.totalorder %s23, 0
      %p127 = por %p125, %p126
      %p128 = scmp.ne.s32.totalorder %s120, %s122
      %p129 = scmp.eq.s32.totalorder %s28, 1
      %p130 = por %p128, %p129
      %p131 = scmp.ne.s32.totalorder %s122, %s123
      %p132 = scmp.eq.s32.totalorder %s28, 0
      %p133 = por %p131, %p132
      %p134 = scmp.ne.s32.totalorder %s122, %s123
      %p135 = scmp.eq.s32.totalorder %s29, 1
      %p136 = por %p134, %p135
      %p138 = scmp.ne.s32.totalorder %s123, %s137
      %p139 = scmp.eq.s32.totalorder %s29, 0
      %p140 = por %p138, %p139
      %s142 = sadd.s32 %s141, 1
      %p145 = scmp.eq.s32.totalorder %s23, 1
      %p146 = scmp.ne.s32.totalorder %s141, %s143
      %p147 = scmp.eq.s32.totalorder %s23, 0
      %p148 = por %p146, %p147
      %p149 = scmp.ne.s32.totalorder %s141, %s143
      %p150 = scmp.eq.s32.totalorder %s28, 1
      %p151 = por %p149, %p150
      %p152 = scmp.ne.s32.totalorder %s143, %s144
      %p153 = scmp.eq.s32.totalorder %s28, 0
      %p154 = por %p152, %p153
      %p155 = scmp.ne.s32.totalorder %s143, %s144
      %p156 = scmp.eq.s32.totalorder %s29, 1
      %p157 = por %p155, %p156
      %p159 = scmp.ne.s32.totalorder %s144, %s158
      %p160 = scmp.eq.s32.totalorder %s29, 0
      %p161 = por %p159, %p160
      %s163 = sadd.s32 %s162, 1
      %p166 = scmp.eq.s32.totalorder %s23, 1
      %p167 = scmp.ne.s32.totalorder %s162, %s164
      %p168 = scmp.eq.s32.totalorder %s23, 0
      %p169 = por %p167, %p168
      %p170 = scmp.ne.s32.totalorder %s162, %s164
      %p171 = scmp.eq.s32.totalorder %s28, 1
      %p172 = por %p170, %p171
      %p173 = scmp.ne.s32.totalorder %s164, %s165
      %p174 = scmp.eq.s32.totalorder %s28, 0
      %p175 = por %p173, %p174
      %p176 = scmp.ne.s32.totalorder %s164, %s165
      %p177 = scmp.eq.s32.totalorder %s29, 1
      %p178 = por %p176, %p177
      %p180 = scmp.ne.s32.totalorder %s165, %s179
      %p181 = scmp.eq.s32.totalorder %s29, 0
      %p182 = por %p180, %p181
      %s184 = sadd.s32 %s183, 1
      %p187 = scmp.eq.s32.totalorder %s23, 1
      %p188 = scmp.ne.s32.totalorder %s183, %s185
      %p189 = scmp.eq.s32.totalorder %s23, 0
      %p190 = por %p188, %p189
      %p191 = scmp.ne.s32.totalorder %s183, %s185
      %p192 = scmp.eq.s32.totalorder %s28, 1
      %p193 = por %p191, %p192
      %p194 = scmp.ne.s32.totalorder %s185, %s186
      %p195 = scmp.eq.s32.totalorder %s28, 0
      %p196 = por %p194, %p195
      %p197 = scmp.ne.s32.totalorder %s185, %s186
      %p198 = scmp.eq.s32.totalorder %s29, 1
      %p199 = por %p197, %p198
      %p201 = scmp.ne.s32.totalorder %s186, %s200
      %p202 = scmp.eq.s32.totalorder %s29, 0
      %p203 = por %p201, %p202
      %s205 = sadd.s32 %s204, 1
      %p208 = scmp.eq.s32.totalorder %s23, 1
      %p209 = scmp.ne.s32.totalorder %s204, %s206
      %p210 = scmp.eq.s32.totalorder %s23, 0
      %p211 = por %p209, %p210
      %p212 = scmp.ne.s32.totalorder %s204, %s206
      %p213 = scmp.eq.s32.totalorder %s28, 1
      %p214 = por %p212, %p213
      %p215 = scmp.ne.s32.totalorder %s206, %s207
      %p216 = scmp.eq.s32.totalorder %s28, 0
      %p217 = por %p215, %p216
      %p218 = scmp.ne.s32.totalorder %s206, %s207
      %p219 = scmp.eq.s32.totalorder %s29, 1
      %p220 = por %p218, %p219
      %p222 = scmp.ne.s32.totalorder %s207, %s221
      %p223 = scmp.eq.s32.totalorder %s29, 0
      %p224 = por %p222, %p223
      %s226 = sadd.s32 %s225, 1
      %p229 = scmp.eq.s32.totalorder %s23, 1
      %p230 = scmp.ne.s32.totalorder %s225, %s227
      %p231 = scmp.eq.s32.totalorder %s23, 0
      %p232 = por %p230, %p231
      %p233 = scmp.ne.s32.totalorder %s225, %s227
      %p234 = scmp.eq.s32.totalorder %s28, 1
      %p235 = por %p233, %p234
      %p236 = scmp.ne.s32.totalorder %s227, %s228
      %p237 = scmp.eq.s32.totalorder %s28, 0
      %p238 = por %p236, %p237
      %p239 = scmp.ne.s32.totalorder %s227, %s228
      %p240 = scmp.eq.s32.totalorder %s29, 1
      %p241 = por %p239, %p240
      %p243 = scmp.ne.s32.totalorder %s228, %s242
      %p244 = scmp.eq.s32.totalorder %s29, 0
      %p245 = por %p243, %p244
      %s247 = sadd.s32 %s246, 1
      %p250 = scmp.eq.s32.totalorder %s23, 1
      %p251 = scmp.ne.s32.totalorder %s246, %s248
      %p252 = scmp.eq.s32.totalorder %s23, 0
      %p253 = por %p251, %p252
      %p254 = scmp.ne.s32.totalorder %s246, %s248
      %p255 = scmp.eq.s32.totalorder %s28, 1
      %p256 = por %p254, %p255
      %p257 = scmp.ne.s32.totalorder %s248, %s249
      %p258 = scmp.eq.s32.totalorder %s28, 0
      %p259 = por %p257, %p258
      %p260 = scmp.ne.s32.totalorder %s248, %s249
      %p261 = scmp.eq.s32.totalorder %s29, 1
      %p262 = por %p260, %p261
      %p264 = scmp.ne.s32.totalorder %s249, %s263
      %p265 = scmp.eq.s32.totalorder %s29, 0
      %p266 = por %p264, %p265
      %s268 = sadd.s32 %s267, 1
      %p271 = scmp.eq.s32.totalorder %s23, 1
      %p272 = scmp.ne.s32.totalorder %s267, %s269
      %p273 = scmp.eq.s32.totalorder %s23, 0
      %p274 = por %p272, %p273
      %p275 = scmp.ne.s32.totalorder %s267, %s269
      %p276 = scmp.eq.s32.totalorder %s28, 1
      %p277 = por %p275, %p276
      %p278 = scmp.ne.s32.totalorder %s269, %s270
      %p279 = scmp.eq.s32.totalorder %s28, 0
      %p280 = por %p278, %p279
      %p281 = scmp.ne.s32.totalorder %s269, %s270
      %p282 = scmp.eq.s32.totalorder %s29, 1
      %p283 = por %p281, %p282
      %p285 = scmp.ne.s32.totalorder %s270, %s284
      %p286 = scmp.eq.s32.totalorder %s29, 0
      %p287 = por %p285, %p286
      %s288 = ssub.s32 %s23, %s30
      %p289 = scmp.eq.s32.totalorder %s288, 0
      %s291 = sadd.s32 %s290, 1
      %s292 = scalar_select %p289, %s290, %s291
      %p295 = pneg %p289
      %p296 = scmp.eq.s32.totalorder %s23, 1
      %p297 = por %p295, %p296
      %p298 = scmp.ne.s32.totalorder %s290, %s293
      %p299 = scmp.eq.s32.totalorder %s23, 0
      %p300 = por %p298, %p299
      %p301 = scmp.ne.s32.totalorder %s290, %s293
      %p302 = scmp.eq.s32.totalorder %s28, 1
      %p303 = por %p301, %p302
      %p304 = scmp.ne.s32.totalorder %s293, %s294
      %p305 = scmp.eq.s32.totalorder %s28, 0
      %p306 = por %p304, %p305
      %p307 = scmp.ne.s32.totalorder %s293, %s294
      %p308 = scmp.eq.s32.totalorder %s29, 1
      %p309 = por %p307, %p308
      %p311 = scmp.ne.s32.totalorder %s294, %s310
      %p312 = scmp.eq.s32.totalorder %s29, 0
      %p313 = por %p311, %p312
      %s314 = ssub.s32 %s23, %s30
      %p315 = scmp.eq.s32.totalorder %s314, 0
      %s317 = sadd.s32 %s316, 1
      %s318 = scalar_select %p315, %s316, %s317
      %p321 = pneg %p315
      %p322 = scmp.eq.s32.totalorder %s23, 1
      %p323 = por %p321, %p322
      %p324 = scmp.ne.s32.totalorder %s316, %s319
      %p325 = scmp.eq.s32.totalorder %s23, 0
      %p326 = por %p324, %p325
      %p327 = scmp.ne.s32.totalorder %s316, %s319
      %p328 = scmp.eq.s32.totalorder %s28, 1
      %p329 = por %p327, %p328
      %p330 = scmp.ne.s32.totalorder %s319, %s320
      %p331 = scmp.eq.s32.totalorder %s28, 0
      %p332 = por %p330, %p331
      %p333 = scmp.ne.s32.totalorder %s319, %s320
      %p334 = scmp.eq.s32.totalorder %s29, 1
      %p335 = por %p333, %p334
      %p337 = scmp.ne.s32.totalorder %s320, %s336
      %p338 = scmp.eq.s32.totalorder %s29, 0
      %p339 = por %p337, %p338
      %s340 = ssub.s32 %s23, %s30
      %p341 = scmp.eq.s32.totalorder %s340, 0
      %s343 = sadd.s32 %s342, 1
      %s344 = scalar_select %p341, %s342, %s343
      %p347 = pneg %p341
      %p348 = scmp.eq.s32.totalorder %s23, 1
      %p349 = por %p347, %p348
      %p350 = scmp.ne.s32.totalorder %s342, %s345
      %p351 = scmp.eq.s32.totalorder %s23, 0
      %p352 = por %p350, %p351
      %p353 = scmp.ne.s32.totalorder %s342, %s345
      %p354 = scmp.eq.s32.totalorder %s28, 1
      %p355 = por %p353, %p354
      %p356 = scmp.ne.s32.totalorder %s345, %s346
      %p357 = scmp.eq.s32.totalorder %s28, 0
      %p358 = por %p356, %p357
      %p359 = scmp.ne.s32.totalorder %s345, %s346
      %p360 = scmp.eq.s32.totalorder %s29, 1
      %p361 = por %p359, %p360
      %p363 = scmp.ne.s32.totalorder %s346, %s362
      %p364 = scmp.eq.s32.totalorder %s29, 0
      %p365 = por %p363, %p364
      %s366 = ssub.s32 %s23, %s30
      %p367 = scmp.eq.s32.totalorder %s366, 0
      %s369 = sadd.s32 %s368, 1
      %s370 = scalar_select %p367, %s368, %s369
      %p373 = pneg %p367
      %p374 = scmp.eq.s32.totalorder %s23, 1
      %p375 = por %p373, %p374
      %p376 = scmp.ne.s32.totalorder %s368, %s371
      %p377 = scmp.eq.s32.totalorder %s23, 0
      %p378 = por %p376, %p377
      %p379 = scmp.ne.s32.totalorder %s368, %s371
      %p380 = scmp.eq.s32.totalorder %s28, 1
      %p381 = por %p379, %p380
      %p382 = scmp.ne.s32.totalorder %s371, %s372
      %p383 = scmp.eq.s32.totalorder %s28, 0
      %p384 = por %p382, %p383
      %p385 = scmp.ne.s32.totalorder %s371, %s372
      %p386 = scmp.eq.s32.totalorder %s29, 1
      %p387 = por %p385, %p386
      %p389 = scmp.ne.s32.totalorder %s372, %s388
      %p390 = scmp.eq.s32.totalorder %s29, 0
      %p391 = por %p389, %p390
      %p392 = scmp.le.s32.totalorder 1, %s23
      %p393 = scmp.lt.s32.totalorder %s23, 3
      %p394 = pnand %p392, %p393
      %p395 = pneg %p394
      // Predicated region
      $region9: #{conv_attention_block.3} parent=5 // pred_check
        _
      $region10: #{conv_attention_block.3} parent=5 // pred_check_branch
        %397 = sbr.rel (%p394) target = $region12
      $region11: #{conv_attention_block.3} parent=5 // pred_region
        %s398 = ssub.s32 %s23, 1
        // Predicated region
        $region13: #{conv_attention_block.3} parent=11 // pred_check
          %p399 = pneg %p70
        $region14: #{conv_attention_block.3} parent=11 // pred_check_branch
          %401 = sbr.rel (%p399) target = $region16
        $region15: #{conv_attention_block.3} parent=11 // pred_region
          _
        $region16: #{conv_attention_block.3} parent=11 // pred_fallthru
          _
        // Predicated region
        $region17: #{conv_attention_block.3} parent=11 // pred_check
          %p402 = pneg %p91
        $region18: #{conv_attention_block.3} parent=11 // pred_check_branch
          %404 = sbr.rel (%p402) target = $region20
        $region19: #{conv_attention_block.3} parent=11 // pred_region
          _
        $region20: #{conv_attention_block.3} parent=11 // pred_fallthru
          _
        // Predicated region
        $region21: #{conv_attention_block.3} parent=11 // pred_check
          %p405 = pneg %p112
        $region22: #{conv_attention_block.3} parent=11 // pred_check_branch
          %407 = sbr.rel (%p405) target = $region24
        $region23: #{conv_attention_block.3} parent=11 // pred_region
          %409 = vsyncadd [#allocation3], 0
          %s410 = sshll.u32 %s3, 4
          %s411 = int_to_ptr.hbm [resolvable:$true] %s410
          %s412 = sshll.u32 [#allocation2], 4
          %s413 = int_to_ptr.vmem [resolvable:$true] %s412
          %418 = dma.hbm_to_vmem [thread:$0]  %s411, 5120, %s413, [#allocation3], 640, 640, 40
        $region24: #{conv_attention_block.3} parent=11 // pred_fallthru
          _
        // Predicated region
        $region25: #{conv_attention_block.3} parent=11 // pred_check
          %p419 = pneg %p133
        $region26: #{conv_attention_block.3} parent=11 // pred_check_branch
          %421 = sbr.rel (%p419) target = $region28
        $region27: #{conv_attention_block.3} parent=11 // pred_region
          _
        $region28: #{conv_attention_block.3} parent=11 // pred_fallthru
          _
        // Predicated region
        $region29: #{conv_attention_block.3} parent=11 // pred_check
          %p422 = pneg %p154
        $region30: #{conv_attention_block.3} parent=11 // pred_check_branch
          %424 = sbr.rel (%p422) target = $region32
        $region31: #{conv_attention_block.3} parent=11 // pred_region
          _
        $region32: #{conv_attention_block.3} parent=11 // pred_fallthru
          _
        // Predicated region
        $region33: #{conv_attention_block.3} parent=11 // pred_check
          %p425 = pneg %p175
        $region34: #{conv_attention_block.3} parent=11 // pred_check_branch
          %427 = sbr.rel (%p425) target = $region36
        $region35: #{conv_attention_block.3} parent=11 // pred_region
          _
        $region36: #{conv_attention_block.3} parent=11 // pred_fallthru
          _
        // Predicated region
        $region37: #{conv_attention_block.3} parent=11 // pred_check
          %p428 = pneg %p196
        $region38: #{conv_attention_block.3} parent=11 // pred_check_branch
          %430 = sbr.rel (%p428) target = $region40
        $region39: #{conv_attention_block.3} parent=11 // pred_region
          _
        $region40: #{conv_attention_block.3} parent=11 // pred_fallthru
          _
        // Predicated region
        $region41: #{conv_attention_block.3} parent=11 // pred_check
          %p431 = pneg %p217
        $region42: #{conv_attention_block.3} parent=11 // pred_check_branch
          %433 = sbr.rel (%p431) target = $region44
        $region43: #{conv_attention_block.3} parent=11 // pred_region
          _
        $region44: #{conv_attention_block.3} parent=11 // pred_fallthru
          _
        // Predicated region
        $region45: #{conv_attention_block.3} parent=11 // pred_check
          %p434 = pneg %p238
        $region46: #{conv_attention_block.3} parent=11 // pred_check_branch
          %436 = sbr.rel (%p434) target = $region48
        $region47: #{conv_attention_block.3} parent=11 // pred_region
          _
        $region48: #{conv_attention_block.3} parent=11 // pred_fallthru
          _
        // Predicated region
        $region49: #{conv_attention_block.3} parent=11 // pred_check
          %p437 = pneg %p259
        $region50: #{conv_attention_block.3} parent=11 // pred_check_branch
          %439 = sbr.rel (%p437) target = $region52
        $region51: #{conv_attention_block.3} parent=11 // pred_region
          _
        $region52: #{conv_attention_block.3} parent=11 // pred_fallthru
          _
        // Predicated region
        $region53: #{conv_attention_block.3} parent=11 // pred_check
          %p440 = pneg %p280
        $region54: #{conv_attention_block.3} parent=11 // pred_check_branch
          %442 = sbr.rel (%p440) target = $region56
        $region55: #{conv_attention_block.3} parent=11 // pred_region
          _
        $region56: #{conv_attention_block.3} parent=11 // pred_fallthru
          _
      $region12: #{conv_attention_block.3} parent=5 // pred_fallthru
        _
      %p443 = scmp.lt.s32.totalorder %s23, 2
      // Predicated region
      $region57: #{conv_attention_block.3} parent=5 // pred_check
        %p444 = pneg %p443
      $region58: #{conv_attention_block.3} parent=5 // pred_check_branch
        %446 = sbr.rel (%p444) target = $region60
      $region59: #{conv_attention_block.3} parent=5 // pred_region
        // Predicated region
        $region61: #{conv_attention_block.3} parent=59 // pred_check
          %p447 = pneg %p43
        $region62: #{conv_attention_block.3} parent=59 // pred_check_branch
          %449 = sbr.rel (%p447) target = $region64
        $region63: #{conv_attention_block.3} parent=59 // pred_region
          %p450 = scmp.lt.s32.totalorder %s23, 1
          %s451 = scalar_select %p450, %s23, 1
          %s452 = smul.addr %s451, 8
          %s453 = scalar_lea.vmem %s0, %s452
        $region64: #{conv_attention_block.3} parent=59 // pred_fallthru
          _
      $region60: #{conv_attention_block.3} parent=5 // pred_fallthru
        _
      %p454 = scmp.le.s32.totalorder 1, %s23
      %p455 = scmp.lt.s32.totalorder %s23, 3
      %p456 = pnand %p454, %p455
      %p457 = pneg %p456
      // Predicated region
      $region65: #{conv_attention_block.3} parent=5 // pred_check
        _
      $region66: #{conv_attention_block.3} parent=5 // pred_check_branch
        %459 = sbr.rel (%p456) target = $region68
      $region67: #{conv_attention_block.3} parent=5 // pred_region
        %s460 = ssub.s32 %s23, 1
        // Predicated region
        $region69: #{conv_attention_block.3} parent=67 // pred_check
          %p461 = pneg %p112
        $region70: #{conv_attention_block.3} parent=67 // pred_check_branch
          %463 = sbr.rel (%p461) target = $region72
        $region71: #{conv_attention_block.3} parent=67 // pred_region
          %465 = dma.done [#allocation3], 5120
        $region72: #{conv_attention_block.3} parent=67 // pred_fallthru
          _
        %p466 = scmp.lt.s32.totalorder %s28, 1
        %s467 = scalar_select %p466, %s28, 1
        %s468 = smul.addr %s467, 8
        %s469 = scalar_lea.vmem %s0, %s468
        %p470 = pneg %p49
        %p471 = pneg %p46
        %p472 = pneg %p70
        %p473 = pneg %p67
        %p474 = pneg %p91
        %p475 = pneg %p88
        %p476 = pneg %p112
        %p477 = pneg %p109
        %p478 = pneg %p133
        %p479 = pneg %p130
        %p480 = pneg %p154
        %p481 = pneg %p151
        %p482 = pneg %p175
        %p483 = pneg %p172
        %p484 = pneg %p196
        %p485 = pneg %p193
        %p486 = pneg %p217
        %p487 = pneg %p214
        %p488 = pneg %p238
        %p489 = pneg %p235
        %p490 = pneg %p259
        %p491 = pneg %p256
        %p492 = pneg %p280
        %p493 = pneg %p277
        %p494 = pneg %p306
        %p495 = pneg %p303
        %p496 = scmp.lt.s32.totalorder %s28, 1
        %s497 = scalar_select %p496, %s28, 1
        %s498 = smul.addr %s497, 8
        %s499 = scalar_lea.vmem %s12, %s498
        %p500 = pneg %p332
        %p501 = pneg %p329
        %p502 = scmp.lt.s32.totalorder %s28, 1
        %s503 = scalar_select %p502, %s28, 1
        %s504 = smul.addr %s503, 8
        %s505 = scalar_lea.vmem %s13, %s504
        %p506 = pneg %p358
        %p507 = pneg %p355
        %p508 = scmp.lt.s32.totalorder %s28, 1
        %s509 = scalar_select %p508, %s28, 1
        %s510 = smul.addr %s509, 8
        %s511 = scalar_lea.vmem %s14, %s510
        %p512 = pneg %p384
        %p513 = pneg %p381
        %p514 = scmp.lt.s32.totalorder %s28, 1
        %s515 = scalar_select %p514, %s28, 1
        %s516 = smul.addr %s515, 8
        %s517 = scalar_lea.vmem %s15, %s516
        %p518 = scmp.lt.s32.totalorder %s28, 1
        %s519 = scalar_select %p518, %s28, 1
        %s520 = smul.addr %s519, 8
        %s521 = scalar_lea.vmem %s0, %s520
        %p522 = scmp.lt.s32.totalorder %s28, 1
        %s523 = scalar_select %p522, %s28, 1
        %s524 = smul.addr %s523, 8
        %s525 = scalar_lea.vmem %s12, %s524
        %p526 = scmp.lt.s32.totalorder %s28, 1
        %s527 = scalar_select %p526, %s28, 1
        %s528 = smul.addr %s527, 8
        %s529 = scalar_lea.vmem %s13, %s528
        %p530 = scmp.lt.s32.totalorder %s28, 1
        %s531 = scalar_select %p530, %s28, 1
        %s532 = smul.addr %s531, 8
        %s533 = scalar_lea.vmem %s14, %s532
        %p534 = scmp.lt.s32.totalorder %s28, 1
        %s535 = scalar_select %p534, %s28, 1
        %s536 = smul.addr %s535, 8
        %s537 = scalar_lea.vmem %s15, %s536
        %v538 = vld [vmem:[%s521] sm:$0xff]
        %v539 = vld [vmem:[#allocation2] sm:$0xff]
        %v540 = vld [vmem:[#allocation2 + $0x8] sm:$0xff]
        %v541 = vld [vmem:[#allocation2 + $0x10] sm:$0xff]
        %v542 = vld [vmem:[#allocation2 + $0x18] sm:$0xff]
        %v543 = vld [vmem:[#allocation2 + $0x20] sm:$0xff]
        %v544 = vld [vmem:[#allocation2 + $0x28] sm:$0xff]
        %v545 = vld [vmem:[#allocation2 + $0x30] sm:$0xff]
        %v546 = vld [vmem:[#allocation2 + $0x38] sm:$0xff]
        %v547 = vld [vmem:[#allocation2 + $0x40] sm:$0xff]
        %v548 = vld [vmem:[#allocation2 + $0x48] sm:$0xff]
        %v549 = vld [vmem:[#allocation2 + $0x50] sm:$0xff]
        %v550 = vld [vmem:[#allocation2 + $0x58] sm:$0xff]
        %v551 = vld [vmem:[#allocation2 + $0x60] sm:$0xff]
        %v552 = vld [vmem:[#allocation2 + $0x68] sm:$0xff]
        %v553 = vld [vmem:[#allocation2 + $0x70] sm:$0xff]
        %v554 = vld [vmem:[#allocation2 + $0x78] sm:$0xff]
        %v555 = vld [vmem:[#allocation2 + $0x80] sm:$0xff]
        %v556 = vld [vmem:[#allocation2 + $0x88] sm:$0xff]
        %v557 = vld [vmem:[#allocation2 + $0x90] sm:$0xff]
        %v558 = vld [vmem:[#allocation2 + $0x98] sm:$0xff]
        %v559 = vld [vmem:[#allocation2 + $0xa0] sm:$0xff]
        %v560 = vld [vmem:[#allocation2 + $0xa8] sm:$0xff]
        %v561 = vld [vmem:[#allocation2 + $0xb0] sm:$0xff]
        %v562 = vld [vmem:[#allocation2 + $0xb8] sm:$0xff]
        %v563 = vld [vmem:[#allocation2 + $0xc0] sm:$0xff]
        %v564 = vld [vmem:[#allocation2 + $0xc8] sm:$0xff]
        %v565 = vld [vmem:[#allocation2 + $0xd0] sm:$0xff]
        %v566 = vld [vmem:[#allocation2 + $0xd8] sm:$0xff]
        %v567 = vld [vmem:[#allocation2 + $0xe0] sm:$0xff]
        %v568 = vld [vmem:[#allocation2 + $0xe8] sm:$0xff]
        %v569 = vld [vmem:[#allocation2 + $0xf0] sm:$0xff]
        %v570 = vld [vmem:[#allocation2 + $0xf8] sm:$0xff]
        %v571 = vld [vmem:[#allocation2 + $0x100] sm:$0xff]
        %v572 = vld [vmem:[#allocation2 + $0x108] sm:$0xff]
        %v573 = vld [vmem:[#allocation2 + $0x110] sm:$0xff]
        %v574 = vld [vmem:[#allocation2 + $0x118] sm:$0xff]
        %v575 = vld [vmem:[#allocation2 + $0x120] sm:$0xff]
        %v576 = vld [vmem:[#allocation2 + $0x128] sm:$0xff]
        %v577 = vld [vmem:[#allocation2 + $0x130] sm:$0xff]
        %v578 = vld [vmem:[#allocation2 + $0x138] sm:$0xff]
        %v579 = vld [vmem:[%s1] sm:$0x1]
        %v580 = vld [vmem:[%s2] sm:$0x1]
        %vm581 = vcmask 523264
        %v582 = vsel %vm581, %v538, 0.0
        %583 = vadd.xlane.f32.xlu0 %v582
        %v584 = vpop.xlane.xlu0 %583
        %v585 = vrcp.pop 64.0
        %v586 = vmul.f32 64.0, %v585
        %v587 = vsub.f32 1.0, %v586
        %v588 = vmul.f32 %v585, %v587
        %v589 = vadd.f32 %v585, %v588
        %vm590 = vweird.f32 %v585
        %v591 = vsel %vm590, %v585, %v589
        %v592 = vmul.f32 %v584, %v591
        %v593 = vsub.f32 %v538, %v592
        %v594 = vmul.f32 %v593, %v593
        %v595 = vsel %vm581, %v594, 0.0
        %596 = vadd.xlane.f32.xlu0 %v595
        %v597 = vpop.xlane.xlu0 %596
        %v598 = vmul.f32 %v597, %v591
        %v599 = vadd.f32 %v598, 1e-05
        %v600 = vrsqrt.pop %v599
        %v601 = vmul.f32 %v600, %v599
        %v602 = vmul.f32 %v601, %v600
        %v603 = vmul.f32 0.5, %v602
        %v604 = vsub.f32 1.5, %v603
        %v605 = vmul.f32 %v600, %v604
        %vm606 = vweird.f32 %v599
        %vm607 = vweird.f32 %v600
        %vm608 = vmor %vm606, %vm607
        %v609 = vsel %vm608, %v600, %v605
        %v610 = vmul.f32 %v593, %v609
        %v612 = vperm.slane %v579, 0
        %v614 = vmul.f32 %v610, %v612
        %v616 = vperm.slane %v580, 0
        %v618 = vadd.f32 %v614, %v616
        %v620 = vsel %vm581, %v618, 0
        %622 = vmatpush.msra.mxu0 0.0
        %623 = vmatpush.msra.mxu0 0.0
        %624 = vmatpush.msra.mxu0 0.0
        %625 = vmatpush.msra.mxu0 0.0
        %626 = vmatpush.msra.mxu0 0.0
        %627 = vmatpush.msra.mxu0 0.0
        %628 = vmatpush.msra.mxu0 0.0
        %629 = vmatpush.msra.mxu0 0.0
        %630 = vmatpush.msra.mxu0 %v574
        %631 = vmatpush.msra.mxu0 %v569
        %632 = vmatpush.msra.mxu0 %v564
        %633 = vmatpush.msra.mxu0 %v559
        %634 = vmatpush.msra.mxu0 %v554
        %635 = vmatpush.msra.mxu0 %v549
        %636 = vmatpush.msra.mxu0 %v544
        %637 = vmatpush.msra.mxu0 %v539
        %638 = vmatmul.f32.gmra.mxu0 %v620
        %v639 = vpop.f32.mrf.mxu0
        %v640 = vadd.f32 0.0, %v639
        %641 = vdwg.mxu0
        %642 = vmatpush.msra.mxu0 0.0
        %643 = vmatpush.msra.mxu0 0.0
        %644 = vmatpush.msra.mxu0 0.0
        %645 = vmatpush.msra.mxu0 0.0
        %646 = vmatpush.msra.mxu0 0.0
        %647 = vmatpush.msra.mxu0 0.0
        %648 = vmatpush.msra.mxu0 0.0
        %649 = vmatpush.msra.mxu0 0.0
        %650 = vmatpush.msra.mxu0 %v575
        %651 = vmatpush.msra.mxu0 %v570
        %652 = vmatpush.msra.mxu0 %v565
        %653 = vmatpush.msra.mxu0 %v560
        %654 = vmatpush.msra.mxu0 %v555
        %655 = vmatpush.msra.mxu0 %v550
        %656 = vmatpush.msra.mxu0 %v545
        %657 = vmatpush.msra.mxu0 %v540
        %658 = vmatmul.f32.gmra.mxu0 %v620
        %v659 = vpop.f32.mrf.mxu0
        %v660 = vadd.f32 0.0, %v659
        %661 = vdwg.mxu0
        %662 = vmatpush.msra.mxu0 0.0
        %663 = vmatpush.msra.mxu0 0.0
        %664 = vmatpush.msra.mxu0 0.0
        %665 = vmatpush.msra.mxu0 0.0
        %666 = vmatpush.msra.mxu0 0.0
        %667 = vmatpush.msra.mxu0 0.0
        %668 = vmatpush.msra.mxu0 0.0
        %669 = vmatpush.msra.mxu0 0.0
        %670 = vmatpush.msra.mxu0 %v576
        %671 = vmatpush.msra.mxu0 %v571
        %672 = vmatpush.msra.mxu0 %v566
        %673 = vmatpush.msra.mxu0 %v561
        %674 = vmatpush.msra.mxu0 %v556
        %675 = vmatpush.msra.mxu0 %v551
        %676 = vmatpush.msra.mxu0 %v546
        %677 = vmatpush.msra.mxu0 %v541
        %678 = vmatmul.f32.gmra.mxu0 %v620
        %v679 = vpop.f32.mrf.mxu0
        %v680 = vadd.f32 0.0, %v679
        %681 = vdwg.mxu0
        %682 = vmatpush.msra.mxu0 0.0
        %683 = vmatpush.msra.mxu0 0.0
        %684 = vmatpush.msra.mxu0 0.0
        %685 = vmatpush.msra.mxu0 0.0
        %686 = vmatpush.msra.mxu0 0.0
        %687 = vmatpush.msra.mxu0 0.0
        %688 = vmatpush.msra.mxu0 0.0
        %689 = vmatpush.msra.mxu0 0.0
        %690 = vmatpush.msra.mxu0 %v577
        %691 = vmatpush.msra.mxu0 %v572
        %692 = vmatpush.msra.mxu0 %v567
        %693 = vmatpush.msra.mxu0 %v562
        %694 = vmatpush.msra.mxu0 %v557
        %695 = vmatpush.msra.mxu0 %v552
        %696 = vmatpush.msra.mxu0 %v547
        %697 = vmatpush.msra.mxu0 %v542
        %698 = vmatmul.f32.gmra.mxu0 %v620
        %v699 = vpop.f32.mrf.mxu0
        %v700 = vadd.f32 0.0, %v699
        %701 = vdwg.mxu0
        %702 = vmatpush.msra.mxu0 0.0
        %703 = vmatpush.msra.mxu0 0.0
        %704 = vmatpush.msra.mxu0 0.0
        %705 = vmatpush.msra.mxu0 0.0
        %706 = vmatpush.msra.mxu0 0.0
        %707 = vmatpush.msra.mxu0 0.0
        %708 = vmatpush.msra.mxu0 0.0
        %709 = vmatpush.msra.mxu0 0.0
        %710 = vmatpush.msra.mxu0 %v578
        %711 = vmatpush.msra.mxu0 %v573
        %712 = vmatpush.msra.mxu0 %v568
        %713 = vmatpush.msra.mxu0 %v563
        %714 = vmatpush.msra.mxu0 %v558
        %715 = vmatpush.msra.mxu0 %v553
        %716 = vmatpush.msra.mxu0 %v548
        %717 = vmatpush.msra.mxu0 %v543
        %718 = vmatmul.f32.gmra.mxu0 %v620
        %v719 = vpop.f32.mrf.mxu0
        %v720 = vadd.f32 0.0, %v719
        %721 = vdwg.mxu0
        %v723 = vsel %vm581, %v538, 0
        %725 = vmatpush.msra.mxu0 0.0
        %726 = vmatpush.msra.mxu0 0.0
        %727 = vmatpush.msra.mxu0 0.0
        %728 = vmatpush.msra.mxu0 0.0
        %729 = vmatpush.msra.mxu0 0.0
        %730 = vmatpush.msra.mxu0 0.0
        %731 = vmatpush.msra.mxu0 0.0
        %732 = vmatpush.msra.mxu0 0.0
        %733 = vmatpush.msra.mxu0 %v574
        %734 = vmatpush.msra.mxu0 %v569
        %735 = vmatpush.msra.mxu0 %v564
        %736 = vmatpush.msra.mxu0 %v559
        %737 = vmatpush.msra.mxu0 %v554
        %738 = vmatpush.msra.mxu0 %v549
        %739 = vmatpush.msra.mxu0 %v544
        %740 = vmatpush.msra.mxu0 %v539
        %741 = vmatmul.f32.gmra.mxu0 %v723
        %v742 = vpop.f32.mrf.mxu0
        %v743 = vadd.f32 0.0, %v742
        %744 = vdwg.mxu0
        %745 = vmatpush.msra.mxu0 0.0
        %746 = vmatpush.msra.mxu0 0.0
        %747 = vmatpush.msra.mxu0 0.0
        %748 = vmatpush.msra.mxu0 0.0
        %749 = vmatpush.msra.mxu0 0.0
        %750 = vmatpush.msra.mxu0 0.0
        %751 = vmatpush.msra.mxu0 0.0
        %752 = vmatpush.msra.mxu0 0.0
        %753 = vmatpush.msra.mxu0 %v575
        %754 = vmatpush.msra.mxu0 %v570
        %755 = vmatpush.msra.mxu0 %v565
        %756 = vmatpush.msra.mxu0 %v560
        %757 = vmatpush.msra.mxu0 %v555
        %758 = vmatpush.msra.mxu0 %v550
        %759 = vmatpush.msra.mxu0 %v545
        %760 = vmatpush.msra.mxu0 %v540
        %761 = vmatmul.f32.gmra.mxu0 %v723
        %v762 = vpop.f32.mrf.mxu0
        %v763 = vadd.f32 0.0, %v762
        %764 = vdwg.mxu0
        %765 = vmatpush.msra.mxu0 0.0
        %766 = vmatpush.msra.mxu0 0.0
        %767 = vmatpush.msra.mxu0 0.0
        %768 = vmatpush.msra.mxu0 0.0
        %769 = vmatpush.msra.mxu0 0.0
        %770 = vmatpush.msra.mxu0 0.0
        %771 = vmatpush.msra.mxu0 0.0
        %772 = vmatpush.msra.mxu0 0.0
        %773 = vmatpush.msra.mxu0 %v576
        %774 = vmatpush.msra.mxu0 %v571
        %775 = vmatpush.msra.mxu0 %v566
        %776 = vmatpush.msra.mxu0 %v561
        %777 = vmatpush.msra.mxu0 %v556
        %778 = vmatpush.msra.mxu0 %v551
        %779 = vmatpush.msra.mxu0 %v546
        %780 = vmatpush.msra.mxu0 %v541
        %781 = vmatmul.f32.gmra.mxu0 %v723
        %v782 = vpop.f32.mrf.mxu0
        %v783 = vadd.f32 0.0, %v782
        %784 = vdwg.mxu0
        %785 = vmatpush.msra.mxu0 0.0
        %786 = vmatpush.msra.mxu0 0.0
        %787 = vmatpush.msra.mxu0 0.0
        %788 = vmatpush.msra.mxu0 0.0
        %789 = vmatpush.msra.mxu0 0.0
        %790 = vmatpush.msra.mxu0 0.0
        %791 = vmatpush.msra.mxu0 0.0
        %792 = vmatpush.msra.mxu0 0.0
        %793 = vmatpush.msra.mxu0 %v577
        %794 = vmatpush.msra.mxu0 %v572
        %795 = vmatpush.msra.mxu0 %v567
        %796 = vmatpush.msra.mxu0 %v562
        %797 = vmatpush.msra.mxu0 %v557
        %798 = vmatpush.msra.mxu0 %v552
        %799 = vmatpush.msra.mxu0 %v547
        %800 = vmatpush.msra.mxu0 %v542
        %801 = vmatmul.f32.gmra.mxu0 %v723
        %v802 = vpop.f32.mrf.mxu0
        %v803 = vadd.f32 0.0, %v802
        %804 = vdwg.mxu0
        %805 = vmatpush.msra.mxu0 0.0
        %806 = vmatpush.msra.mxu0 0.0
        %807 = vmatpush.msra.mxu0 0.0
        %808 = vmatpush.msra.mxu0 0.0
        %809 = vmatpush.msra.mxu0 0.0
        %810 = vmatpush.msra.mxu0 0.0
        %811 = vmatpush.msra.mxu0 0.0
        %812 = vmatpush.msra.mxu0 0.0
        %813 = vmatpush.msra.mxu0 %v578
        %814 = vmatpush.msra.mxu0 %v573
        %815 = vmatpush.msra.mxu0 %v568
        %816 = vmatpush.msra.mxu0 %v563
        %817 = vmatpush.msra.mxu0 %v558
        %818 = vmatpush.msra.mxu0 %v553
        %819 = vmatpush.msra.mxu0 %v548
        %820 = vmatpush.msra.mxu0 %v543
        %821 = vmatmul.f32.gmra.mxu0 %v723
        %v822 = vpop.f32.mrf.mxu0
        %v823 = vadd.f32 0.0, %v822
        %824 = vdwg.mxu0
        %v825 = vld [vmem:[%s4] sm:$0xff]
        %v826 = vld [vmem:[%s5] sm:$0xff]
        %828 = vset.pattern.permute.xlu0 0
        %829 = vperm.xlu0 %828, %v825
        %v830 = vpop.permute.xlu0 %829
        %v832 = vmul.f32 %v830, %v640
        %833 = vset.pattern.permute.xlu0 1
        %834 = vperm.xlu0 %833, %v825
        %v835 = vpop.permute.xlu0 %834
        %v837 = vmul.f32 %v835, %v640
        %839 = vrot.lane.b32.xlu0 %v837, 64
        %v840 = vpop.permute.xlu0 %839
        %v842 = vadd.f32 %v832, %v840
        %843 = vset.pattern.permute.xlu0 2
        %844 = vperm.xlu0 %843, %v825
        %v845 = vpop.permute.xlu0 %844
        %v847 = vmul.f32 %v845, %v660
        %v848 = vadd.f32 %v842, %v847
        %849 = vset.pattern.permute.xlu0 3
        %850 = vperm.xlu0 %849, %v825
        %v851 = vpop.permute.xlu0 %850
        %v853 = vmul.f32 %v851, %v660
        %855 = vrot.lane.b32.xlu0 %v853, 64
        %v856 = vpop.permute.xlu0 %855
        %v858 = vadd.f32 %v848, %v856
        %859 = vset.pattern.permute.xlu0 4
        %860 = vperm.xlu0 %859, %v825
        %v861 = vpop.permute.xlu0 %860
        %v863 = vmul.f32 %v861, %v680
        %v864 = vadd.f32 %v858, %v863
        %865 = vset.pattern.permute.xlu0 5
        %866 = vperm.xlu0 %865, %v825
        %v867 = vpop.permute.xlu0 %866
        %v869 = vmul.f32 %v867, %v680
        %871 = vrot.lane.b32.xlu0 %v869, 64
        %v872 = vpop.permute.xlu0 %871
        %v874 = vadd.f32 %v864, %v872
        %875 = vset.pattern.permute.xlu0 6
        %876 = vperm.xlu0 %875, %v825
        %v877 = vpop.permute.xlu0 %876
        %v879 = vmul.f32 %v877, %v700
        %v880 = vadd.f32 %v874, %v879
        %881 = vset.pattern.permute.xlu0 7
        %882 = vperm.xlu0 %881, %v825
        %v883 = vpop.permute.xlu0 %882
        %v885 = vmul.f32 %v883, %v700
        %887 = vrot.lane.b32.xlu0 %v885, 64
        %v888 = vpop.permute.xlu0 %887
        %v890 = vadd.f32 %v880, %v888
        %891 = vset.pattern.permute.xlu0 8
        %892 = vperm.xlu0 %891, %v825
        %v893 = vpop.permute.xlu0 %892
        %v895 = vmul.f32 %v893, %v720
        %v896 = vadd.f32 %v890, %v895
        %898 = vset.pattern.permute.xlu0 0
        %899 = vperm.xlu0 %898, %v826
        %v900 = vpop.permute.xlu0 %899
        %v902 = vadd.f32 %v896, %v900
        %903 = vst.msk [vmem:[%s525] sm:$0xff] %vm581, %v902
        %v904 = vld [vmem:[%s6] sm:$0xff]
        %v905 = vld [vmem:[%s7] sm:$0xff]
        %907 = vset.pattern.permute.xlu0 0
        %908 = vperm.xlu0 %907, %v904
        %v909 = vpop.permute.xlu0 %908
        %v911 = vmul.f32 %v909, %v640
        %912 = vset.pattern.permute.xlu0 1
        %913 = vperm.xlu0 %912, %v904
        %v914 = vpop.permute.xlu0 %913
        %v916 = vmul.f32 %v914, %v640
        %918 = vrot.lane.b32.xlu0 %v916, 64
        %v919 = vpop.permute.xlu0 %918
        %v921 = vadd.f32 %v911, %v919
        %922 = vset.pattern.permute.xlu0 2
        %923 = vperm.xlu0 %922, %v904
        %v924 = vpop.permute.xlu0 %923
        %v926 = vmul.f32 %v924, %v660
        %v927 = vadd.f32 %v921, %v926
        %928 = vset.pattern.permute.xlu0 3
        %929 = vperm.xlu0 %928, %v904
        %v930 = vpop.permute.xlu0 %929
        %v932 = vmul.f32 %v930, %v660
        %934 = vrot.lane.b32.xlu0 %v932, 64
        %v935 = vpop.permute.xlu0 %934
        %v937 = vadd.f32 %v927, %v935
        %938 = vset.pattern.permute.xlu0 4
        %939 = vperm.xlu0 %938, %v904
        %v940 = vpop.permute.xlu0 %939
        %v942 = vmul.f32 %v940, %v680
        %v943 = vadd.f32 %v937, %v942
        %944 = vset.pattern.permute.xlu0 5
        %945 = vperm.xlu0 %944, %v904
        %v946 = vpop.permute.xlu0 %945
        %v948 = vmul.f32 %v946, %v680
        %950 = vrot.lane.b32.xlu0 %v948, 64
        %v951 = vpop.permute.xlu0 %950
        %v953 = vadd.f32 %v943, %v951
        %954 = vset.pattern.permute.xlu0 6
        %955 = vperm.xlu0 %954, %v904
        %v956 = vpop.permute.xlu0 %955
        %v958 = vmul.f32 %v956, %v700
        %v959 = vadd.f32 %v953, %v958
        %960 = vset.pattern.permute.xlu0 7
        %961 = vperm.xlu0 %960, %v904
        %v962 = vpop.permute.xlu0 %961
        %v964 = vmul.f32 %v962, %v700
        %966 = vrot.lane.b32.xlu0 %v964, 64
        %v967 = vpop.permute.xlu0 %966
        %v969 = vadd.f32 %v959, %v967
        %970 = vset.pattern.permute.xlu0 8
        %971 = vperm.xlu0 %970, %v904
        %v972 = vpop.permute.xlu0 %971
        %v974 = vmul.f32 %v972, %v720
        %v975 = vadd.f32 %v969, %v974
        %977 = vset.pattern.permute.xlu0 0
        %978 = vperm.xlu0 %977, %v905
        %v979 = vpop.permute.xlu0 %978
        %v981 = vadd.f32 %v975, %v979
        %982 = vst.msk [vmem:[%s529] sm:$0xff] %vm581, %v981
        %v983 = vld [vmem:[%s8] sm:$0xff]
        %v984 = vld [vmem:[%s9] sm:$0xff]
        %986 = vset.pattern.permute.xlu0 0
        %987 = vperm.xlu0 %986, %v983
        %v988 = vpop.permute.xlu0 %987
        %v990 = vmul.f32 %v988, %v640
        %991 = vset.pattern.permute.xlu0 1
        %992 = vperm.xlu0 %991, %v983
        %v993 = vpop.permute.xlu0 %992
        %v995 = vmul.f32 %v993, %v640
        %997 = vrot.lane.b32.xlu0 %v995, 64
        %v998 = vpop.permute.xlu0 %997
        %v1000 = vadd.f32 %v990, %v998
        %1001 = vset.pattern.permute.xlu0 2
        %1002 = vperm.xlu0 %1001, %v983
        %v1003 = vpop.permute.xlu0 %1002
        %v1005 = vmul.f32 %v1003, %v660
        %v1006 = vadd.f32 %v1000, %v1005
        %1007 = vset.pattern.permute.xlu0 3
        %1008 = vperm.xlu0 %1007, %v983
        %v1009 = vpop.permute.xlu0 %1008
        %v1011 = vmul.f32 %v1009, %v660
        %1013 = vrot.lane.b32.xlu0 %v1011, 64
        %v1014 = vpop.permute.xlu0 %1013
        %v1016 = vadd.f32 %v1006, %v1014
        %1017 = vset.pattern.permute.xlu0 4
        %1018 = vperm.xlu0 %1017, %v983
        %v1019 = vpop.permute.xlu0 %1018
        %v1021 = vmul.f32 %v1019, %v680
        %v1022 = vadd.f32 %v1016, %v1021
        %1023 = vset.pattern.permute.xlu0 5
        %1024 = vperm.xlu0 %1023, %v983
        %v1025 = vpop.permute.xlu0 %1024
        %v1027 = vmul.f32 %v1025, %v680
        %1029 = vrot.lane.b32.xlu0 %v1027, 64
        %v1030 = vpop.permute.xlu0 %1029
        %v1032 = vadd.f32 %v1022, %v1030
        %1033 = vset.pattern.permute.xlu0 6
        %1034 = vperm.xlu0 %1033, %v983
        %v1035 = vpop.permute.xlu0 %1034
        %v1037 = vmul.f32 %v1035, %v700
        %v1038 = vadd.f32 %v1032, %v1037
        %1039 = vset.pattern.permute.xlu0 7
        %1040 = vperm.xlu0 %1039, %v983
        %v1041 = vpop.permute.xlu0 %1040
        %v1043 = vmul.f32 %v1041, %v700
        %1045 = vrot.lane.b32.xlu0 %v1043, 64
        %v1046 = vpop.permute.xlu0 %1045
        %v1048 = vadd.f32 %v1038, %v1046
        %1049 = vset.pattern.permute.xlu0 8
        %1050 = vperm.xlu0 %1049, %v983
        %v1051 = vpop.permute.xlu0 %1050
        %v1053 = vmul.f32 %v1051, %v720
        %v1054 = vadd.f32 %v1048, %v1053
        %1056 = vset.pattern.permute.xlu0 0
        %1057 = vperm.xlu0 %1056, %v984
        %v1058 = vpop.permute.xlu0 %1057
        %v1060 = vadd.f32 %v1054, %v1058
        %1061 = vst.msk [vmem:[%s533] sm:$0xff] %vm581, %v1060
        %v1062 = vld [vmem:[%s10] sm:$0xff]
        %v1063 = vld [vmem:[%s11] sm:$0xff]
        %1065 = vset.pattern.permute.xlu0 0
        %1066 = vperm.xlu0 %1065, %v1062
        %v1067 = vpop.permute.xlu0 %1066
        %v1069 = vmul.f32 %v1067, %v743
        %1070 = vset.pattern.permute.xlu0 1
        %1071 = vperm.xlu0 %1070, %v1062
        %v1072 = vpop.permute.xlu0 %1071
        %v1074 = vmul.f32 %v1072, %v743
        %1076 = vrot.lane.b32.xlu0 %v1074, 64
        %v1077 = vpop.permute.xlu0 %1076
        %v1079 = vadd.f32 %v1069, %v1077
        %1080 = vset.pattern.permute.xlu0 2
        %1081 = vperm.xlu0 %1080, %v1062
        %v1082 = vpop.permute.xlu0 %1081
        %v1084 = vmul.f32 %v1082, %v763
        %v1085 = vadd.f32 %v1079, %v1084
        %1086 = vset.pattern.permute.xlu0 3
        %1087 = vperm.xlu0 %1086, %v1062
        %v1088 = vpop.permute.xlu0 %1087
        %v1090 = vmul.f32 %v1088, %v763
        %1092 = vrot.lane.b32.xlu0 %v1090, 64
        %v1093 = vpop.permute.xlu0 %1092
        %v1095 = vadd.f32 %v1085, %v1093
        %1096 = vset.pattern.permute.xlu0 4
        %1097 = vperm.xlu0 %1096, %v1062
        %v1098 = vpop.permute.xlu0 %1097
        %v1100 = vmul.f32 %v1098, %v783
        %v1101 = vadd.f32 %v1095, %v1100
        %1102 = vset.pattern.permute.xlu0 5
        %1103 = vperm.xlu0 %1102, %v1062
        %v1104 = vpop.permute.xlu0 %1103
        %v1106 = vmul.f32 %v1104, %v783
        %1108 = vrot.lane.b32.xlu0 %v1106, 64
        %v1109 = vpop.permute.xlu0 %1108
        %v1111 = vadd.f32 %v1101, %v1109
        %1112 = vset.pattern.permute.xlu0 6
        %1113 = vperm.xlu0 %1112, %v1062
        %v1114 = vpop.permute.xlu0 %1113
        %v1116 = vmul.f32 %v1114, %v803
        %v1117 = vadd.f32 %v1111, %v1116
        %1118 = vset.pattern.permute.xlu0 7
        %1119 = vperm.xlu0 %1118, %v1062
        %v1120 = vpop.permute.xlu0 %1119
        %v1122 = vmul.f32 %v1120, %v803
        %1124 = vrot.lane.b32.xlu0 %v1122, 64
        %v1125 = vpop.permute.xlu0 %1124
        %v1127 = vadd.f32 %v1117, %v1125
        %1128 = vset.pattern.permute.xlu0 8
        %1129 = vperm.xlu0 %1128, %v1062
        %v1130 = vpop.permute.xlu0 %1129
        %v1132 = vmul.f32 %v1130, %v823
        %v1133 = vadd.f32 %v1127, %v1132
        %1135 = vset.pattern.permute.xlu0 0
        %1136 = vperm.xlu0 %1135, %v1063
        %v1137 = vpop.permute.xlu0 %1136
        %v1139 = vadd.f32 %v1133, %v1137
        %1140 = vst.msk [vmem:[%s537] sm:$0xff] %vm581, %v1139
        %p1141 = scmp.lt.s32.totalorder %s28, 1
        %s1142 = scalar_select %p1141, %s28, 1
        %s1143 = smul.addr %s1142, 8
        %s1144 = scalar_lea.vmem %s12, %s1143
        %p1145 = scmp.lt.s32.totalorder %s28, 1
        %s1146 = scalar_select %p1145, %s28, 1
        %s1147 = smul.addr %s1146, 8
        %s1148 = scalar_lea.vmem %s13, %s1147
        %p1149 = scmp.lt.s32.totalorder %s28, 1
        %s1150 = scalar_select %p1149, %s28, 1
        %s1151 = smul.addr %s1150, 8
        %s1152 = scalar_lea.vmem %s14, %s1151
        %p1153 = scmp.lt.s32.totalorder %s28, 1
        %s1154 = scalar_select %p1153, %s28, 1
        %s1155 = smul.addr %s1154, 8
        %s1156 = scalar_lea.vmem %s15, %s1155
        // Predicated region
        $region73: #{conv_attention_block.3} parent=67 // pred_check
          %p1157 = pneg %p303
        $region74: #{conv_attention_block.3} parent=67 // pred_check_branch
          %1159 = sbr.rel (%p1157) target = $region76
        $region75: #{conv_attention_block.3} parent=67 // pred_region
          _
        $region76: #{conv_attention_block.3} parent=67 // pred_fallthru
          _
        // Predicated region
        $region77: #{conv_attention_block.3} parent=67 // pred_check
          %p1160 = pneg %p329
        $region78: #{conv_attention_block.3} parent=67 // pred_check_branch
          %1162 = sbr.rel (%p1160) target = $region80
        $region79: #{conv_attention_block.3} parent=67 // pred_region
          _
        $region80: #{conv_attention_block.3} parent=67 // pred_fallthru
          _
        // Predicated region
        $region81: #{conv_attention_block.3} parent=67 // pred_check
          %p1163 = pneg %p355
        $region82: #{conv_attention_block.3} parent=67 // pred_check_branch
          %1165 = sbr.rel (%p1163) target = $region84
        $region83: #{conv_attention_block.3} parent=67 // pred_region
          _
        $region84: #{conv_attention_block.3} parent=67 // pred_fallthru
          _
        // Predicated region
        $region85: #{conv_attention_block.3} parent=67 // pred_check
          %p1166 = pneg %p381
        $region86: #{conv_attention_block.3} parent=67 // pred_check_branch
          %1168 = sbr.rel (%p1166) target = $region88
        $region87: #{conv_attention_block.3} parent=67 // pred_region
          _
        $region88: #{conv_attention_block.3} parent=67 // pred_fallthru
          _
      $region68: #{conv_attention_block.3} parent=5 // pred_fallthru
        _
      %p1169 = scmp.le.s32.totalorder 2, %s23
      // Predicated region
      $region89: #{conv_attention_block.3} parent=5 // pred_check
        %p1170 = pneg %p1169
      $region90: #{conv_attention_block.3} parent=5 // pred_check_branch
        %1172 = sbr.rel (%p1170) target = $region92
      $region91: #{conv_attention_block.3} parent=5 // pred_region
        %s1173 = ssub.s32 %s23, 2
        // Predicated region
        $region93: #{conv_attention_block.3} parent=91 // pred_check
          %p1174 = pneg %p309
        $region94: #{conv_attention_block.3} parent=91 // pred_check_branch
          %1176 = sbr.rel (%p1174) target = $region96
        $region95: #{conv_attention_block.3} parent=91 // pred_region
          %p1177 = scmp.lt.s32.totalorder %s29, 1
          %s1178 = scalar_select %p1177, %s29, 1
          %s1179 = smul.addr %s1178, 8
          %s1180 = scalar_lea.vmem %s12, %s1179
        $region96: #{conv_attention_block.3} parent=91 // pred_fallthru
          _
        // Predicated region
        $region97: #{conv_attention_block.3} parent=91 // pred_check
          %p1181 = pneg %p335
        $region98: #{conv_attention_block.3} parent=91 // pred_check_branch
          %1183 = sbr.rel (%p1181) target = $region100
        $region99: #{conv_attention_block.3} parent=91 // pred_region
          %p1184 = scmp.lt.s32.totalorder %s29, 1
          %s1185 = scalar_select %p1184, %s29, 1
          %s1186 = smul.addr %s1185, 8
          %s1187 = scalar_lea.vmem %s13, %s1186
        $region100: #{conv_attention_block.3} parent=91 // pred_fallthru
          _
        // Predicated region
        $region101: #{conv_attention_block.3} parent=91 // pred_check
          %p1188 = pneg %p361
        $region102: #{conv_attention_block.3} parent=91 // pred_check_branch
          %1190 = sbr.rel (%p1188) target = $region104
        $region103: #{conv_attention_block.3} parent=91 // pred_region
          %p1191 = scmp.lt.s32.totalorder %s29, 1
          %s1192 = scalar_select %p1191, %s29, 1
          %s1193 = smul.addr %s1192, 8
          %s1194 = scalar_lea.vmem %s14, %s1193
        $region104: #{conv_attention_block.3} parent=91 // pred_fallthru
          _
        // Predicated region
        $region105: #{conv_attention_block.3} parent=91 // pred_check
          %p1195 = pneg %p387
        $region106: #{conv_attention_block.3} parent=91 // pred_check_branch
          %1197 = sbr.rel (%p1195) target = $region108
        $region107: #{conv_attention_block.3} parent=91 // pred_region
          %p1198 = scmp.lt.s32.totalorder %s29, 1
          %s1199 = scalar_select %p1198, %s29, 1
          %s1200 = smul.addr %s1199, 8
          %s1201 = scalar_lea.vmem %s15, %s1200
        $region108: #{conv_attention_block.3} parent=91 // pred_fallthru
          _
      $region92: #{conv_attention_block.3} parent=5 // pred_fallthru
        _
    $region6: #{conv_attention_block.3} parent=1 // loop_footer
      %s27 = sadd.s32 1, %s23
    $region7: #{conv_attention_block.3} parent=1 // loop_footer_branch
      %22 = sbr.rel target = $region3
    $region8: #{conv_attention_block.3} parent=1 // loop_exit
      _
    %1202 = vsyncpa [#allocation3], 1
    %s1203 = scalar_lea.sflag [#allocation3], 1
    %1204 = vsyncpa %s1203, 1

// kernel: conv_attention_block.4
$region0: #{conv_attention_block.4}
  #allocation0 [shape = 'u32[]', space=smem, size = 0x4, offset = 0x4, fixed_abs, tag = 'smem constant byte address 0x4 - core index']
  #allocation1 [shape = 'u32[72,128]{1,0:T(1,128)}', space=vmem, size = 0x9000, scoped, tag = 'internal scratch']
  %s0 = inlined_call_operand.vmem [shape: f32[2,8,8,8], index: 0, kind: input, shape index: {}]
  %s1 = inlined_call_operand.vmem [shape: f32[2,8,8,8], index: 1, kind: input, shape index: {}]
  %s2 = inlined_call_operand.vmem [shape: f32[2,8,8,8], index: 2, kind: input, shape index: {}]
  %s3 = inlined_call_operand.vmem [shape: f32[2,8,8,8], index: 3, kind: output, shape index: {}]
  %s4 = sld [smem:[#allocation0]]
  $region45: #{conv_attention_block.4} parent=0
    _
  %s6 = ssub.s32 1, %s4
  %s7 = scalar_select 0, %s6, %s4
  loop: start=0, step=1, limit=4
  $region2: #{conv_attention_block.4} parent=0 // loop_pre_header
    _
  $region3: #{conv_attention_block.4} parent=0 // loop_header
    %s9 = sphi 0, %s13
    %p10 = scmp.ge.s32.totalorder %s9, 4
    %s19 = sphi 0, %s21
    %s22 = sphi 0, %s19
    %s23 = sphi 0, %s22
    %s39 = sphi 0, %s23
    %s45 = sphi 0, %s47
    %s48 = sphi 0, %s45
    %s49 = sphi 0, %s48
    %s65 = sphi 0, %s49
    %s71 = sphi 0, %s73
    %s74 = sphi 0, %s71
    %s75 = sphi 0, %s74
    %s91 = sphi 0, %s75
    %s97 = sphi 0, %s99
    %s100 = sphi 0, %s97
    %s101 = sphi 0, %s100
    %s117 = sphi 0, %s101
  $region4: #{conv_attention_block.4} parent=0 // loop_header_branch
    %12 = sbr.rel (%p10) target = $region8
  $region5: #{conv_attention_block.4} parent=0 // loop_body
    %s14 = ssub.s32 %s9, 1
    %s15 = ssub.s32 %s9, 2
    %s16 = sadd.s32 %s9, 1
    %s17 = ssub.s32 %s9, %s16
    %p18 = scmp.eq.s32.totalorder %s17, 0
    %s20 = sadd.s32 %s19, 1
    %s21 = scalar_select %p18, %s19, %s20
    %p24 = pneg %p18
    %p25 = scmp.eq.s32.totalorder %s9, 1
    %p26 = por %p24, %p25
    %p27 = scmp.ne.s32.totalorder %s19, %s22
    %p28 = scmp.eq.s32.totalorder %s9, 0
    %p29 = por %p27, %p28
    %p30 = scmp.ne.s32.totalorder %s19, %s22
    %p31 = scmp.eq.s32.totalorder %s14, 1
    %p32 = por %p30, %p31
    %p33 = scmp.ne.s32.totalorder %s22, %s23
    %p34 = scmp.eq.s32.totalorder %s14, 0
    %p35 = por %p33, %p34
    %p36 = scmp.ne.s32.totalorder %s22, %s23
    %p37 = scmp.eq.s32.totalorder %s15, 1
    %p38 = por %p36, %p37
    %p40 = scmp.ne.s32.totalorder %s23, %s39
    %p41 = scmp.eq.s32.totalorder %s15, 0
    %p42 = por %p40, %p41
    %s43 = ssub.s32 %s9, %s16
    %p44 = scmp.eq.s32.totalorder %s43, 0
    %s46 = sadd.s32 %s45, 1
    %s47 = scalar_select %p44, %s45, %s46
    %p50 = pneg %p44
    %p51 = scmp.eq.s32.totalorder %s9, 1
    %p52 = por %p50, %p51
    %p53 = scmp.ne.s32.totalorder %s45, %s48
    %p54 = scmp.eq.s32.totalorder %s9, 0
    %p55 = por %p53, %p54
    %p56 = scmp.ne.s32.totalorder %s45, %s48
    %p57 = scmp.eq.s32.totalorder %s14, 1
    %p58 = por %p56, %p57
    %p59 = scmp.ne.s32.totalorder %s48, %s49
    %p60 = scmp.eq.s32.totalorder %s14, 0
    %p61 = por %p59, %p60
    %p62 = scmp.ne.s32.totalorder %s48, %s49
    %p63 = scmp.eq.s32.totalorder %s15, 1
    %p64 = por %p62, %p63
    %p66 = scmp.ne.s32.totalorder %s49, %s65
    %p67 = scmp.eq.s32.totalorder %s15, 0
    %p68 = por %p66, %p67
    %s69 = ssub.s32 %s9, %s16
    %p70 = scmp.eq.s32.totalorder %s69, 0
    %s72 = sadd.s32 %s71, 1
    %s73 = scalar_select %p70, %s71, %s72
    %p76 = pneg %p70
    %p77 = scmp.eq.s32.totalorder %s9, 1
    %p78 = por %p76, %p77
    %p79 = scmp.ne.s32.totalorder %s71, %s74
    %p80 = scmp.eq.s32.totalorder %s9, 0
    %p81 = por %p79, %p80
    %p82 = scmp.ne.s32.totalorder %s71, %s74
    %p83 = scmp.eq.s32.totalorder %s14, 1
    %p84 = por %p82, %p83
    %p85 = scmp.ne.s32.totalorder %s74, %s75
    %p86 = scmp.eq.s32.totalorder %s14, 0
    %p87 = por %p85, %p86
    %p88 = scmp.ne.s32.totalorder %s74, %s75
    %p89 = scmp.eq.s32.totalorder %s15, 1
    %p90 = por %p88, %p89
    %p92 = scmp.ne.s32.totalorder %s75, %s91
    %p93 = scmp.eq.s32.totalorder %s15, 0
    %p94 = por %p92, %p93
    %s95 = ssub.s32 %s9, %s16
    %p96 = scmp.eq.s32.totalorder %s95, 0
    %s98 = sadd.s32 %s97, 1
    %s99 = scalar_select %p96, %s97, %s98
    %p102 = pneg %p96
    %p103 = scmp.eq.s32.totalorder %s9, 1
    %p104 = por %p102, %p103
    %p105 = scmp.ne.s32.totalorder %s97, %s100
    %p106 = scmp.eq.s32.totalorder %s9, 0
    %p107 = por %p105, %p106
    %p108 = scmp.ne.s32.totalorder %s97, %s100
    %p109 = scmp.eq.s32.totalorder %s14, 1
    %p110 = por %p108, %p109
    %p111 = scmp.ne.s32.totalorder %s100, %s101
    %p112 = scmp.eq.s32.totalorder %s14, 0
    %p113 = por %p111, %p112
    %p114 = scmp.ne.s32.totalorder %s100, %s101
    %p115 = scmp.eq.s32.totalorder %s15, 1
    %p116 = por %p114, %p115
    %p118 = scmp.ne.s32.totalorder %s101, %s117
    %p119 = scmp.eq.s32.totalorder %s15, 0
    %p120 = por %p118, %p119
    %p121 = scmp.le.s32.totalorder 1, %s9
    %p122 = scmp.lt.s32.totalorder %s9, 3
    %p123 = pnand %p121, %p122
    %p124 = pneg %p123
    // Predicated region
    $region9: #{conv_attention_block.4} parent=5 // pred_check
      _
    $region10: #{conv_attention_block.4} parent=5 // pred_check_branch
      %126 = sbr.rel (%p123) target = $region12
    $region11: #{conv_attention_block.4} parent=5 // pred_region
      %s127 = ssub.s32 %s9, 1
    $region12: #{conv_attention_block.4} parent=5 // pred_fallthru
      _
    %p128 = scmp.lt.s32.totalorder %s9, 2
    // Predicated region
    $region13: #{conv_attention_block.4} parent=5 // pred_check
      %p129 = pneg %p128
    $region14: #{conv_attention_block.4} parent=5 // pred_check_branch
      %131 = sbr.rel (%p129) target = $region16
    $region15: #{conv_attention_block.4} parent=5 // pred_region
      // Predicated region
      $region17: #{conv_attention_block.4} parent=15 // pred_check
        %p132 = pneg %p29
      $region18: #{conv_attention_block.4} parent=15 // pred_check_branch
        %134 = sbr.rel (%p132) target = $region20
      $region19: #{conv_attention_block.4} parent=15 // pred_region
        %p135 = scmp.lt.s32.totalorder %s9, 1
        %s136 = scalar_select %p135, %s9, 1
        %s137 = smul.addr %s136, 8
        %s138 = smul.addr %s137, 8
        %s139 = scalar_lea.vmem %s0, %s138
      $region20: #{conv_attention_block.4} parent=15 // pred_fallthru
        _
      // Predicated region
      $region21: #{conv_attention_block.4} parent=15 // pred_check
        %p140 = pneg %p55
      $region22: #{conv_attention_block.4} parent=15 // pred_check_branch
        %142 = sbr.rel (%p140) target = $region24
      $region23: #{conv_attention_block.4} parent=15 // pred_region
        %p143 = scmp.lt.s32.totalorder %s9, 1
        %s144 = scalar_select %p143, %s9, 1
        %s145 = smul.addr %s144, 8
        %s146 = smul.addr %s145, 8
        %s147 = scalar_lea.vmem %s1, %s146
      $region24: #{conv_attention_block.4} parent=15 // pred_fallthru
        _
      // Predicated region
      $region25: #{conv_attention_block.4} parent=15 // pred_check
        %p148 = pneg %p81
      $region26: #{conv_attention_block.4} parent=15 // pred_check_branch
        %150 = sbr.rel (%p148) target = $region28
      $region27: #{conv_attention_block.4} parent=15 // pred_region
        %p151 = scmp.lt.s32.totalorder %s9, 1
        %s152 = scalar_select %p151, %s9, 1
        %s153 = smul.addr %s152, 8
        %s154 = smul.addr %s153, 8
        %s155 = scalar_lea.vmem %s2, %s154
      $region28: #{conv_attention_block.4} parent=15 // pred_fallthru
        _
    $region16: #{conv_attention_block.4} parent=5 // pred_fallthru
      _
    %p156 = scmp.le.s32.totalorder 1, %s9
    %p157 = scmp.lt.s32.totalorder %s9, 3
    %p158 = pnand %p156, %p157
    %p159 = pneg %p158
    // Predicated region
    $region29: #{conv_attention_block.4} parent=5 // pred_check
      _
    $region30: #{conv_attention_block.4} parent=5 // pred_check_branch
      %161 = sbr.rel (%p158) target = $region32
    $region31: #{conv_attention_block.4} parent=5 // pred_region
      %s162 = ssub.s32 %s9, 1
      %p163 = scmp.lt.s32.totalorder %s14, 1
      %s164 = scalar_select %p163, %s14, 1
      %s165 = smul.addr %s164, 8
      %s166 = smul.addr %s165, 8
      %s167 = scalar_lea.vmem %s0, %s166
      %p168 = pneg %p35
      %p169 = pneg %p32
      %p170 = scmp.lt.s32.totalorder %s14, 1
      %s171 = scalar_select %p170, %s14, 1
      %s172 = smul.addr %s171, 8
      %s173 = smul.addr %s172, 8
      %s174 = scalar_lea.vmem %s1, %s173
      %p175 = pneg %p61
      %p176 = pneg %p58
      %p177 = scmp.lt.s32.totalorder %s14, 1
      %s178 = scalar_select %p177, %s14, 1
      %s179 = smul.addr %s178, 8
      %s180 = smul.addr %s179, 8
      %s181 = scalar_lea.vmem %s2, %s180
      %p182 = pneg %p87
      %p183 = pneg %p84
      %p184 = pneg %p113
      %p185 = pneg %p110
      %p186 = scmp.lt.s32.totalorder %s14, 1
      %s187 = scalar_select %p186, %s14, 1
      %s188 = smul.addr %s187, 8
      %s189 = smul.addr %s188, 8
      %s190 = scalar_lea.vmem %s3, %s189
      %p191 = scmp.lt.s32.totalorder %s14, 1
      %s192 = scalar_select %p191, %s14, 1
      %s193 = smul.addr %s192, 8
      %s194 = smul.addr %s193, 8
      %s195 = scalar_lea.vmem %s0, %s194
      %p196 = scmp.lt.s32.totalorder %s14, 1
      %s197 = scalar_select %p196, %s14, 1
      %s198 = smul.addr %s197, 8
      %s199 = smul.addr %s198, 8
      %s200 = scalar_lea.vmem %s1, %s199
      %p201 = scmp.lt.s32.totalorder %s14, 1
      %s202 = scalar_select %p201, %s14, 1
      %s203 = smul.addr %s202, 8
      %s204 = smul.addr %s203, 8
      %s205 = scalar_lea.vmem %s2, %s204
      %p206 = scmp.lt.s32.totalorder %s14, 1
      %s207 = scalar_select %p206, %s14, 1
      %s208 = smul.addr %s207, 8
      %s209 = smul.addr %s208, 8
      %s210 = scalar_lea.vmem %s3, %s209
      %v211 = vld [vmem:[%s195] sm:$0xff]
      %v212 = vld [vmem:[%s195 + $0x8] sm:$0xff]
      %v213 = vld [vmem:[%s195 + $0x10] sm:$0xff]
      %v214 = vld [vmem:[%s195 + $0x18] sm:$0xff]
      %v215 = vld [vmem:[%s195 + $0x20] sm:$0xff]
      %v216 = vld [vmem:[%s195 + $0x28] sm:$0xff]
      %v217 = vld [vmem:[%s195 + $0x30] sm:$0xff]
      %v218 = vld [vmem:[%s195 + $0x38] sm:$0xff]
      %v219 = vld [vmem:[%s200] sm:$0xff]
      %v220 = vld [vmem:[%s200 + $0x8] sm:$0xff]
      %v221 = vld [vmem:[%s200 + $0x10] sm:$0xff]
      %v222 = vld [vmem:[%s200 + $0x18] sm:$0xff]
      %v223 = vld [vmem:[%s200 + $0x20] sm:$0xff]
      %v224 = vld [vmem:[%s200 + $0x28] sm:$0xff]
      %v225 = vld [vmem:[%s200 + $0x30] sm:$0xff]
      %v226 = vld [vmem:[%s200 + $0x38] sm:$0xff]
      %v227 = vld [vmem:[%s205] sm:$0xff]
      %v228 = vld [vmem:[%s205 + $0x8] sm:$0xff]
      %v229 = vld [vmem:[%s205 + $0x10] sm:$0xff]
      %v230 = vld [vmem:[%s205 + $0x18] sm:$0xff]
      %v231 = vld [vmem:[%s205 + $0x20] sm:$0xff]
      %v232 = vld [vmem:[%s205 + $0x28] sm:$0xff]
      %v233 = vld [vmem:[%s205 + $0x30] sm:$0xff]
      %v234 = vld [vmem:[%s205 + $0x38] sm:$0xff]
      %vm235 = vcmask 64512
      %v237 = vsel %vm235, %v211, 0
      %v240 = vsel %vm235, %v219, 0
      %242 = vmatpush.xpose.msra.mxu0 0.0
      %243 = vmatpush.xpose.msra.mxu0 0.0
      %244 = vmatpush.xpose.msra.mxu0 0.0
      %245 = vmatpush.xpose.msra.mxu0 0.0
      %246 = vmatpush.xpose.msra.mxu0 0.0
      %247 = vmatpush.xpose.msra.mxu0 0.0
      %248 = vmatpush.xpose.msra.mxu0 0.0
      %249 = vmatpush.xpose.msra.mxu0 0.0
      %250 = vmatpush.xpose.msra.mxu0 0.0
      %251 = vmatpush.xpose.msra.mxu0 0.0
      %252 = vmatpush.xpose.msra.mxu0 0.0
      %253 = vmatpush.xpose.msra.mxu0 0.0
      %254 = vmatpush.xpose.msra.mxu0 0.0
      %255 = vmatpush.xpose.msra.mxu0 0.0
      %256 = vmatpush.xpose.msra.mxu0 0.0
      %257 = vmatpush.xpose.msra.mxu0 %v240
      %258 = vmatmul.f32.gmra.mxu0 %v237
      %v259 = vpop.f32.mrf.mxu0
      %v260 = vadd.f32 0.0, %v259
      %261 = vdwg.mxu0
      %v263 = vsel %vm235, %v212, 0
      %v266 = vsel %vm235, %v220, 0
      %268 = vmatpush.xpose.msra.mxu0 0.0
      %269 = vmatpush.xpose.msra.mxu0 0.0
      %270 = vmatpush.xpose.msra.mxu0 0.0
      %271 = vmatpush.xpose.msra.mxu0 0.0
      %272 = vmatpush.xpose.msra.mxu0 0.0
      %273 = vmatpush.xpose.msra.mxu0 0.0
      %274 = vmatpush.xpose.msra.mxu0 0.0
      %275 = vmatpush.xpose.msra.mxu0 0.0
      %276 = vmatpush.xpose.msra.mxu0 0.0
      %277 = vmatpush.xpose.msra.mxu0 0.0
      %278 = vmatpush.xpose.msra.mxu0 0.0
      %279 = vmatpush.xpose.msra.mxu0 0.0
      %280 = vmatpush.xpose.msra.mxu0 0.0
      %281 = vmatpush.xpose.msra.mxu0 0.0
      %282 = vmatpush.xpose.msra.mxu0 0.0
      %283 = vmatpush.xpose.msra.mxu0 %v266
      %284 = vmatmul.f32.gmra.mxu0 %v263
      %v285 = vpop.f32.mrf.mxu0
      %v286 = vadd.f32 0.0, %v285
      %287 = vdwg.mxu0
      %v289 = vsel %vm235, %v213, 0
      %v292 = vsel %vm235, %v221, 0
      %294 = vmatpush.xpose.msra.mxu0 0.0
      %295 = vmatpush.xpose.msra.mxu0 0.0
      %296 = vmatpush.xpose.msra.mxu0 0.0
      %297 = vmatpush.xpose.msra.mxu0 0.0
      %298 = vmatpush.xpose.msra.mxu0 0.0
      %299 = vmatpush.xpose.msra.mxu0 0.0
      %300 = vmatpush.xpose.msra.mxu0 0.0
      %301 = vmatpush.xpose.msra.mxu0 0.0
      %302 = vmatpush.xpose.msra.mxu0 0.0
      %303 = vmatpush.xpose.msra.mxu0 0.0
      %304 = vmatpush.xpose.msra.mxu0 0.0
      %305 = vmatpush.xpose.msra.mxu0 0.0
      %306 = vmatpush.xpose.msra.mxu0 0.0
      %307 = vmatpush.xpose.msra.mxu0 0.0
      %308 = vmatpush.xpose.msra.mxu0 0.0
      %309 = vmatpush.xpose.msra.mxu0 %v292
      %310 = vmatmul.f32.gmra.mxu0 %v289
      %v311 = vpop.f32.mrf.mxu0
      %v312 = vadd.f32 0.0, %v311
      %313 = vdwg.mxu0
      %v315 = vsel %vm235, %v214, 0
      %v318 = vsel %vm235, %v222, 0
      %320 = vmatpush.xpose.msra.mxu0 0.0
      %321 = vmatpush.xpose.msra.mxu0 0.0
      %322 = vmatpush.xpose.msra.mxu0 0.0
      %323 = vmatpush.xpose.msra.mxu0 0.0
      %324 = vmatpush.xpose.msra.mxu0 0.0
      %325 = vmatpush.xpose.msra.mxu0 0.0
      %326 = vmatpush.xpose.msra.mxu0 0.0
      %327 = vmatpush.xpose.msra.mxu0 0.0
      %328 = vmatpush.xpose.msra.mxu0 0.0
      %329 = vmatpush.xpose.msra.mxu0 0.0
      %330 = vmatpush.xpose.msra.mxu0 0.0
      %331 = vmatpush.xpose.msra.mxu0 0.0
      %332 = vmatpush.xpose.msra.mxu0 0.0
      %333 = vmatpush.xpose.msra.mxu0 0.0
      %334 = vmatpush.xpose.msra.mxu0 0.0
      %335 = vmatpush.xpose.msra.mxu0 %v318
      %336 = vmatmul.f32.gmra.mxu0 %v315
      %v337 = vpop.f32.mrf.mxu0
      %v338 = vadd.f32 0.0, %v337
      %339 = vdwg.mxu0
      %v341 = vsel %vm235, %v215, 0
      %v344 = vsel %vm235, %v223, 0
      %346 = vmatpush.xpose.msra.mxu0 0.0
      %347 = vmatpush.xpose.msra.mxu0 0.0
      %348 = vmatpush.xpose.msra.mxu0 0.0
      %349 = vmatpush.xpose.msra.mxu0 0.0
      %350 = vmatpush.xpose.msra.mxu0 0.0
      %351 = vmatpush.xpose.msra.mxu0 0.0
      %352 = vmatpush.xpose.msra.mxu0 0.0
      %353 = vmatpush.xpose.msra.mxu0 0.0
      %354 = vmatpush.xpose.msra.mxu0 0.0
      %355 = vmatpush.xpose.msra.mxu0 0.0
      %356 = vmatpush.xpose.msra.mxu0 0.0
      %357 = vmatpush.xpose.msra.mxu0 0.0
      %358 = vmatpush.xpose.msra.mxu0 0.0
      %359 = vmatpush.xpose.msra.mxu0 0.0
      %360 = vmatpush.xpose.msra.mxu0 0.0
      %361 = vmatpush.xpose.msra.mxu0 %v344
      %362 = vmatmul.f32.gmra.mxu0 %v341
      %v363 = vpop.f32.mrf.mxu0
      %v364 = vadd.f32 0.0, %v363
      %365 = vdwg.mxu0
      %v367 = vsel %vm235, %v216, 0
      %v370 = vsel %vm235, %v224, 0
      %372 = vmatpush.xpose.msra.mxu0 0.0
      %373 = vmatpush.xpose.msra.mxu0 0.0
      %374 = vmatpush.xpose.msra.mxu0 0.0
      %375 = vmatpush.xpose.msra.mxu0 0.0
      %376 = vmatpush.xpose.msra.mxu0 0.0
      %377 = vmatpush.xpose.msra.mxu0 0.0
      %378 = vmatpush.xpose.msra.mxu0 0.0
      %379 = vmatpush.xpose.msra.mxu0 0.0
      %380 = vmatpush.xpose.msra.mxu0 0.0
      %381 = vmatpush.xpose.msra.mxu0 0.0
      %382 = vmatpush.xpose.msra.mxu0 0.0
      %383 = vmatpush.xpose.msra.mxu0 0.0
      %384 = vmatpush.xpose.msra.mxu0 0.0
      %385 = vmatpush.xpose.msra.mxu0 0.0
      %386 = vmatpush.xpose.msra.mxu0 0.0
      %387 = vmatpush.xpose.msra.mxu0 %v370
      %388 = vmatmul.f32.gmra.mxu0 %v367
      %v389 = vpop.f32.mrf.mxu0
      %v390 = vadd.f32 0.0, %v389
      %391 = vdwg.mxu0
      %v393 = vsel %vm235, %v217, 0
      %v396 = vsel %vm235, %v225, 0
      %398 = vmatpush.xpose.msra.mxu0 0.0
      %399 = vmatpush.xpose.msra.mxu0 0.0
      %400 = vmatpush.xpose.msra.mxu0 0.0
      %401 = vmatpush.xpose.msra.mxu0 0.0
      %402 = vmatpush.xpose.msra.mxu0 0.0
      %403 = vmatpush.xpose.msra.mxu0 0.0
      %404 = vmatpush.xpose.msra.mxu0 0.0
      %405 = vmatpush.xpose.msra.mxu0 0.0
      %406 = vmatpush.xpose.msra.mxu0 0.0
      %407 = vmatpush.xpose.msra.mxu0 0.0
      %408 = vmatpush.xpose.msra.mxu0 0.0
      %409 = vmatpush.xpose.msra.mxu0 0.0
      %410 = vmatpush.xpose.msra.mxu0 0.0
      %411 = vmatpush.xpose.msra.mxu0 0.0
      %412 = vmatpush.xpose.msra.mxu0 0.0
      %413 = vmatpush.xpose.msra.mxu0 %v396
      %414 = vmatmul.f32.gmra.mxu0 %v393
      %v415 = vpop.f32.mrf.mxu0
      %v416 = vadd.f32 0.0, %v415
      %417 = vdwg.mxu0
      %v419 = vsel %vm235, %v218, 0
      %v422 = vsel %vm235, %v226, 0
      %424 = vmatpush.xpose.msra.mxu0 0.0
      %425 = vmatpush.xpose.msra.mxu0 0.0
      %426 = vmatpush.xpose.msra.mxu0 0.0
      %427 = vmatpush.xpose.msra.mxu0 0.0
      %428 = vmatpush.xpose.msra.mxu0 0.0
      %429 = vmatpush.xpose.msra.mxu0 0.0
      %430 = vmatpush.xpose.msra.mxu0 0.0
      %431 = vmatpush.xpose.msra.mxu0 0.0
      %432 = vmatpush.xpose.msra.mxu0 0.0
      %433 = vmatpush.xpose.msra.mxu0 0.0
      %434 = vmatpush.xpose.msra.mxu0 0.0
      %435 = vmatpush.xpose.msra.mxu0 0.0
      %436 = vmatpush.xpose.msra.mxu0 0.0
      %437 = vmatpush.xpose.msra.mxu0 0.0
      %438 = vmatpush.xpose.msra.mxu0 0.0
      %439 = vmatpush.xpose.msra.mxu0 %v422
      %440 = vmatmul.f32.gmra.mxu0 %v419
      %v441 = vpop.f32.mrf.mxu0
      %v442 = vadd.f32 0.0, %v441
      %443 = vdwg.mxu0
      %v444 = vmul.f32 %v260, 0.25
      %v445 = vmul.f32 %v286, 0.25
      %v446 = vmul.f32 %v312, 0.25
      %v447 = vmul.f32 %v338, 0.25
      %v448 = vmul.f32 %v364, 0.25
      %v449 = vmul.f32 %v390, 0.25
      %v450 = vmul.f32 %v416, 0.25
      %v451 = vmul.f32 %v442, 0.25
      %v452 = vsel %vm235, %v444, -inf
      %453 = vmax.xlane.f32.xlu0 %v452
      %v454 = vpop.xlane.xlu0 %453
      %v455 = vsel %vm235, %v445, -inf
      %456 = vmax.xlane.f32.xlu0 %v455
      %v457 = vpop.xlane.xlu0 %456
      %v458 = vsel %vm235, %v446, -inf
      %459 = vmax.xlane.f32.xlu0 %v458
      %v460 = vpop.xlane.xlu0 %459
      %v461 = vsel %vm235, %v447, -inf
      %462 = vmax.xlane.f32.xlu0 %v461
      %v463 = vpop.xlane.xlu0 %462
      %v464 = vsel %vm235, %v448, -inf
      %465 = vmax.xlane.f32.xlu0 %v464
      %v466 = vpop.xlane.xlu0 %465
      %v467 = vsel %vm235, %v449, -inf
      %468 = vmax.xlane.f32.xlu0 %v467
      %v469 = vpop.xlane.xlu0 %468
      %v470 = vsel %vm235, %v450, -inf
      %471 = vmax.xlane.f32.xlu0 %v470
      %v472 = vpop.xlane.xlu0 %471
      %v473 = vsel %vm235, %v451, -inf
      %474 = vmax.xlane.f32.xlu0 %v473
      %v475 = vpop.xlane.xlu0 %474
      %v476 = vsub.f32 %v444, %v454
      %v477 = vsub.f32 %v445, %v457
      %v478 = vsub.f32 %v446, %v460
      %v479 = vsub.f32 %v447, %v463
      %v480 = vsub.f32 %v448, %v466
      %v481 = vsub.f32 %v449, %v469
      %v482 = vsub.f32 %v450, %v472
      %v483 = vsub.f32 %v451, %v475
      %v484 = vmul.f32 %v476, 1.442695
      %v485 = vpow.pop %v484
      %v486 = vmul.f32 %v477, 1.442695
      %v487 = vpow.pop %v486
      %v488 = vmul.f32 %v478, 1.442695
      %v489 = vpow.pop %v488
      %v490 = vmul.f32 %v479, 1.442695
      %v491 = vpow.pop %v490
      %v492 = vmul.f32 %v480, 1.442695
      %v493 = vpow.pop %v492
      %v494 = vmul.f32 %v481, 1.442695
      %v495 = vpow.pop %v494
      %v496 = vmul.f32 %v482, 1.442695
      %v497 = vpow.pop %v496
      %v498 = vmul.f32 %v483, 1.442695
      %v499 = vpow.pop %v498
      %v500 = vsel %vm235, %v485, 0.0
      %501 = vadd.xlane.f32.xlu0 %v500
      %v502 = vpop.xlane.xlu0 %501
      %v503 = vsel %vm235, %v487, 0.0
      %504 = vadd.xlane.f32.xlu0 %v503
      %v505 = vpop.xlane.xlu0 %504
      %v506 = vsel %vm235, %v489, 0.0
      %507 = vadd.xlane.f32.xlu0 %v506
      %v508 = vpop.xlane.xlu0 %507
      %v509 = vsel %vm235, %v491, 0.0
      %510 = vadd.xlane.f32.xlu0 %v509
      %v511 = vpop.xlane.xlu0 %510
      %v512 = vsel %vm235, %v493, 0.0
      %513 = vadd.xlane.f32.xlu0 %v512
      %v514 = vpop.xlane.xlu0 %513
      %v515 = vsel %vm235, %v495, 0.0
      %516 = vadd.xlane.f32.xlu0 %v515
      %v517 = vpop.xlane.xlu0 %516
      %v518 = vsel %vm235, %v497, 0.0
      %519 = vadd.xlane.f32.xlu0 %v518
      %v520 = vpop.xlane.xlu0 %519
      %v521 = vsel %vm235, %v499, 0.0
      %522 = vadd.xlane.f32.xlu0 %v521
      %v523 = vpop.xlane.xlu0 %522
      %v524 = vrcp.pop %v502
      %v525 = vmul.f32 %v502, %v524
      %v526 = vsub.f32 1.0, %v525
      %v527 = vmul.f32 %v524, %v526
      %v528 = vadd.f32 %v524, %v527
      %vm529 = vweird.f32 %v502
      %vm530 = vweird.f32 %v524
      %vm531 = vmor %vm529, %vm530
      %v532 = vsel %vm531, %v524, %v528
      %v533 = vand.u32 2147483647, %v502
      %vm534 = vcmp.eq.f32.partialorder %v533, 8.507059e+37
      %v535 = vand.u32 %v502, 2147483648
      %v536 = vor.u32 1.1754944e-38, %v535
      %v537 = vsel %vm534, %v536, %v532
      %v538 = vmul.f32 %v485, %v537
      %v539 = vrcp.pop %v505
      %v540 = vmul.f32 %v505, %v539
      %v541 = vsub.f32 1.0, %v540
      %v542 = vmul.f32 %v539, %v541
      %v543 = vadd.f32 %v539, %v542
      %vm544 = vweird.f32 %v505
      %vm545 = vweird.f32 %v539
      %vm546 = vmor %vm544, %vm545
      %v547 = vsel %vm546, %v539, %v543
      %v548 = vand.u32 2147483647, %v505
      %vm549 = vcmp.eq.f32.partialorder %v548, 8.507059e+37
      %v550 = vand.u32 %v505, 2147483648
      %v551 = vor.u32 1.1754944e-38, %v550
      %v552 = vsel %vm549, %v551, %v547
      %v553 = vmul.f32 %v487, %v552
      %v554 = vrcp.pop %v508
      %v555 = vmul.f32 %v508, %v554
      %v556 = vsub.f32 1.0, %v555
      %v557 = vmul.f32 %v554, %v556
      %v558 = vadd.f32 %v554, %v557
      %vm559 = vweird.f32 %v508
      %vm560 = vweird.f32 %v554
      %vm561 = vmor %vm559, %vm560
      %v562 = vsel %vm561, %v554, %v558
      %v563 = vand.u32 2147483647, %v508
      %vm564 = vcmp.eq.f32.partialorder %v563, 8.507059e+37
      %v565 = vand.u32 %v508, 2147483648
      %v566 = vor.u32 1.1754944e-38, %v565
      %v567 = vsel %vm564, %v566, %v562
      %v568 = vmul.f32 %v489, %v567
      %v569 = vrcp.pop %v511
      %v570 = vmul.f32 %v511, %v569
      %v571 = vsub.f32 1.0, %v570
      %v572 = vmul.f32 %v569, %v571
      %v573 = vadd.f32 %v569, %v572
      %vm574 = vweird.f32 %v511
      %vm575 = vweird.f32 %v569
      %vm576 = vmor %vm574, %vm575
      %v577 = vsel %vm576, %v569, %v573
      %v578 = vand.u32 2147483647, %v511
      %vm579 = vcmp.eq.f32.partialorder %v578, 8.507059e+37
      %v580 = vand.u32 %v511, 2147483648
      %v581 = vor.u32 1.1754944e-38, %v580
      %v582 = vsel %vm579, %v581, %v577
      %v583 = vmul.f32 %v491, %v582
      %v584 = vrcp.pop %v514
      %v585 = vmul.f32 %v514, %v584
      %v586 = vsub.f32 1.0, %v585
      %v587 = vmul.f32 %v584, %v586
      %v588 = vadd.f32 %v584, %v587
      %vm589 = vweird.f32 %v514
      %vm590 = vweird.f32 %v584
      %vm591 = vmor %vm589, %vm590
      %v592 = vsel %vm591, %v584, %v588
      %v593 = vand.u32 2147483647, %v514
      %vm594 = vcmp.eq.f32.partialorder %v593, 8.507059e+37
      %v595 = vand.u32 %v514, 2147483648
      %v596 = vor.u32 1.1754944e-38, %v595
      %v597 = vsel %vm594, %v596, %v592
      %v598 = vmul.f32 %v493, %v597
      %v599 = vrcp.pop %v517
      %v600 = vmul.f32 %v517, %v599
      %v601 = vsub.f32 1.0, %v600
      %v602 = vmul.f32 %v599, %v601
      %v603 = vadd.f32 %v599, %v602
      %vm604 = vweird.f32 %v517
      %vm605 = vweird.f32 %v599
      %vm606 = vmor %vm604, %vm605
      %v607 = vsel %vm606, %v599, %v603
      %v608 = vand.u32 2147483647, %v517
      %vm609 = vcmp.eq.f32.partialorder %v608, 8.507059e+37
      %v610 = vand.u32 %v517, 2147483648
      %v611 = vor.u32 1.1754944e-38, %v610
      %v612 = vsel %vm609, %v611, %v607
      %v613 = vmul.f32 %v495, %v612
      %v614 = vrcp.pop %v520
      %v615 = vmul.f32 %v520, %v614
      %v616 = vsub.f32 1.0, %v615
      %v617 = vmul.f32 %v614, %v616
      %v618 = vadd.f32 %v614, %v617
      %vm619 = vweird.f32 %v520
      %vm620 = vweird.f32 %v614
      %vm621 = vmor %vm619, %vm620
      %v622 = vsel %vm621, %v614, %v618
      %v623 = vand.u32 2147483647, %v520
      %vm624 = vcmp.eq.f32.partialorder %v623, 8.507059e+37
      %v625 = vand.u32 %v520, 2147483648
      %v626 = vor.u32 1.1754944e-38, %v625
      %v627 = vsel %vm624, %v626, %v622
      %v628 = vmul.f32 %v497, %v627
      %v629 = vrcp.pop %v523
      %v630 = vmul.f32 %v523, %v629
      %v631 = vsub.f32 1.0, %v630
      %v632 = vmul.f32 %v629, %v631
      %v633 = vadd.f32 %v629, %v632
      %vm634 = vweird.f32 %v523
      %vm635 = vweird.f32 %v629
      %vm636 = vmor %vm634, %vm635
      %v637 = vsel %vm636, %v629, %v633
      %v638 = vand.u32 2147483647, %v523
      %vm639 = vcmp.eq.f32.partialorder %v638, 8.507059e+37
      %v640 = vand.u32 %v523, 2147483648
      %v641 = vor.u32 1.1754944e-38, %v640
      %v642 = vsel %vm639, %v641, %v637
      %v643 = vmul.f32 %v499, %v642
      %v645 = vsel %vm235, %v538, 0
      %647 = vmatpush.msra.mxu0 0.0
      %648 = vmatpush.msra.mxu0 0.0
      %649 = vmatpush.msra.mxu0 0.0
      %650 = vmatpush.msra.mxu0 0.0
      %651 = vmatpush.msra.mxu0 0.0
      %652 = vmatpush.msra.mxu0 0.0
      %653 = vmatpush.msra.mxu0 0.0
      %654 = vmatpush.msra.mxu0 0.0
      %655 = vmatpush.msra.mxu0 0.0
      %656 = vmatpush.msra.mxu0 0.0
      %657 = vmatpush.msra.mxu0 0.0
      %658 = vmatpush.msra.mxu0 0.0
      %659 = vmatpush.msra.mxu0 0.0
      %660 = vmatpush.msra.mxu0 0.0
      %661 = vmatpush.msra.mxu0 0.0
      %662 = vmatpush.msra.mxu0 %v227
      %663 = vmatmul.f32.gmra.mxu0 %v645
      %v664 = vpop.f32.mrf.mxu0
      %v665 = vadd.f32 0.0, %v664
      %666 = vdwg.mxu0
      %v668 = vsel %vm235, %v553, 0
      %670 = vmatpush.msra.mxu0 0.0
      %671 = vmatpush.msra.mxu0 0.0
      %672 = vmatpush.msra.mxu0 0.0
      %673 = vmatpush.msra.mxu0 0.0
      %674 = vmatpush.msra.mxu0 0.0
      %675 = vmatpush.msra.mxu0 0.0
      %676 = vmatpush.msra.mxu0 0.0
      %677 = vmatpush.msra.mxu0 0.0
      %678 = vmatpush.msra.mxu0 0.0
      %679 = vmatpush.msra.mxu0 0.0
      %680 = vmatpush.msra.mxu0 0.0
      %681 = vmatpush.msra.mxu0 0.0
      %682 = vmatpush.msra.mxu0 0.0
      %683 = vmatpush.msra.mxu0 0.0
      %684 = vmatpush.msra.mxu0 0.0
      %685 = vmatpush.msra.mxu0 %v228
      %686 = vmatmul.f32.gmra.mxu0 %v668
      %v687 = vpop.f32.mrf.mxu0
      %v688 = vadd.f32 0.0, %v687
      %689 = vdwg.mxu0
      %v691 = vsel %vm235, %v568, 0
      %693 = vmatpush.msra.mxu0 0.0
      %694 = vmatpush.msra.mxu0 0.0
      %695 = vmatpush.msra.mxu0 0.0
      %696 = vmatpush.msra.mxu0 0.0
      %697 = vmatpush.msra.mxu0 0.0
      %698 = vmatpush.msra.mxu0 0.0
      %699 = vmatpush.msra.mxu0 0.0
      %700 = vmatpush.msra.mxu0 0.0
      %701 = vmatpush.msra.mxu0 0.0
      %702 = vmatpush.msra.mxu0 0.0
      %703 = vmatpush.msra.mxu0 0.0
      %704 = vmatpush.msra.mxu0 0.0
      %705 = vmatpush.msra.mxu0 0.0
      %706 = vmatpush.msra.mxu0 0.0
      %707 = vmatpush.msra.mxu0 0.0
      %708 = vmatpush.msra.mxu0 %v229
      %709 = vmatmul.f32.gmra.mxu0 %v691
      %v710 = vpop.f32.mrf.mxu0
      %v711 = vadd.f32 0.0, %v710
      %712 = vdwg.mxu0
      %v714 = vsel %vm235, %v583, 0
      %716 = vmatpush.msra.mxu0 0.0
      %717 = vmatpush.msra.mxu0 0.0
      %718 = vmatpush.msra.mxu0 0.0
      %719 = vmatpush.msra.mxu0 0.0
      %720 = vmatpush.msra.mxu0 0.0
      %721 = vmatpush.msra.mxu0 0.0
      %722 = vmatpush.msra.mxu0 0.0
      %723 = vmatpush.msra.mxu0 0.0
      %724 = vmatpush.msra.mxu0 0.0
      %725 = vmatpush.msra.mxu0 0.0
      %726 = vmatpush.msra.mxu0 0.0
      %727 = vmatpush.msra.mxu0 0.0
      %728 = vmatpush.msra.mxu0 0.0
      %729 = vmatpush.msra.mxu0 0.0
      %730 = vmatpush.msra.mxu0 0.0
      %731 = vmatpush.msra.mxu0 %v230
      %732 = vmatmul.f32.gmra.mxu0 %v714
      %v733 = vpop.f32.mrf.mxu0
      %v734 = vadd.f32 0.0, %v733
      %735 = vdwg.mxu0
      %v737 = vsel %vm235, %v598, 0
      %739 = vmatpush.msra.mxu0 0.0
      %740 = vmatpush.msra.mxu0 0.0
      %741 = vmatpush.msra.mxu0 0.0
      %742 = vmatpush.msra.mxu0 0.0
      %743 = vmatpush.msra.mxu0 0.0
      %744 = vmatpush.msra.mxu0 0.0
      %745 = vmatpush.msra.mxu0 0.0
      %746 = vmatpush.msra.mxu0 0.0
      %747 = vmatpush.msra.mxu0 0.0
      %748 = vmatpush.msra.mxu0 0.0
      %749 = vmatpush.msra.mxu0 0.0
      %750 = vmatpush.msra.mxu0 0.0
      %751 = vmatpush.msra.mxu0 0.0
      %752 = vmatpush.msra.mxu0 0.0
      %753 = vmatpush.msra.mxu0 0.0
      %754 = vmatpush.msra.mxu0 %v231
      %755 = vmatmul.f32.gmra.mxu0 %v737
      %v756 = vpop.f32.mrf.mxu0
      %v757 = vadd.f32 0.0, %v756
      %758 = vdwg.mxu0
      %v760 = vsel %vm235, %v613, 0
      %762 = vmatpush.msra.mxu0 0.0
      %763 = vmatpush.msra.mxu0 0.0
      %764 = vmatpush.msra.mxu0 0.0
      %765 = vmatpush.msra.mxu0 0.0
      %766 = vmatpush.msra.mxu0 0.0
      %767 = vmatpush.msra.mxu0 0.0
      %768 = vmatpush.msra.mxu0 0.0
      %769 = vmatpush.msra.mxu0 0.0
      %770 = vmatpush.msra.mxu0 0.0
      %771 = vmatpush.msra.mxu0 0.0
      %772 = vmatpush.msra.mxu0 0.0
      %773 = vmatpush.msra.mxu0 0.0
      %774 = vmatpush.msra.mxu0 0.0
      %775 = vmatpush.msra.mxu0 0.0
      %776 = vmatpush.msra.mxu0 0.0
      %777 = vmatpush.msra.mxu0 %v232
      %778 = vmatmul.f32.gmra.mxu0 %v760
      %v779 = vpop.f32.mrf.mxu0
      %v780 = vadd.f32 0.0, %v779
      %781 = vdwg.mxu0
      %v783 = vsel %vm235, %v628, 0
      %785 = vmatpush.msra.mxu0 0.0
      %786 = vmatpush.msra.mxu0 0.0
      %787 = vmatpush.msra.mxu0 0.0
      %788 = vmatpush.msra.mxu0 0.0
      %789 = vmatpush.msra.mxu0 0.0
      %790 = vmatpush.msra.mxu0 0.0
      %791 = vmatpush.msra.mxu0 0.0
      %792 = vmatpush.msra.mxu0 0.0
      %793 = vmatpush.msra.mxu0 0.0
      %794 = vmatpush.msra.mxu0 0.0
      %795 = vmatpush.msra.mxu0 0.0
      %796 = vmatpush.msra.mxu0 0.0
      %797 = vmatpush.msra.mxu0 0.0
      %798 = vmatpush.msra.mxu0 0.0
      %799 = vmatpush.msra.mxu0 0.0
      %800 = vmatpush.msra.mxu0 %v233
      %801 = vmatmul.f32.gmra.mxu0 %v783
      %v802 = vpop.f32.mrf.mxu0
      %v803 = vadd.f32 0.0, %v802
      %804 = vdwg.mxu0
      %v806 = vsel %vm235, %v643, 0
      %808 = vmatpush.msra.mxu0 0.0
      %809 = vmatpush.msra.mxu0 0.0
      %810 = vmatpush.msra.mxu0 0.0
      %811 = vmatpush.msra.mxu0 0.0
      %812 = vmatpush.msra.mxu0 0.0
      %813 = vmatpush.msra.mxu0 0.0
      %814 = vmatpush.msra.mxu0 0.0
      %815 = vmatpush.msra.mxu0 0.0
      %816 = vmatpush.msra.mxu0 0.0
      %817 = vmatpush.msra.mxu0 0.0
      %818 = vmatpush.msra.mxu0 0.0
      %819 = vmatpush.msra.mxu0 0.0
      %820 = vmatpush.msra.mxu0 0.0
      %821 = vmatpush.msra.mxu0 0.0
      %822 = vmatpush.msra.mxu0 0.0
      %823 = vmatpush.msra.mxu0 %v234
      %824 = vmatmul.f32.gmra.mxu0 %v806
      %v825 = vpop.f32.mrf.mxu0
      %v826 = vadd.f32 0.0, %v825
      %827 = vdwg.mxu0
      %828 = vst.msk [vmem:[%s210] sm:$0xff] %vm235, %v665
      %829 = vst.msk [vmem:[%s210 + $0x8] sm:$0xff] %vm235, %v688
      %830 = vst.msk [vmem:[%s210 + $0x10] sm:$0xff] %vm235, %v711
      %831 = vst.msk [vmem:[%s210 + $0x18] sm:$0xff] %vm235, %v734
      %832 = vst.msk [vmem:[%s210 + $0x20] sm:$0xff] %vm235, %v757
      %833 = vst.msk [vmem:[%s210 + $0x28] sm:$0xff] %vm235, %v780
      %834 = vst.msk [vmem:[%s210 + $0x30] sm:$0xff] %vm235, %v803
      %835 = vst.msk [vmem:[%s210 + $0x38] sm:$0xff] %vm235, %v826
      %p836 = scmp.lt.s32.totalorder %s14, 1
      %s837 = scalar_select %p836, %s14, 1
      %s838 = smul.addr %s837, 8
      %s839 = smul.addr %s838, 8
      %s840 = scalar_lea.vmem %s3, %s839
      // Predicated region
      $region33: #{conv_attention_block.4} parent=31 // pred_check
        %p841 = pneg %p110
      $region34: #{conv_attention_block.4} parent=31 // pred_check_branch
        %843 = sbr.rel (%p841) target = $region36
      $region35: #{conv_attention_block.4} parent=31 // pred_region
        _
      $region36: #{conv_attention_block.4} parent=31 // pred_fallthru
        _
    $region32: #{conv_attention_block.4} parent=5 // pred_fallthru
      _
    %p844 = scmp.le.s32.totalorder 2, %s9
    // Predicated region
    $region37: #{conv_attention_block.4} parent=5 // pred_check
      %p845 = pneg %p844
    $region38: #{conv_attention_block.4} parent=5 // pred_check_branch
      %847 = sbr.rel (%p845) target = $region40
    $region39: #{conv_attention_block.4} parent=5 // pred_region
      %s848 = ssub.s32 %s9, 2
      // Predicated region
      $region41: #{conv_attention_block.4} parent=39 // pred_check
        %p849 = pneg %p116
      $region42: #{conv_attention_block.4} parent=39 // pred_check_branch
        %851 = sbr.rel (%p849) target = $region44
      $region43: #{conv_attention_block.4} parent=39 // pred_region
        %p852 = scmp.lt.s32.totalorder %s15, 1
        %s853 = scalar_select %p852, %s15, 1
        %s854 = smul.addr %s853, 8
        %s855 = smul.addr %s854, 8
        %s856 = scalar_lea.vmem %s3, %s855
      $region44: #{conv_attention_block.4} parent=39 // pred_fallthru
        _
    $region40: #{conv_attention_block.4} parent=5 // pred_fallthru
      _
  $region6: #{conv_attention_block.4} parent=0 // loop_footer
    %s13 = sadd.s32 1, %s9
  $region7: #{conv_attention_block.4} parent=0 // loop_footer_branch
    %8 = sbr.rel target = $region3
  $region8: #{conv_attention_block.4} parent=0 // loop_exit
    _

// kernel: conv_attention_block.5
$region0: #{conv_attention_block.5}
  #allocation0 [shape = 'u32[]', space=smem, size = 0x4, offset = 0x4, fixed_abs, tag = 'smem constant byte address 0x4 - core index']
  #allocation1 [shape = 'u32[72,128]{1,0:T(1,128)}', space=vmem, size = 0x9000, scoped, tag = 'internal scratch']
  %s0 = inlined_call_operand.vmem [shape: f32[2,8,64], index: 0, kind: input, shape index: {}]
  %s1 = inlined_call_operand.vmem [shape: f32[2,8,64], index: 1, kind: input, shape index: {}]
  %s2 = inlined_call_operand.vmem [shape: f32[2,8,64], index: 2, kind: input, shape index: {}]
  %s3 = inlined_call_operand.vmem [shape: f32[64,64], index: 3, kind: input, shape index: {}]
  %s4 = inlined_call_operand.vmem [shape: f32[1,64], index: 4, kind: input, shape index: {}]
  %s5 = inlined_call_operand.vmem [shape: f32[1,64], index: 5, kind: input, shape index: {}]
  %s6 = inlined_call_operand.vmem [shape: f32[1,64], index: 6, kind: input, shape index: {}]
  %s7 = inlined_call_operand.vmem [shape: f32[64,256], index: 7, kind: input, shape index: {}]
  %s8 = inlined_call_operand.vmem [shape: f32[1,256], index: 8, kind: input, shape index: {}]
  %s9 = inlined_call_operand.vmem [shape: f32[256,64], index: 9, kind: input, shape index: {}]
  %s10 = inlined_call_operand.vmem [shape: f32[1,64], index: 10, kind: input, shape index: {}]
  %s11 = inlined_call_operand.vmem [shape: f32[8,8], index: 11, kind: input, shape index: {}]
  %s12 = inlined_call_operand.vmem [shape: f32[8,8], index: 12, kind: input, shape index: {}]
  %s13 = inlined_call_operand.vmem [shape: f32[8,1], index: 13, kind: input, shape index: {}]
  %s14 = inlined_call_operand.vmem [shape: f32[9,8,8], index: 14, kind: input, shape index: {}]
  %s15 = inlined_call_operand.vmem [shape: f32[8,1], index: 15, kind: input, shape index: {}]
  %s16 = inlined_call_operand.vmem [shape: f32[64,576], index: 16, kind: input, shape index: {}]
  %s17 = inlined_call_operand.vmem [shape: f32[2,8,64], index: 17, kind: output, shape index: {}]
  %s18 = sld [smem:[#allocation0]]
  $region101: #{conv_attention_block.5} parent=0
    _
  %s20 = ssub.s32 1, %s18
  %s21 = scalar_select 0, %s20, %s18
  loop: start=0, step=1, limit=4
  $region2: #{conv_attention_block.5} parent=0 // loop_pre_header
    _
  $region3: #{conv_attention_block.5} parent=0 // loop_header
    %s23 = sphi 0, %s27
    %p24 = scmp.ge.s32.totalorder %s23, 4
    %s33 = sphi 0, %s35
    %s36 = sphi 0, %s33
    %s37 = sphi 0, %s36
    %s53 = sphi 0, %s37
    %s59 = sphi 0, %s61
    %s62 = sphi 0, %s59
    %s63 = sphi 0, %s62
    %s79 = sphi 0, %s63
    %s85 = sphi 0, %s87
    %s88 = sphi 0, %s85
    %s89 = sphi 0, %s88
    %s105 = sphi 0, %s89
    %s109 = sphi 0, %s109
    %s111 = sphi 0, %s109
    %s112 = sphi 0, %s111
    %s126 = sphi 0, %s112
    %s130 = sphi 0, %s130
    %s132 = sphi 0, %s130
    %s133 = sphi 0, %s132
    %s147 = sphi 0, %s133
    %s151 = sphi 0, %s151
    %s153 = sphi 0, %s151
    %s154 = sphi 0, %s153
    %s168 = sphi 0, %s154
    %s172 = sphi 0, %s172
    %s174 = sphi 0, %s172
    %s175 = sphi 0, %s174
    %s189 = sphi 0, %s175
    %s193 = sphi 0, %s193
    %s195 = sphi 0, %s193
    %s196 = sphi 0, %s195
    %s210 = sphi 0, %s196
    %s214 = sphi 0, %s214
    %s216 = sphi 0, %s214
    %s217 = sphi 0, %s216
    %s231 = sphi 0, %s217
    %s235 = sphi 0, %s235
    %s237 = sphi 0, %s235
    %s238 = sphi 0, %s237
    %s252 = sphi 0, %s238
    %s256 = sphi 0, %s256
    %s258 = sphi 0, %s256
    %s259 = sphi 0, %s258
    %s273 = sphi 0, %s259
    %s277 = sphi 0, %s277
    %s279 = sphi 0, %s277
    %s280 = sphi 0, %s279
    %s294 = sphi 0, %s280
    %s298 = sphi 0, %s298
    %s300 = sphi 0, %s298
    %s301 = sphi 0, %s300
    %s315 = sphi 0, %s301
    %s319 = sphi 0, %s319
    %s321 = sphi 0, %s319
    %s322 = sphi 0, %s321
    %s336 = sphi 0, %s322
    %s340 = sphi 0, %s340
    %s342 = sphi 0, %s340
    %s343 = sphi 0, %s342
    %s357 = sphi 0, %s343
    %s361 = sphi 0, %s361
    %s363 = sphi 0, %s361
    %s364 = sphi 0, %s363
    %s378 = sphi 0, %s364
    %s382 = sphi 0, %s382
    %s384 = sphi 0, %s382
    %s385 = sphi 0, %s384
    %s399 = sphi 0, %s385
    %s405 = sphi 0, %s407
    %s408 = sphi 0, %s405
    %s409 = sphi 0, %s408
    %s425 = sphi 0, %s409
  $region4: #{conv_attention_block.5} parent=0 // loop_header_branch
    %26 = sbr.rel (%p24) target = $region8
  $region5: #{conv_attention_block.5} parent=0 // loop_body
    %s28 = ssub.s32 %s23, 1
    %s29 = ssub.s32 %s23, 2
    %s30 = sadd.s32 %s23, 1
    %s31 = ssub.s32 %s23, %s30
    %p32 = scmp.eq.s32.totalorder %s31, 0
    %s34 = sadd.s32 %s33, 1
    %s35 = scalar_select %p32, %s33, %s34
    %p38 = pneg %p32
    %p39 = scmp.eq.s32.totalorder %s23, 1
    %p40 = por %p38, %p39
    %p41 = scmp.ne.s32.totalorder %s33, %s36
    %p42 = scmp.eq.s32.totalorder %s23, 0
    %p43 = por %p41, %p42
    %p44 = scmp.ne.s32.totalorder %s33, %s36
    %p45 = scmp.eq.s32.totalorder %s28, 1
    %p46 = por %p44, %p45
    %p47 = scmp.ne.s32.totalorder %s36, %s37
    %p48 = scmp.eq.s32.totalorder %s28, 0
    %p49 = por %p47, %p48
    %p50 = scmp.ne.s32.totalorder %s36, %s37
    %p51 = scmp.eq.s32.totalorder %s29, 1
    %p52 = por %p50, %p51
    %p54 = scmp.ne.s32.totalorder %s37, %s53
    %p55 = scmp.eq.s32.totalorder %s29, 0
    %p56 = por %p54, %p55
    %s57 = ssub.s32 %s23, %s30
    %p58 = scmp.eq.s32.totalorder %s57, 0
    %s60 = sadd.s32 %s59, 1
    %s61 = scalar_select %p58, %s59, %s60
    %p64 = pneg %p58
    %p65 = scmp.eq.s32.totalorder %s23, 1
    %p66 = por %p64, %p65
    %p67 = scmp.ne.s32.totalorder %s59, %s62
    %p68 = scmp.eq.s32.totalorder %s23, 0
    %p69 = por %p67, %p68
    %p70 = scmp.ne.s32.totalorder %s59, %s62
    %p71 = scmp.eq.s32.totalorder %s28, 1
    %p72 = por %p70, %p71
    %p73 = scmp.ne.s32.totalorder %s62, %s63
    %p74 = scmp.eq.s32.totalorder %s28, 0
    %p75 = por %p73, %p74
    %p76 = scmp.ne.s32.totalorder %s62, %s63
    %p77 = scmp.eq.s32.totalorder %s29, 1
    %p78 = por %p76, %p77
    %p80 = scmp.ne.s32.totalorder %s63, %s79
    %p81 = scmp.eq.s32.totalorder %s29, 0
    %p82 = por %p80, %p81
    %s83 = ssub.s32 %s23, %s30
    %p84 = scmp.eq.s32.totalorder %s83, 0
    %s86 = sadd.s32 %s85, 1
    %s87 = scalar_select %p84, %s85, %s86
    %p90 = pneg %p84
    %p91 = scmp.eq.s32.totalorder %s23, 1
    %p92 = por %p90, %p91
    %p93 = scmp.ne.s32.totalorder %s85, %s88
    %p94 = scmp.eq.s32.totalorder %s23, 0
    %p95 = por %p93, %p94
    %p96 = scmp.ne.s32.totalorder %s85, %s88
    %p97 = scmp.eq.s32.totalorder %s28, 1
    %p98 = por %p96, %p97
    %p99 = scmp.ne.s32.totalorder %s88, %s89
    %p100 = scmp.eq.s32.totalorder %s28, 0
    %p101 = por %p99, %p100
    %p102 = scmp.ne.s32.totalorder %s88, %s89
    %p103 = scmp.eq.s32.totalorder %s29, 1
    %p104 = por %p102, %p103
    %p106 = scmp.ne.s32.totalorder %s89, %s105
    %p107 = scmp.eq.s32.totalorder %s29, 0
    %p108 = por %p106, %p107
    %s110 = sadd.s32 %s109, 1
    %p113 = scmp.eq.s32.totalorder %s23, 1
    %p114 = scmp.ne.s32.totalorder %s109, %s111
    %p115 = scmp.eq.s32.totalorder %s23, 0
    %p116 = por %p114, %p115
    %p117 = scmp.ne.s32.totalorder %s109, %s111
    %p118 = scmp.eq.s32.totalorder %s28, 1
    %p119 = por %p117, %p118
    %p120 = scmp.ne.s32.totalorder %s111, %s112
    %p121 = scmp.eq.s32.totalorder %s28, 0
    %p122 = por %p120, %p121
    %p123 = scmp.ne.s32.totalorder %s111, %s112
    %p124 = scmp.eq.s32.totalorder %s29, 1
    %p125 = por %p123, %p124
    %p127 = scmp.ne.s32.totalorder %s112, %s126
    %p128 = scmp.eq.s32.totalorder %s29, 0
    %p129 = por %p127, %p128
    %s131 = sadd.s32 %s130, 1
    %p134 = scmp.eq.s32.totalorder %s23, 1
    %p135 = scmp.ne.s32.totalorder %s130, %s132
    %p136 = scmp.eq.s32.totalorder %s23, 0
    %p137 = por %p135, %p136
    %p138 = scmp.ne.s32.totalorder %s130, %s132
    %p139 = scmp.eq.s32.totalorder %s28, 1
    %p140 = por %p138, %p139
    %p141 = scmp.ne.s32.totalorder %s132, %s133
    %p142 = scmp.eq.s32.totalorder %s28, 0
    %p143 = por %p141, %p142
    %p144 = scmp.ne.s32.totalorder %s132, %s133
    %p145 = scmp.eq.s32.totalorder %s29, 1
    %p146 = por %p144, %p145
    %p148 = scmp.ne.s32.totalorder %s133, %s147
    %p149 = scmp.eq.s32.totalorder %s29, 0
    %p150 = por %p148, %p149
    %s152 = sadd.s32 %s151, 1
    %p155 = scmp.eq.s32.totalorder %s23, 1
    %p156 = scmp.ne.s32.totalorder %s151, %s153
    %p157 = scmp.eq.s32.totalorder %s23, 0
    %p158 = por %p156, %p157
    %p159 = scmp.ne.s32.totalorder %s151, %s153
    %p160 = scmp.eq.s32.totalorder %s28, 1
    %p161 = por %p159, %p160
    %p162 = scmp.ne.s32.totalorder %s153, %s154
    %p163 = scmp.eq.s32.totalorder %s28, 0
    %p164 = por %p162, %p163
    %p165 = scmp.ne.s32.totalorder %s153, %s154
    %p166 = scmp.eq.s32.totalorder %s29, 1
    %p167 = por %p165, %p166
    %p169 = scmp.ne.s32.totalorder %s154, %s168
    %p170 = scmp.eq.s32.totalorder %s29, 0
    %p171 = por %p169, %p170
    %s173 = sadd.s32 %s172, 1
    %p176 = scmp.eq.s32.totalorder %s23, 1
    %p177 = scmp.ne.s32.totalorder %s172, %s174
    %p178 = scmp.eq.s32.totalorder %s23, 0
    %p179 = por %p177, %p178
    %p180 = scmp.ne.s32.totalorder %s172, %s174
    %p181 = scmp.eq.s32.totalorder %s28, 1
    %p182 = por %p180, %p181
    %p183 = scmp.ne.s32.totalorder %s174, %s175
    %p184 = scmp.eq.s32.totalorder %s28, 0
    %p185 = por %p183, %p184
    %p186 = scmp.ne.s32.totalorder %s174, %s175
    %p187 = scmp.eq.s32.totalorder %s29, 1
    %p188 = por %p186, %p187
    %p190 = scmp.ne.s32.totalorder %s175, %s189
    %p191 = scmp.eq.s32.totalorder %s29, 0
    %p192 = por %p190, %p191
    %s194 = sadd.s32 %s193, 1
    %p197 = scmp.eq.s32.totalorder %s23, 1
    %p198 = scmp.ne.s32.totalorder %s193, %s195
    %p199 = scmp.eq.s32.totalorder %s23, 0
    %p200 = por %p198, %p199
    %p201 = scmp.ne.s32.totalorder %s193, %s195
    %p202 = scmp.eq.s32.totalorder %s28, 1
    %p203 = por %p201, %p202
    %p204 = scmp.ne.s32.totalorder %s195, %s196
    %p205 = scmp.eq.s32.totalorder %s28, 0
    %p206 = por %p204, %p205
    %p207 = scmp.ne.s32.totalorder %s195, %s196
    %p208 = scmp.eq.s32.totalorder %s29, 1
    %p209 = por %p207, %p208
    %p211 = scmp.ne.s32.totalorder %s196, %s210
    %p212 = scmp.eq.s32.totalorder %s29, 0
    %p213 = por %p211, %p212
    %s215 = sadd.s32 %s214, 1
    %p218 = scmp.eq.s32.totalorder %s23, 1
    %p219 = scmp.ne.s32.totalorder %s214, %s216
    %p220 = scmp.eq.s32.totalorder %s23, 0
    %p221 = por %p219, %p220
    %p222 = scmp.ne.s32.totalorder %s214, %s216
    %p223 = scmp.eq.s32.totalorder %s28, 1
    %p224 = por %p222, %p223
    %p225 = scmp.ne.s32.totalorder %s216, %s217
    %p226 = scmp.eq.s32.totalorder %s28, 0
    %p227 = por %p225, %p226
    %p228 = scmp.ne.s32.totalorder %s216, %s217
    %p229 = scmp.eq.s32.totalorder %s29, 1
    %p230 = por %p228, %p229
    %p232 = scmp.ne.s32.totalorder %s217, %s231
    %p233 = scmp.eq.s32.totalorder %s29, 0
    %p234 = por %p232, %p233
    %s236 = sadd.s32 %s235, 1
    %p239 = scmp.eq.s32.totalorder %s23, 1
    %p240 = scmp.ne.s32.totalorder %s235, %s237
    %p241 = scmp.eq.s32.totalorder %s23, 0
    %p242 = por %p240, %p241
    %p243 = scmp.ne.s32.totalorder %s235, %s237
    %p244 = scmp.eq.s32.totalorder %s28, 1
    %p245 = por %p243, %p244
    %p246 = scmp.ne.s32.totalorder %s237, %s238
    %p247 = scmp.eq.s32.totalorder %s28, 0
    %p248 = por %p246, %p247
    %p249 = scmp.ne.s32.totalorder %s237, %s238
    %p250 = scmp.eq.s32.totalorder %s29, 1
    %p251 = por %p249, %p250
    %p253 = scmp.ne.s32.totalorder %s238, %s252
    %p254 = scmp.eq.s32.totalorder %s29, 0
    %p255 = por %p253, %p254
    %s257 = sadd.s32 %s256, 1
    %p260 = scmp.eq.s32.totalorder %s23, 1
    %p261 = scmp.ne.s32.totalorder %s256, %s258
    %p262 = scmp.eq.s32.totalorder %s23, 0
    %p263 = por %p261, %p262
    %p264 = scmp.ne.s32.totalorder %s256, %s258
    %p265 = scmp.eq.s32.totalorder %s28, 1
    %p266 = por %p264, %p265
    %p267 = scmp.ne.s32.totalorder %s258, %s259
    %p268 = scmp.eq.s32.totalorder %s28, 0
    %p269 = por %p267, %p268
    %p270 = scmp.ne.s32.totalorder %s258, %s259
    %p271 = scmp.eq.s32.totalorder %s29, 1
    %p272 = por %p270, %p271
    %p274 = scmp.ne.s32.totalorder %s259, %s273
    %p275 = scmp.eq.s32.totalorder %s29, 0
    %p276 = por %p274, %p275
    %s278 = sadd.s32 %s277, 1
    %p281 = scmp.eq.s32.totalorder %s23, 1
    %p282 = scmp.ne.s32.totalorder %s277, %s279
    %p283 = scmp.eq.s32.totalorder %s23, 0
    %p284 = por %p282, %p283
    %p285 = scmp.ne.s32.totalorder %s277, %s279
    %p286 = scmp.eq.s32.totalorder %s28, 1
    %p287 = por %p285, %p286
    %p288 = scmp.ne.s32.totalorder %s279, %s280
    %p289 = scmp.eq.s32.totalorder %s28, 0
    %p290 = por %p288, %p289
    %p291 = scmp.ne.s32.totalorder %s279, %s280
    %p292 = scmp.eq.s32.totalorder %s29, 1
    %p293 = por %p291, %p292
    %p295 = scmp.ne.s32.totalorder %s280, %s294
    %p296 = scmp.eq.s32.totalorder %s29, 0
    %p297 = por %p295, %p296
    %s299 = sadd.s32 %s298, 1
    %p302 = scmp.eq.s32.totalorder %s23, 1
    %p303 = scmp.ne.s32.totalorder %s298, %s300
    %p304 = scmp.eq.s32.totalorder %s23, 0
    %p305 = por %p303, %p304
    %p306 = scmp.ne.s32.totalorder %s298, %s300
    %p307 = scmp.eq.s32.totalorder %s28, 1
    %p308 = por %p306, %p307
    %p309 = scmp.ne.s32.totalorder %s300, %s301
    %p310 = scmp.eq.s32.totalorder %s28, 0
    %p311 = por %p309, %p310
    %p312 = scmp.ne.s32.totalorder %s300, %s301
    %p313 = scmp.eq.s32.totalorder %s29, 1
    %p314 = por %p312, %p313
    %p316 = scmp.ne.s32.totalorder %s301, %s315
    %p317 = scmp.eq.s32.totalorder %s29, 0
    %p318 = por %p316, %p317
    %s320 = sadd.s32 %s319, 1
    %p323 = scmp.eq.s32.totalorder %s23, 1
    %p324 = scmp.ne.s32.totalorder %s319, %s321
    %p325 = scmp.eq.s32.totalorder %s23, 0
    %p326 = por %p324, %p325
    %p327 = scmp.ne.s32.totalorder %s319, %s321
    %p328 = scmp.eq.s32.totalorder %s28, 1
    %p329 = por %p327, %p328
    %p330 = scmp.ne.s32.totalorder %s321, %s322
    %p331 = scmp.eq.s32.totalorder %s28, 0
    %p332 = por %p330, %p331
    %p333 = scmp.ne.s32.totalorder %s321, %s322
    %p334 = scmp.eq.s32.totalorder %s29, 1
    %p335 = por %p333, %p334
    %p337 = scmp.ne.s32.totalorder %s322, %s336
    %p338 = scmp.eq.s32.totalorder %s29, 0
    %p339 = por %p337, %p338
    %s341 = sadd.s32 %s340, 1
    %p344 = scmp.eq.s32.totalorder %s23, 1
    %p345 = scmp.ne.s32.totalorder %s340, %s342
    %p346 = scmp.eq.s32.totalorder %s23, 0
    %p347 = por %p345, %p346
    %p348 = scmp.ne.s32.totalorder %s340, %s342
    %p349 = scmp.eq.s32.totalorder %s28, 1
    %p350 = por %p348, %p349
    %p351 = scmp.ne.s32.totalorder %s342, %s343
    %p352 = scmp.eq.s32.totalorder %s28, 0
    %p353 = por %p351, %p352
    %p354 = scmp.ne.s32.totalorder %s342, %s343
    %p355 = scmp.eq.s32.totalorder %s29, 1
    %p356 = por %p354, %p355
    %p358 = scmp.ne.s32.totalorder %s343, %s357
    %p359 = scmp.eq.s32.totalorder %s29, 0
    %p360 = por %p358, %p359
    %s362 = sadd.s32 %s361, 1
    %p365 = scmp.eq.s32.totalorder %s23, 1
    %p366 = scmp.ne.s32.totalorder %s361, %s363
    %p367 = scmp.eq.s32.totalorder %s23, 0
    %p368 = por %p366, %p367
    %p369 = scmp.ne.s32.totalorder %s361, %s363
    %p370 = scmp.eq.s32.totalorder %s28, 1
    %p371 = por %p369, %p370
    %p372 = scmp.ne.s32.totalorder %s363, %s364
    %p373 = scmp.eq.s32.totalorder %s28, 0
    %p374 = por %p372, %p373
    %p375 = scmp.ne.s32.totalorder %s363, %s364
    %p376 = scmp.eq.s32.totalorder %s29, 1
    %p377 = por %p375, %p376
    %p379 = scmp.ne.s32.totalorder %s364, %s378
    %p380 = scmp.eq.s32.totalorder %s29, 0
    %p381 = por %p379, %p380
    %s383 = sadd.s32 %s382, 1
    %p386 = scmp.eq.s32.totalorder %s23, 1
    %p387 = scmp.ne.s32.totalorder %s382, %s384
    %p388 = scmp.eq.s32.totalorder %s23, 0
    %p389 = por %p387, %p388
    %p390 = scmp.ne.s32.totalorder %s382, %s384
    %p391 = scmp.eq.s32.totalorder %s28, 1
    %p392 = por %p390, %p391
    %p393 = scmp.ne.s32.totalorder %s384, %s385
    %p394 = scmp.eq.s32.totalorder %s28, 0
    %p395 = por %p393, %p394
    %p396 = scmp.ne.s32.totalorder %s384, %s385
    %p397 = scmp.eq.s32.totalorder %s29, 1
    %p398 = por %p396, %p397
    %p400 = scmp.ne.s32.totalorder %s385, %s399
    %p401 = scmp.eq.s32.totalorder %s29, 0
    %p402 = por %p400, %p401
    %s403 = ssub.s32 %s23, %s30
    %p404 = scmp.eq.s32.totalorder %s403, 0
    %s406 = sadd.s32 %s405, 1
    %s407 = scalar_select %p404, %s405, %s406
    %p410 = pneg %p404
    %p411 = scmp.eq.s32.totalorder %s23, 1
    %p412 = por %p410, %p411
    %p413 = scmp.ne.s32.totalorder %s405, %s408
    %p414 = scmp.eq.s32.totalorder %s23, 0
    %p415 = por %p413, %p414
    %p416 = scmp.ne.s32.totalorder %s405, %s408
    %p417 = scmp.eq.s32.totalorder %s28, 1
    %p418 = por %p416, %p417
    %p419 = scmp.ne.s32.totalorder %s408, %s409
    %p420 = scmp.eq.s32.totalorder %s28, 0
    %p421 = por %p419, %p420
    %p422 = scmp.ne.s32.totalorder %s408, %s409
    %p423 = scmp.eq.s32.totalorder %s29, 1
    %p424 = por %p422, %p423
    %p426 = scmp.ne.s32.totalorder %s409, %s425
    %p427 = scmp.eq.s32.totalorder %s29, 0
    %p428 = por %p426, %p427
    %p429 = scmp.le.s32.totalorder 1, %s23
    %p430 = scmp.lt.s32.totalorder %s23, 3
    %p431 = pnand %p429, %p430
    %p432 = pneg %p431
    // Predicated region
    $region9: #{conv_attention_block.5} parent=5 // pred_check
      _
    $region10: #{conv_attention_block.5} parent=5 // pred_check_branch
      %434 = sbr.rel (%p431) target = $region12
    $region11: #{conv_attention_block.5} parent=5 // pred_region
      %s435 = ssub.s32 %s23, 1
      // Predicated region
      $region13: #{conv_attention_block.5} parent=11 // pred_check
        %p436 = pneg %p122
      $region14: #{conv_attention_block.5} parent=11 // pred_check_branch
        %438 = sbr.rel (%p436) target = $region16
      $region15: #{conv_attention_block.5} parent=11 // pred_region
        _
      $region16: #{conv_attention_block.5} parent=11 // pred_fallthru
        _
      // Predicated region
      $region17: #{conv_attention_block.5} parent=11 // pred_check
        %p439 = pneg %p143
      $region18: #{conv_attention_block.5} parent=11 // pred_check_branch
        %441 = sbr.rel (%p439) target = $region20
      $region19: #{conv_attention_block.5} parent=11 // pred_region
        _
      $region20: #{conv_attention_block.5} parent=11 // pred_fallthru
        _
      // Predicated region
      $region21: #{conv_attention_block.5} parent=11 // pred_check
        %p442 = pneg %p164
      $region22: #{conv_attention_block.5} parent=11 // pred_check_branch
        %444 = sbr.rel (%p442) target = $region24
      $region23: #{conv_attention_block.5} parent=11 // pred_region
        _
      $region24: #{conv_attention_block.5} parent=11 // pred_fallthru
        _
      // Predicated region
      $region25: #{conv_attention_block.5} parent=11 // pred_check
        %p445 = pneg %p185
      $region26: #{conv_attention_block.5} parent=11 // pred_check_branch
        %447 = sbr.rel (%p445) target = $region28
      $region27: #{conv_attention_block.5} parent=11 // pred_region
        _
      $region28: #{conv_attention_block.5} parent=11 // pred_fallthru
        _
      // Predicated region
      $region29: #{conv_attention_block.5} parent=11 // pred_check
        %p448 = pneg %p206
      $region30: #{conv_attention_block.5} parent=11 // pred_check_branch
        %450 = sbr.rel (%p448) target = $region32
      $region31: #{conv_attention_block.5} parent=11 // pred_region
        _
      $region32: #{conv_attention_block.5} parent=11 // pred_fallthru
        _
      // Predicated region
      $region33: #{conv_attention_block.5} parent=11 // pred_check
        %p451 = pneg %p227
      $region34: #{conv_attention_block.5} parent=11 // pred_check_branch
        %453 = sbr.rel (%p451) target = $region36
      $region35: #{conv_attention_block.5} parent=11 // pred_region
        _
      $region36: #{conv_attention_block.5} parent=11 // pred_fallthru
        _
      // Predicated region
      $region37: #{conv_attention_block.5} parent=11 // pred_check
        %p454 = pneg %p248
      $region38: #{conv_attention_block.5} parent=11 // pred_check_branch
        %456 = sbr.rel (%p454) target = $region40
      $region39: #{conv_attention_block.5} parent=11 // pred_region
        _
      $region40: #{conv_attention_block.5} parent=11 // pred_fallthru
        _
      // Predicated region
      $region41: #{conv_attention_block.5} parent=11 // pred_check
        %p457 = pneg %p269
      $region42: #{conv_attention_block.5} parent=11 // pred_check_branch
        %459 = sbr.rel (%p457) target = $region44
      $region43: #{conv_attention_block.5} parent=11 // pred_region
        _
      $region44: #{conv_attention_block.5} parent=11 // pred_fallthru
        _
      // Predicated region
      $region45: #{conv_attention_block.5} parent=11 // pred_check
        %p460 = pneg %p290
      $region46: #{conv_attention_block.5} parent=11 // pred_check_branch
        %462 = sbr.rel (%p460) target = $region48
      $region47: #{conv_attention_block.5} parent=11 // pred_region
        _
      $region48: #{conv_attention_block.5} parent=11 // pred_fallthru
        _
      // Predicated region
      $region49: #{conv_attention_block.5} parent=11 // pred_check
        %p463 = pneg %p311
      $region50: #{conv_attention_block.5} parent=11 // pred_check_branch
        %465 = sbr.rel (%p463) target = $region52
      $region51: #{conv_attention_block.5} parent=11 // pred_region
        _
      $region52: #{conv_attention_block.5} parent=11 // pred_fallthru
        _
      // Predicated region
      $region53: #{conv_attention_block.5} parent=11 // pred_check
        %p466 = pneg %p332
      $region54: #{conv_attention_block.5} parent=11 // pred_check_branch
        %468 = sbr.rel (%p466) target = $region56
      $region55: #{conv_attention_block.5} parent=11 // pred_region
        _
      $region56: #{conv_attention_block.5} parent=11 // pred_fallthru
        _
      // Predicated region
      $region57: #{conv_attention_block.5} parent=11 // pred_check
        %p469 = pneg %p353
      $region58: #{conv_attention_block.5} parent=11 // pred_check_branch
        %471 = sbr.rel (%p469) target = $region60
      $region59: #{conv_attention_block.5} parent=11 // pred_region
        _
      $region60: #{conv_attention_block.5} parent=11 // pred_fallthru
        _
      // Predicated region
      $region61: #{conv_attention_block.5} parent=11 // pred_check
        %p472 = pneg %p374
      $region62: #{conv_attention_block.5} parent=11 // pred_check_branch
        %474 = sbr.rel (%p472) target = $region64
      $region63: #{conv_attention_block.5} parent=11 // pred_region
        _
      $region64: #{conv_attention_block.5} parent=11 // pred_fallthru
        _
      // Predicated region
      $region65: #{conv_attention_block.5} parent=11 // pred_check
        %p475 = pneg %p395
      $region66: #{conv_attention_block.5} parent=11 // pred_check_branch
        %477 = sbr.rel (%p475) target = $region68
      $region67: #{conv_attention_block.5} parent=11 // pred_region
        _
      $region68: #{conv_attention_block.5} parent=11 // pred_fallthru
        _
    $region12: #{conv_attention_block.5} parent=5 // pred_fallthru
      _
    %p478 = scmp.lt.s32.totalorder %s23, 2
    // Predicated region
    $region69: #{conv_attention_block.5} parent=5 // pred_check
      %p479 = pneg %p478
    $region70: #{conv_attention_block.5} parent=5 // pred_check_branch
      %481 = sbr.rel (%p479) target = $region72
    $region71: #{conv_attention_block.5} parent=5 // pred_region
      // Predicated region
      $region73: #{conv_attention_block.5} parent=71 // pred_check
        %p482 = pneg %p43
      $region74: #{conv_attention_block.5} parent=71 // pred_check_branch
        %484 = sbr.rel (%p482) target = $region76
      $region75: #{conv_attention_block.5} parent=71 // pred_region
        %p485 = scmp.lt.s32.totalorder %s23, 1
        %s486 = scalar_select %p485, %s23, 1
        %s487 = smul.addr %s486, 8
        %s488 = scalar_lea.vmem %s0, %s487
      $region76: #{conv_attention_block.5} parent=71 // pred_fallthru
        _
      // Predicated region
      $region77: #{conv_attention_block.5} parent=71 // pred_check
        %p489 = pneg %p69
      $region78: #{conv_attention_block.5} parent=71 // pred_check_branch
        %491 = sbr.rel (%p489) target = $region80
      $region79: #{conv_attention_block.5} parent=71 // pred_region
        %p492 = scmp.lt.s32.totalorder %s23, 1
        %s493 = scalar_select %p492, %s23, 1
        %s494 = smul.addr %s493, 8
        %s495 = scalar_lea.vmem %s1, %s494
      $region80: #{conv_attention_block.5} parent=71 // pred_fallthru
        _
      // Predicated region
      $region81: #{conv_attention_block.5} parent=71 // pred_check
        %p496 = pneg %p95
      $region82: #{conv_attention_block.5} parent=71 // pred_check_branch
        %498 = sbr.rel (%p496) target = $region84
      $region83: #{conv_attention_block.5} parent=71 // pred_region
        %p499 = scmp.lt.s32.totalorder %s23, 1
        %s500 = scalar_select %p499, %s23, 1
        %s501 = smul.addr %s500, 8
        %s502 = scalar_lea.vmem %s2, %s501
      $region84: #{conv_attention_block.5} parent=71 // pred_fallthru
        _
    $region72: #{conv_attention_block.5} parent=5 // pred_fallthru
      _
    %p503 = scmp.le.s32.totalorder 1, %s23
    %p504 = scmp.lt.s32.totalorder %s23, 3
    %p505 = pnand %p503, %p504
    %p506 = pneg %p505
    // Predicated region
    $region85: #{conv_attention_block.5} parent=5 // pred_check
      _
    $region86: #{conv_attention_block.5} parent=5 // pred_check_branch
      %508 = sbr.rel (%p505) target = $region88
    $region87: #{conv_attention_block.5} parent=5 // pred_region
      %s509 = ssub.s32 %s23, 1
      %p510 = scmp.lt.s32.totalorder %s28, 1
      %s511 = scalar_select %p510, %s28, 1
      %s512 = smul.addr %s511, 8
      %s513 = scalar_lea.vmem %s0, %s512
      %p514 = pneg %p49
      %p515 = pneg %p46
      %p516 = scmp.lt.s32.totalorder %s28, 1
      %s517 = scalar_select %p516, %s28, 1
      %s518 = smul.addr %s517, 8
      %s519 = scalar_lea.vmem %s1, %s518
      %p520 = pneg %p75
      %p521 = pneg %p72
      %p522 = scmp.lt.s32.totalorder %s28, 1
      %s523 = scalar_select %p522, %s28, 1
      %s524 = smul.addr %s523, 8
      %s525 = scalar_lea.vmem %s2, %s524
      %p526 = pneg %p101
      %p527 = pneg %p98
      %p528 = pneg %p122
      %p529 = pneg %p119
      %p530 = pneg %p143
      %p531 = pneg %p140
      %p532 = pneg %p164
      %p533 = pneg %p161
      %p534 = pneg %p185
      %p535 = pneg %p182
      %p536 = pneg %p206
      %p537 = pneg %p203
      %p538 = pneg %p227
      %p539 = pneg %p224
      %p540 = pneg %p248
      %p541 = pneg %p245
      %p542 = pneg %p269
      %p543 = pneg %p266
      %p544 = pneg %p290
      %p545 = pneg %p287
      %p546 = pneg %p311
      %p547 = pneg %p308
      %p548 = pneg %p332
      %p549 = pneg %p329
      %p550 = pneg %p353
      %p551 = pneg %p350
      %p552 = pneg %p374
      %p553 = pneg %p371
      %p554 = pneg %p395
      %p555 = pneg %p392
      %p556 = pneg %p421
      %p557 = pneg %p418
      %p558 = scmp.lt.s32.totalorder %s28, 1
      %s559 = scalar_select %p558, %s28, 1
      %s560 = smul.addr %s559, 8
      %s561 = scalar_lea.vmem %s17, %s560
      %p562 = scmp.lt.s32.totalorder %s28, 1
      %s563 = scalar_select %p562, %s28, 1
      %s564 = smul.addr %s563, 8
      %s565 = scalar_lea.vmem %s0, %s564
      %p566 = scmp.lt.s32.totalorder %s28, 1
      %s567 = scalar_select %p566, %s28, 1
      %s568 = smul.addr %s567, 8
      %s569 = scalar_lea.vmem %s1, %s568
      %p570 = scmp.lt.s32.totalorder %s28, 1
      %s571 = scalar_select %p570, %s28, 1
      %s572 = smul.addr %s571, 8
      %s573 = scalar_lea.vmem %s2, %s572
      %p574 = scmp.lt.s32.totalorder %s28, 1
      %s575 = scalar_select %p574, %s28, 1
      %s576 = smul.addr %s575, 8
      %s577 = scalar_lea.vmem %s17, %s576
      %v578 = vld [vmem:[%s565] sm:$0xff]
      %v579 = vld [vmem:[%s569] sm:$0xff]
      %v580 = vld [vmem:[%s573] sm:$0xff]
      %v581 = vld [vmem:[%s3] sm:$0xff]
      %v582 = vld [vmem:[%s3 + $0x8] sm:$0xff]
      %v583 = vld [vmem:[%s3 + $0x10] sm:$0xff]
      %v584 = vld [vmem:[%s3 + $0x18] sm:$0xff]
      %v585 = vld [vmem:[%s3 + $0x20] sm:$0xff]
      %v586 = vld [vmem:[%s3 + $0x28] sm:$0xff]
      %v587 = vld [vmem:[%s3 + $0x30] sm:$0xff]
      %v588 = vld [vmem:[%s3 + $0x38] sm:$0xff]
      %vm589 = vcmask 523264
      %v591 = vsel %vm589, %v579, 0
      %593 = vmatpush.msra.mxu0 0.0
      %594 = vmatpush.msra.mxu0 0.0
      %595 = vmatpush.msra.mxu0 0.0
      %596 = vmatpush.msra.mxu0 0.0
      %597 = vmatpush.msra.mxu0 0.0
      %598 = vmatpush.msra.mxu0 0.0
      %599 = vmatpush.msra.mxu0 0.0
      %600 = vmatpush.msra.mxu0 0.0
      %601 = vmatpush.msra.mxu0 %v588
      %602 = vmatpush.msra.mxu0 %v587
      %603 = vmatpush.msra.mxu0 %v586
      %604 = vmatpush.msra.mxu0 %v585
      %605 = vmatpush.msra.mxu0 %v584
      %606 = vmatpush.msra.mxu0 %v583
      %607 = vmatpush.msra.mxu0 %v582
      %608 = vmatpush.msra.mxu0 %v581
      %609 = vmatmul.f32.gmra.mxu0 %v591
      %v610 = vpop.f32.mrf.mxu0
      %v611 = vadd.f32 0.0, %v610
      %612 = vdwg.mxu0
      %v613 = vadd.f32 %v578, %v611
      %v614 = vld [vmem:[%s4] sm:$0x1]
      %v616 = vperm.slane %v614, 0
      %v618 = vadd.f32 %v613, %v616
      %v619 = vld [vmem:[%s5] sm:$0x1]
      %v620 = vld [vmem:[%s6] sm:$0x1]
      %v621 = vsel %vm589, %v618, 0.0
      %622 = vadd.xlane.f32.xlu0 %v621
      %v623 = vpop.xlane.xlu0 %622
      %v624 = vrcp.pop 64.0
      %v625 = vmul.f32 64.0, %v624
      %v626 = vsub.f32 1.0, %v625
      %v627 = vmul.f32 %v624, %v626
      %v628 = vadd.f32 %v624, %v627
      %vm629 = vweird.f32 %v624
      %v630 = vsel %vm629, %v624, %v628
      %v631 = vmul.f32 %v623, %v630
      %v632 = vsub.f32 %v618, %v631
      %v633 = vmul.f32 %v632, %v632
      %v634 = vsel %vm589, %v633, 0.0
      %635 = vadd.xlane.f32.xlu0 %v634
      %v636 = vpop.xlane.xlu0 %635
      %v637 = vmul.f32 %v636, %v630
      %v638 = vadd.f32 %v637, 1e-05
      %v639 = vrsqrt.pop %v638
      %v640 = vmul.f32 %v639, %v638
      %v641 = vmul.f32 %v640, %v639
      %v642 = vmul.f32 0.5, %v641
      %v643 = vsub.f32 1.5, %v642
      %v644 = vmul.f32 %v639, %v643
      %vm645 = vweird.f32 %v638
      %vm646 = vweird.f32 %v639
      %vm647 = vmor %vm645, %vm646
      %v648 = vsel %vm647, %v639, %v644
      %v649 = vmul.f32 %v632, %v648
      %v651 = vperm.slane %v619, 0
      %v653 = vmul.f32 %v649, %v651
      %v655 = vperm.slane %v620, 0
      %v657 = vadd.f32 %v653, %v655
      %v658 = vld [vmem:[%s7] sm:$0xff]
      %v659 = vld [vmem:[%s7 + $0x8] sm:$0xff]
      %v660 = vld [vmem:[%s7 + $0x10] sm:$0xff]
      %v661 = vld [vmem:[%s7 + $0x18] sm:$0xff]
      %v662 = vld [vmem:[%s7 + $0x20] sm:$0xff]
      %v663 = vld [vmem:[%s7 + $0x28] sm:$0xff]
      %v664 = vld [vmem:[%s7 + $0x30] sm:$0xff]
      %v665 = vld [vmem:[%s7 + $0x38] sm:$0xff]
      %v666 = vld [vmem:[%s7 + $0x40] sm:$0xff]
      %v667 = vld [vmem:[%s7 + $0x48] sm:$0xff]
      %v668 = vld [vmem:[%s7 + $0x50] sm:$0xff]
      %v669 = vld [vmem:[%s7 + $0x58] sm:$0xff]
      %v670 = vld [vmem:[%s7 + $0x60] sm:$0xff]
      %v671 = vld [vmem:[%s7 + $0x68] sm:$0xff]
      %v672 = vld [vmem:[%s7 + $0x70] sm:$0xff]
      %v673 = vld [vmem:[%s7 + $0x78] sm:$0xff]
      %v674 = vld [vmem:[%s8] sm:$0x3]
      %v676 = vperm.slane %v674, 0
      %v677 = vperm.slane %v674, 1
      %v681 = vsel %vm589, %v657, 0
      %683 = vmatpush.msra.mxu0 0.0
      %684 = vmatpush.msra.mxu0 0.0
      %685 = vmatpush.msra.mxu0 0.0
      %686 = vmatpush.msra.mxu0 0.0
      %687 = vmatpush.msra.mxu0 0.0
      %688 = vmatpush.msra.mxu0 0.0
      %689 = vmatpush.msra.mxu0 0.0
      %690 = vmatpush.msra.mxu0 0.0
      %691 = vmatpush.msra.mxu0 %v672
      %692 = vmatpush.msra.mxu0 %v670
      %693 = vmatpush.msra.mxu0 %v668
      %694 = vmatpush.msra.mxu0 %v666
      %695 = vmatpush.msra.mxu0 %v664
      %696 = vmatpush.msra.mxu0 %v662
      %697 = vmatpush.msra.mxu0 %v660
      %698 = vmatpush.msra.mxu0 %v658
      %699 = vmatmul.f32.gmra.mxu0 %v681
      %v700 = vpop.f32.mrf.mxu0
      %v701 = vadd.f32 %v676, %v700
      %702 = vdwg.mxu0
      %703 = vmatpush.msra.mxu0 0.0
      %704 = vmatpush.msra.mxu0 0.0
      %705 = vmatpush.msra.mxu0 0.0
      %706 = vmatpush.msra.mxu0 0.0
      %707 = vmatpush.msra.mxu0 0.0
      %708 = vmatpush.msra.mxu0 0.0
      %709 = vmatpush.msra.mxu0 0.0
      %710 = vmatpush.msra.mxu0 0.0
      %711 = vmatpush.msra.mxu0 %v673
      %712 = vmatpush.msra.mxu0 %v671
      %713 = vmatpush.msra.mxu0 %v669
      %714 = vmatpush.msra.mxu0 %v667
      %715 = vmatpush.msra.mxu0 %v665
      %716 = vmatpush.msra.mxu0 %v663
      %717 = vmatpush.msra.mxu0 %v661
      %718 = vmatpush.msra.mxu0 %v659
      %719 = vmatmul.f32.gmra.mxu0 %v681
      %v720 = vpop.f32.mrf.mxu0
      %v721 = vadd.f32 %v677, %v720
      %722 = vdwg.mxu0
      %v723 = vmul.f32 %v701, 0.70710677
      %v724 = vmul.f32 %v721, 0.70710677
      %v725 = vand.u32 2147483647, %v723
      %v726 = vand.u32 2147483647, %v724
      %v727 = vmul.f32 %v725, 0.3275911
      %v728 = vmul.f32 %v726, 0.3275911
      %v729 = vadd.f32 %v727, 1.0
      %v730 = vadd.f32 %v728, 1.0
      %v731 = vrcp.pop %v729
      %v732 = vmul.f32 %v729, %v731
      %v733 = vsub.f32 1.0, %v732
      %v734 = vmul.f32 %v731, %v733
      %v735 = vadd.f32 %v731, %v734
      %vm736 = vweird.f32 %v729
      %vm737 = vweird.f32 %v731
      %vm738 = vmor %vm736, %vm737
      %v739 = vsel %vm738, %v731, %v735
      %v740 = vand.u32 2147483647, %v729
      %vm741 = vcmp.eq.f32.partialorder %v740, 8.507059e+37
      %v742 = vand.u32 %v729, 2147483648
      %v743 = vor.u32 1.1754944e-38, %v742
      %v744 = vsel %vm741, %v743, %v739
      %v745 = vmul.f32 1.0, %v744
      %v746 = vrcp.pop %v730
      %v747 = vmul.f32 %v730, %v746
      %v748 = vsub.f32 1.0, %v747
      %v749 = vmul.f32 %v746, %v748
      %v750 = vadd.f32 %v746, %v749
      %vm751 = vweird.f32 %v730
      %vm752 = vweird.f32 %v746
      %vm753 = vmor %vm751, %vm752
      %v754 = vsel %vm753, %v746, %v750
      %v755 = vand.u32 2147483647, %v730
      %vm756 = vcmp.eq.f32.partialorder %v755, 8.507059e+37
      %v757 = vand.u32 %v730, 2147483648
      %v758 = vor.u32 1.1754944e-38, %v757
      %v759 = vsel %vm756, %v758, %v754
      %v760 = vmul.f32 1.0, %v759
      %v761 = vmul.f32 %v745, 1.0614054
      %v762 = vmul.f32 %v760, 1.0614054
      %v763 = vadd.f32 %v761, -1.4531521
      %v764 = vadd.f32 %v762, -1.4531521
      %v765 = vmul.f32 %v745, %v763
      %v766 = vmul.f32 %v760, %v764
      %v767 = vadd.f32 %v765, 1.4214138
      %v768 = vadd.f32 %v766, 1.4214138
      %v769 = vmul.f32 %v745, %v767
      %v770 = vmul.f32 %v760, %v768
      %v771 = vadd.f32 %v769, -0.28449672
      %v772 = vadd.f32 %v770, -0.28449672
      %v773 = vmul.f32 %v745, %v771
      %v774 = vmul.f32 %v760, %v772
      %v775 = vadd.f32 %v773, 0.2548296
      %v776 = vadd.f32 %v774, 0.2548296
      %v777 = vmul.f32 %v745, %v775
      %v778 = vmul.f32 %v760, %v776
      %v779 = vsub.f32 0.0, %v725
      %v780 = vsub.f32 0.0, %v726
      %v781 = vmul.f32 %v779, %v725
      %v782 = vmul.f32 %v780, %v726
      %v783 = vmul.f32 %v781, 1.442695
      %v784 = vpow.pop %v783
      %v785 = vmul.f32 %v782, 1.442695
      %v786 = vpow.pop %v785
      %v787 = vmul.f32 %v777, %v784
      %v788 = vmul.f32 %v778, %v786
      %v789 = vsub.f32 1.0, %v787
      %v790 = vsub.f32 1.0, %v788
      %vm791 = vcmp.ge.f32.partialorder %v723, 0.0
      %vm792 = vcmp.ge.f32.partialorder %v724, 0.0
      %v793 = vsub.f32 0.0, %v789
      %v794 = vsub.f32 0.0, %v790
      %v795 = vsel %vm791, %v789, %v793
      %v796 = vsel %vm792, %v790, %v794
      %v797 = vmul.f32 %v701, 0.5
      %v798 = vmul.f32 %v721, 0.5
      %v799 = vadd.f32 %v795, 1.0
      %v800 = vadd.f32 %v796, 1.0
      %v801 = vmul.f32 %v797, %v799
      %v802 = vmul.f32 %v798, %v800
      %v803 = vld [vmem:[%s9] sm:$0xff]
      %v804 = vld [vmem:[%s9 + $0x8] sm:$0xff]
      %v805 = vld [vmem:[%s9 + $0x10] sm:$0xff]
      %v806 = vld [vmem:[%s9 + $0x18] sm:$0xff]
      %v807 = vld [vmem:[%s9 + $0x20] sm:$0xff]
      %v808 = vld [vmem:[%s9 + $0x28] sm:$0xff]
      %v809 = vld [vmem:[%s9 + $0x30] sm:$0xff]
      %v810 = vld [vmem:[%s9 + $0x38] sm:$0xff]
      %v811 = vld [vmem:[%s9 + $0x40] sm:$0xff]
      %v812 = vld [vmem:[%s9 + $0x48] sm:$0xff]
      %v813 = vld [vmem:[%s9 + $0x50] sm:$0xff]
      %v814 = vld [vmem:[%s9 + $0x58] sm:$0xff]
      %v815 = vld [vmem:[%s9 + $0x60] sm:$0xff]
      %v816 = vld [vmem:[%s9 + $0x68] sm:$0xff]
      %v817 = vld [vmem:[%s9 + $0x70] sm:$0xff]
      %v818 = vld [vmem:[%s9 + $0x78] sm:$0xff]
      %v819 = vld [vmem:[%s9 + $0x80] sm:$0xff]
      %v820 = vld [vmem:[%s9 + $0x88] sm:$0xff]
      %v821 = vld [vmem:[%s9 + $0x90] sm:$0xff]
      %v822 = vld [vmem:[%s9 + $0x98] sm:$0xff]
      %v823 = vld [vmem:[%s9 + $0xa0] sm:$0xff]
      %v824 = vld [vmem:[%s9 + $0xa8] sm:$0xff]
      %v825 = vld [vmem:[%s9 + $0xb0] sm:$0xff]
      %v826 = vld [vmem:[%s9 + $0xb8] sm:$0xff]
      %v827 = vld [vmem:[%s9 + $0xc0] sm:$0xff]
      %v828 = vld [vmem:[%s9 + $0xc8] sm:$0xff]
      %v829 = vld [vmem:[%s9 + $0xd0] sm:$0xff]
      %v830 = vld [vmem:[%s9 + $0xd8] sm:$0xff]
      %v831 = vld [vmem:[%s9 + $0xe0] sm:$0xff]
      %v832 = vld [vmem:[%s9 + $0xe8] sm:$0xff]
      %v833 = vld [vmem:[%s9 + $0xf0] sm:$0xff]
      %v834 = vld [vmem:[%s9 + $0xf8] sm:$0xff]
      %835 = vmatpush.msra.mxu0 %v818
      %836 = vmatpush.msra.mxu0 %v817
      %837 = vmatpush.msra.mxu0 %v816
      %838 = vmatpush.msra.mxu0 %v815
      %839 = vmatpush.msra.mxu0 %v814
      %840 = vmatpush.msra.mxu0 %v813
      %841 = vmatpush.msra.mxu0 %v812
      %842 = vmatpush.msra.mxu0 %v811
      %843 = vmatpush.msra.mxu0 %v810
      %844 = vmatpush.msra.mxu0 %v809
      %845 = vmatpush.msra.mxu0 %v808
      %846 = vmatpush.msra.mxu0 %v807
      %847 = vmatpush.msra.mxu0 %v806
      %848 = vmatpush.msra.mxu0 %v805
      %849 = vmatpush.msra.mxu0 %v804
      %850 = vmatpush.msra.mxu0 %v803
      %851 = vmatmul.f32.gmra.mxu0 %v801
      %v852 = vpop.f32.mrf.mxu0
      %v853 = vadd.f32 0.0, %v852
      %854 = vdwg.mxu0
      %855 = vmatpush.msra.mxu0 %v834
      %856 = vmatpush.msra.mxu0 %v833
      %857 = vmatpush.msra.mxu0 %v832
      %858 = vmatpush.msra.mxu0 %v831
      %859 = vmatpush.msra.mxu0 %v830
      %860 = vmatpush.msra.mxu0 %v829
      %861 = vmatpush.msra.mxu0 %v828
      %862 = vmatpush.msra.mxu0 %v827
      %863 = vmatpush.msra.mxu0 %v826
      %864 = vmatpush.msra.mxu0 %v825
      %865 = vmatpush.msra.mxu0 %v824
      %866 = vmatpush.msra.mxu0 %v823
      %867 = vmatpush.msra.mxu0 %v822
      %868 = vmatpush.msra.mxu0 %v821
      %869 = vmatpush.msra.mxu0 %v820
      %870 = vmatpush.msra.mxu0 %v819
      %871 = vmatmul.f32.gmra.mxu0 %v802
      %v872 = vpop.f32.mrf.mxu0
      %v873 = vadd.f32 %v853, %v872
      %874 = vdwg.mxu0
      %v875 = vadd.f32 %v618, %v873
      %v876 = vld [vmem:[%s10] sm:$0x1]
      %v878 = vperm.slane %v876, 0
      %v880 = vadd.f32 %v875, %v878
      %v881 = vld [vmem:[%s11] sm:$0xff]
      %v882 = vld [vmem:[%s12] sm:$0xff]
      %vm883 = vcmask 64512
      %v885 = vsel %vm883, %v882, 0
      %887 = vmatpush.msra.mxu0 0.0
      %888 = vmatpush.msra.mxu0 0.0
      %889 = vmatpush.msra.mxu0 0.0
      %890 = vmatpush.msra.mxu0 0.0
      %891 = vmatpush.msra.mxu0 0.0
      %892 = vmatpush.msra.mxu0 0.0
      %893 = vmatpush.msra.mxu0 0.0
      %894 = vmatpush.msra.mxu0 0.0
      %895 = vmatpush.msra.mxu0 0.0
      %896 = vmatpush.msra.mxu0 0.0
      %897 = vmatpush.msra.mxu0 0.0
      %898 = vmatpush.msra.mxu0 0.0
      %899 = vmatpush.msra.mxu0 0.0
      %900 = vmatpush.msra.mxu0 0.0
      %901 = vmatpush.msra.mxu0 0.0
      %902 = vmatpush.msra.mxu0 %v880
      %903 = vmatmul.f32.gmra.mxu0 %v885
      %v904 = vpop.f32.mrf.mxu0
      %v905 = vadd.f32 0.0, %v904
      %906 = vdwg.mxu0
      %v908 = vsel %vm883, %v881, 0
      %910 = vmatpush.msra.mxu0 0.0
      %911 = vmatpush.msra.mxu0 0.0
      %912 = vmatpush.msra.mxu0 0.0
      %913 = vmatpush.msra.mxu0 0.0
      %914 = vmatpush.msra.mxu0 0.0
      %915 = vmatpush.msra.mxu0 0.0
      %916 = vmatpush.msra.mxu0 0.0
      %917 = vmatpush.msra.mxu0 0.0
      %918 = vmatpush.msra.mxu0 0.0
      %919 = vmatpush.msra.mxu0 0.0
      %920 = vmatpush.msra.mxu0 0.0
      %921 = vmatpush.msra.mxu0 0.0
      %922 = vmatpush.msra.mxu0 0.0
      %923 = vmatpush.msra.mxu0 0.0
      %924 = vmatpush.msra.mxu0 0.0
      %925 = vmatpush.msra.mxu0 %v580
      %926 = vmatmul.f32.gmra.mxu0 %v908
      %v927 = vpop.f32.mrf.mxu0
      %v928 = vadd.f32 %v905, %v927
      %929 = vdwg.mxu0
      %v930 = vld [vmem:[%s13] sm:$0xff]
      %932 = vset.pattern.permute.xlu0 0
      %933 = vperm.xlu0 %932, %v930
      %v934 = vpop.permute.xlu0 %933
      %v936 = vadd.f32 %v928, %v934
      %v937 = vld [vmem:[%s16] sm:$0xff]
      %v938 = vld [vmem:[%s16 + $0x8] sm:$0xff]
      %v939 = vld [vmem:[%s16 + $0x10] sm:$0xff]
      %v940 = vld [vmem:[%s16 + $0x18] sm:$0xff]
      %v941 = vld [vmem:[%s16 + $0x20] sm:$0xff]
      %v942 = vld [vmem:[%s16 + $0x28] sm:$0xff]
      %v943 = vld [vmem:[%s16 + $0x30] sm:$0xff]
      %v944 = vld [vmem:[%s16 + $0x38] sm:$0xff]
      %v945 = vld [vmem:[%s16 + $0x40] sm:$0xff]
      %v946 = vld [vmem:[%s16 + $0x48] sm:$0xff]
      %v947 = vld [vmem:[%s16 + $0x50] sm:$0xff]
      %v948 = vld [vmem:[%s16 + $0x58] sm:$0xff]
      %v949 = vld [vmem:[%s16 + $0x60] sm:$0xff]
      %v950 = vld [vmem:[%s16 + $0x68] sm:$0xff]
      %v951 = vld [vmem:[%s16 + $0x70] sm:$0xff]
      %v952 = vld [vmem:[%s16 + $0x78] sm:$0xff]
      %v953 = vld [vmem:[%s16 + $0x80] sm:$0xff]
      %v954 = vld [vmem:[%s16 + $0x88] sm:$0xff]
      %v955 = vld [vmem:[%s16 + $0x90] sm:$0xff]
      %v956 = vld [vmem:[%s16 + $0x98] sm:$0xff]
      %v957 = vld [vmem:[%s16 + $0xa0] sm:$0xff]
      %v958 = vld [vmem:[%s16 + $0xa8] sm:$0xff]
      %v959 = vld [vmem:[%s16 + $0xb0] sm:$0xff]
      %v960 = vld [vmem:[%s16 + $0xb8] sm:$0xff]
      %v961 = vld [vmem:[%s16 + $0xc0] sm:$0xff]
      %v962 = vld [vmem:[%s16 + $0xc8] sm:$0xff]
      %v963 = vld [vmem:[%s16 + $0xd0] sm:$0xff]
      %v964 = vld [vmem:[%s16 + $0xd8] sm:$0xff]
      %v965 = vld [vmem:[%s16 + $0xe0] sm:$0xff]
      %v966 = vld [vmem:[%s16 + $0xe8] sm:$0xff]
      %v967 = vld [vmem:[%s16 + $0xf0] sm:$0xff]
      %v968 = vld [vmem:[%s16 + $0xf8] sm:$0xff]
      %v969 = vld [vmem:[%s16 + $0x100] sm:$0xff]
      %v970 = vld [vmem:[%s16 + $0x108] sm:$0xff]
      %v971 = vld [vmem:[%s16 + $0x110] sm:$0xff]
      %v972 = vld [vmem:[%s16 + $0x118] sm:$0xff]
      %v973 = vld [vmem:[%s16 + $0x120] sm:$0xff]
      %v974 = vld [vmem:[%s16 + $0x128] sm:$0xff]
      %v975 = vld [vmem:[%s16 + $0x130] sm:$0xff]
      %v976 = vld [vmem:[%s16 + $0x138] sm:$0xff]
      %v978 = vsel %vm589, %v936, 0
      %980 = vmatpush.msra.mxu0 0.0
      %981 = vmatpush.msra.mxu0 0.0
      %982 = vmatpush.msra.mxu0 0.0
      %983 = vmatpush.msra.mxu0 0.0
      %984 = vmatpush.msra.mxu0 0.0
      %985 = vmatpush.msra.mxu0 0.0
      %986 = vmatpush.msra.mxu0 0.0
      %987 = vmatpush.msra.mxu0 0.0
      %988 = vmatpush.msra.mxu0 %v972
      %989 = vmatpush.msra.mxu0 %v967
      %990 = vmatpush.msra.mxu0 %v962
      %991 = vmatpush.msra.mxu0 %v957
      %992 = vmatpush.msra.mxu0 %v952
      %993 = vmatpush.msra.mxu0 %v947
      %994 = vmatpush.msra.mxu0 %v942
      %995 = vmatpush.msra.mxu0 %v937
      %996 = vmatmul.f32.gmra.mxu0 %v978
      %v997 = vpop.f32.mrf.mxu0
      %v998 = vadd.f32 0.0, %v997
      %999 = vdwg.mxu0
      %1000 = vmatpush.msra.mxu0 0.0
      %1001 = vmatpush.msra.mxu0 0.0
      %1002 = vmatpush.msra.mxu0 0.0
      %1003 = vmatpush.msra.mxu0 0.0
      %1004 = vmatpush.msra.mxu0 0.0
      %1005 = vmatpush.msra.mxu0 0.0
      %1006 = vmatpush.msra.mxu0 0.0
      %1007 = vmatpush.msra.mxu0 0.0
      %1008 = vmatpush.msra.mxu0 %v973
      %1009 = vmatpush.msra.mxu0 %v968
      %1010 = vmatpush.msra.mxu0 %v963
      %1011 = vmatpush.msra.mxu0 %v958
      %1012 = vmatpush.msra.mxu0 %v953
      %1013 = vmatpush.msra.mxu0 %v948
      %1014 = vmatpush.msra.mxu0 %v943
      %1015 = vmatpush.msra.mxu0 %v938
      %1016 = vmatmul.f32.gmra.mxu0 %v978
      %v1017 = vpop.f32.mrf.mxu0
      %v1018 = vadd.f32 0.0, %v1017
      %1019 = vdwg.mxu0
      %1020 = vmatpush.msra.mxu0 0.0
      %1021 = vmatpush.msra.mxu0 0.0
      %1022 = vmatpush.msra.mxu0 0.0
      %1023 = vmatpush.msra.mxu0 0.0
      %1024 = vmatpush.msra.mxu0 0.0
      %1025 = vmatpush.msra.mxu0 0.0
      %1026 = vmatpush.msra.mxu0 0.0
      %1027 = vmatpush.msra.mxu0 0.0
      %1028 = vmatpush.msra.mxu0 %v974
      %1029 = vmatpush.msra.mxu0 %v969
      %1030 = vmatpush.msra.mxu0 %v964
      %1031 = vmatpush.msra.mxu0 %v959
      %1032 = vmatpush.msra.mxu0 %v954
      %1033 = vmatpush.msra.mxu0 %v949
      %1034 = vmatpush.msra.mxu0 %v944
      %1035 = vmatpush.msra.mxu0 %v939
      %1036 = vmatmul.f32.gmra.mxu0 %v978
      %v1037 = vpop.f32.mrf.mxu0
      %v1038 = vadd.f32 0.0, %v1037
      %1039 = vdwg.mxu0
      %1040 = vmatpush.msra.mxu0 0.0
      %1041 = vmatpush.msra.mxu0 0.0
      %1042 = vmatpush.msra.mxu0 0.0
      %1043 = vmatpush.msra.mxu0 0.0
      %1044 = vmatpush.msra.mxu0 0.0
      %1045 = vmatpush.msra.mxu0 0.0
      %1046 = vmatpush.msra.mxu0 0.0
      %1047 = vmatpush.msra.mxu0 0.0
      %1048 = vmatpush.msra.mxu0 %v975
      %1049 = vmatpush.msra.mxu0 %v970
      %1050 = vmatpush.msra.mxu0 %v965
      %1051 = vmatpush.msra.mxu0 %v960
      %1052 = vmatpush.msra.mxu0 %v955
      %1053 = vmatpush.msra.mxu0 %v950
      %1054 = vmatpush.msra.mxu0 %v945
      %1055 = vmatpush.msra.mxu0 %v940
      %1056 = vmatmul.f32.gmra.mxu0 %v978
      %v1057 = vpop.f32.mrf.mxu0
      %v1058 = vadd.f32 0.0, %v1057
      %1059 = vdwg.mxu0
      %1060 = vmatpush.msra.mxu0 0.0
      %1061 = vmatpush.msra.mxu0 0.0
      %1062 = vmatpush.msra.mxu0 0.0
      %1063 = vmatpush.msra.mxu0 0.0
      %1064 = vmatpush.msra.mxu0 0.0
      %1065 = vmatpush.msra.mxu0 0.0
      %1066 = vmatpush.msra.mxu0 0.0
      %1067 = vmatpush.msra.mxu0 0.0
      %1068 = vmatpush.msra.mxu0 %v976
      %1069 = vmatpush.msra.mxu0 %v971
      %1070 = vmatpush.msra.mxu0 %v966
      %1071 = vmatpush.msra.mxu0 %v961
      %1072 = vmatpush.msra.mxu0 %v956
      %1073 = vmatpush.msra.mxu0 %v951
      %1074 = vmatpush.msra.mxu0 %v946
      %1075 = vmatpush.msra.mxu0 %v941
      %1076 = vmatmul.f32.gmra.mxu0 %v978
      %v1077 = vpop.f32.mrf.mxu0
      %v1078 = vadd.f32 0.0, %v1077
      %1079 = vdwg.mxu0
      %v1080 = vld [vmem:[%s14] sm:$0xff]
      %v1081 = vld [vmem:[%s14 + $0x8] sm:$0xff]
      %v1082 = vld [vmem:[%s14 + $0x10] sm:$0xff]
      %v1083 = vld [vmem:[%s14 + $0x18] sm:$0xff]
      %v1084 = vld [vmem:[%s14 + $0x20] sm:$0xff]
      %v1085 = vld [vmem:[%s14 + $0x28] sm:$0xff]
      %v1086 = vld [vmem:[%s14 + $0x30] sm:$0xff]
      %v1087 = vld [vmem:[%s14 + $0x38] sm:$0xff]
      %v1088 = vld [vmem:[%s14 + $0x40] sm:$0xff]
      %v1089 = vld [vmem:[%s15] sm:$0xff]
      %v1091 = vsel %vm883, %v1080, 0
      %1093 = vmatpush.msra.mxu0 0.0
      %1094 = vmatpush.msra.mxu0 0.0
      %1095 = vmatpush.msra.mxu0 0.0
      %1096 = vmatpush.msra.mxu0 0.0
      %1097 = vmatpush.msra.mxu0 0.0
      %1098 = vmatpush.msra.mxu0 0.0
      %1099 = vmatpush.msra.mxu0 0.0
      %1100 = vmatpush.msra.mxu0 0.0
      %1101 = vmatpush.msra.mxu0 0.0
      %1102 = vmatpush.msra.mxu0 0.0
      %1103 = vmatpush.msra.mxu0 0.0
      %1104 = vmatpush.msra.mxu0 0.0
      %1105 = vmatpush.msra.mxu0 0.0
      %1106 = vmatpush.msra.mxu0 0.0
      %1107 = vmatpush.msra.mxu0 0.0
      %1108 = vmatpush.msra.mxu0 %v998
      %1109 = vmatmul.f32.gmra.mxu0 %v1091
      %v1110 = vpop.f32.mrf.mxu0
      %v1111 = vadd.f32 0.0, %v1110
      %1112 = vdwg.mxu0
      %1114 = vset.pattern.permute.xlu0 0
      %1115 = vperm.xlu0 %1114, %v1089
      %v1116 = vpop.permute.xlu0 %1115
      %v1118 = vadd.f32 %v1116, %v1111
      %1120 = vrot.lane.b32.xlu0 %v998, 64
      %v1121 = vpop.permute.xlu0 %1120
      %v1124 = vsel %vm883, %v1081, 0
      %1126 = vmatpush.msra.mxu0 0.0
      %1127 = vmatpush.msra.mxu0 0.0
      %1128 = vmatpush.msra.mxu0 0.0
      %1129 = vmatpush.msra.mxu0 0.0
      %1130 = vmatpush.msra.mxu0 0.0
      %1131 = vmatpush.msra.mxu0 0.0
      %1132 = vmatpush.msra.mxu0 0.0
      %1133 = vmatpush.msra.mxu0 0.0
      %1134 = vmatpush.msra.mxu0 0.0
      %1135 = vmatpush.msra.mxu0 0.0
      %1136 = vmatpush.msra.mxu0 0.0
      %1137 = vmatpush.msra.mxu0 0.0
      %1138 = vmatpush.msra.mxu0 0.0
      %1139 = vmatpush.msra.mxu0 0.0
      %1140 = vmatpush.msra.mxu0 0.0
      %1141 = vmatpush.msra.mxu0 %v1121
      %1142 = vmatmul.f32.gmra.mxu0 %v1124
      %v1143 = vpop.f32.mrf.mxu0
      %v1144 = vadd.f32 0.0, %v1143
      %1145 = vdwg.mxu0
      %v1146 = vadd.f32 %v1118, %v1144
      %v1148 = vsel %vm883, %v1082, 0
      %1150 = vmatpush.msra.mxu0 0.0
      %1151 = vmatpush.msra.mxu0 0.0
      %1152 = vmatpush.msra.mxu0 0.0
      %1153 = vmatpush.msra.mxu0 0.0
      %1154 = vmatpush.msra.mxu0 0.0
      %1155 = vmatpush.msra.mxu0 0.0
      %1156 = vmatpush.msra.mxu0 0.0
      %1157 = vmatpush.msra.mxu0 0.0
      %1158 = vmatpush.msra.mxu0 0.0
      %1159 = vmatpush.msra.mxu0 0.0
      %1160 = vmatpush.msra.mxu0 0.0
      %1161 = vmatpush.msra.mxu0 0.0
      %1162 = vmatpush.msra.mxu0 0.0
      %1163 = vmatpush.msra.mxu0 0.0
      %1164 = vmatpush.msra.mxu0 0.0
      %1165 = vmatpush.msra.mxu0 %v1018
      %1166 = vmatmul.f32.gmra.mxu0 %v1148
      %v1167 = vpop.f32.mrf.mxu0
      %v1168 = vadd.f32 0.0, %v1167
      %1169 = vdwg.mxu0
      %v1170 = vadd.f32 %v1146, %v1168
      %1172 = vrot.lane.b32.xlu0 %v1018, 64
      %v1173 = vpop.permute.xlu0 %1172
      %v1176 = vsel %vm883, %v1083, 0
      %1178 = vmatpush.msra.mxu0 0.0
      %1179 = vmatpush.msra.mxu0 0.0
      %1180 = vmatpush.msra.mxu0 0.0
      %1181 = vmatpush.msra.mxu0 0.0
      %1182 = vmatpush.msra.mxu0 0.0
      %1183 = vmatpush.msra.mxu0 0.0
      %1184 = vmatpush.msra.mxu0 0.0
      %1185 = vmatpush.msra.mxu0 0.0
      %1186 = vmatpush.msra.mxu0 0.0
      %1187 = vmatpush.msra.mxu0 0.0
      %1188 = vmatpush.msra.mxu0 0.0
      %1189 = vmatpush.msra.mxu0 0.0
      %1190 = vmatpush.msra.mxu0 0.0
      %1191 = vmatpush.msra.mxu0 0.0
      %1192 = vmatpush.msra.mxu0 0.0
      %1193 = vmatpush.msra.mxu0 %v1173
      %1194 = vmatmul.f32.gmra.mxu0 %v1176
      %v1195 = vpop.f32.mrf.mxu0
      %v1196 = vadd.f32 0.0, %v1195
      %1197 = vdwg.mxu0
      %v1198 = vadd.f32 %v1170, %v1196
      %v1200 = vsel %vm883, %v1084, 0
      %1202 = vmatpush.msra.mxu0 0.0
      %1203 = vmatpush.msra.mxu0 0.0
      %1204 = vmatpush.msra.mxu0 0.0
      %1205 = vmatpush.msra.mxu0 0.0
      %1206 = vmatpush.msra.mxu0 0.0
      %1207 = vmatpush.msra.mxu0 0.0
      %1208 = vmatpush.msra.mxu0 0.0
      %1209 = vmatpush.msra.mxu0 0.0
      %1210 = vmatpush.msra.mxu0 0.0
      %1211 = vmatpush.msra.mxu0 0.0
      %1212 = vmatpush.msra.mxu0 0.0
      %1213 = vmatpush.msra.mxu0 0.0
      %1214 = vmatpush.msra.mxu0 0.0
      %1215 = vmatpush.msra.mxu0 0.0
      %1216 = vmatpush.msra.mxu0 0.0
      %1217 = vmatpush.msra.mxu0 %v1038
      %1218 = vmatmul.f32.gmra.mxu0 %v1200
      %v1219 = vpop.f32.mrf.mxu0
      %v1220 = vadd.f32 0.0, %v1219
      %1221 = vdwg.mxu0
      %v1222 = vadd.f32 %v1198, %v1220
      %1224 = vrot.lane.b32.xlu0 %v1038, 64
      %v1225 = vpop.permute.xlu0 %1224
      %v1228 = vsel %vm883, %v1085, 0
      %1230 = vmatpush.msra.mxu0 0.0
      %1231 = vmatpush.msra.mxu0 0.0
      %1232 = vmatpush.msra.mxu0 0.0
      %1233 = vmatpush.msra.mxu0 0.0
      %1234 = vmatpush.msra.mxu0 0.0
      %1235 = vmatpush.msra.mxu0 0.0
      %1236 = vmatpush.msra.mxu0 0.0
      %1237 = vmatpush.msra.mxu0 0.0
      %1238 = vmatpush.msra.mxu0 0.0
      %1239 = vmatpush.msra.mxu0 0.0
      %1240 = vmatpush.msra.mxu0 0.0
      %1241 = vmatpush.msra.mxu0 0.0
      %1242 = vmatpush.msra.mxu0 0.0
      %1243 = vmatpush.msra.mxu0 0.0
      %1244 = vmatpush.msra.mxu0 0.0
      %1245 = vmatpush.msra.mxu0 %v1225
      %1246 = vmatmul.f32.gmra.mxu0 %v1228
      %v1247 = vpop.f32.mrf.mxu0
      %v1248 = vadd.f32 0.0, %v1247
      %1249 = vdwg.mxu0
      %v1250 = vadd.f32 %v1222, %v1248
      %v1252 = vsel %vm883, %v1086, 0
      %1254 = vmatpush.msra.mxu0 0.0
      %1255 = vmatpush.msra.mxu0 0.0
      %1256 = vmatpush.msra.mxu0 0.0
      %1257 = vmatpush.msra.mxu0 0.0
      %1258 = vmatpush.msra.mxu0 0.0
      %1259 = vmatpush.msra.mxu0 0.0
      %1260 = vmatpush.msra.mxu0 0.0
      %1261 = vmatpush.msra.mxu0 0.0
      %1262 = vmatpush.msra.mxu0 0.0
      %1263 = vmatpush.msra.mxu0 0.0
      %1264 = vmatpush.msra.mxu0 0.0
      %1265 = vmatpush.msra.mxu0 0.0
      %1266 = vmatpush.msra.mxu0 0.0
      %1267 = vmatpush.msra.mxu0 0.0
      %1268 = vmatpush.msra.mxu0 0.0
      %1269 = vmatpush.msra.mxu0 %v1058
      %1270 = vmatmul.f32.gmra.mxu0 %v1252
      %v1271 = vpop.f32.mrf.mxu0
      %v1272 = vadd.f32 0.0, %v1271
      %1273 = vdwg.mxu0
      %v1274 = vadd.f32 %v1250, %v1272
      %1276 = vrot.lane.b32.xlu0 %v1058, 64
      %v1277 = vpop.permute.xlu0 %1276
      %v1280 = vsel %vm883, %v1087, 0
      %1282 = vmatpush.msra.mxu0 0.0
      %1283 = vmatpush.msra.mxu0 0.0
      %1284 = vmatpush.msra.mxu0 0.0
      %1285 = vmatpush.msra.mxu0 0.0
      %1286 = vmatpush.msra.mxu0 0.0
      %1287 = vmatpush.msra.mxu0 0.0
      %1288 = vmatpush.msra.mxu0 0.0
      %1289 = vmatpush.msra.mxu0 0.0
      %1290 = vmatpush.msra.mxu0 0.0
      %1291 = vmatpush.msra.mxu0 0.0
      %1292 = vmatpush.msra.mxu0 0.0
      %1293 = vmatpush.msra.mxu0 0.0
      %1294 = vmatpush.msra.mxu0 0.0
      %1295 = vmatpush.msra.mxu0 0.0
      %1296 = vmatpush.msra.mxu0 0.0
      %1297 = vmatpush.msra.mxu0 %v1277
      %1298 = vmatmul.f32.gmra.mxu0 %v1280
      %v1299 = vpop.f32.mrf.mxu0
      %v1300 = vadd.f32 0.0, %v1299
      %1301 = vdwg.mxu0
      %v1302 = vadd.f32 %v1274, %v1300
      %v1304 = vsel %vm883, %v1088, 0
      %1306 = vmatpush.msra.mxu0 0.0
      %1307 = vmatpush.msra.mxu0 0.0
      %1308 = vmatpush.msra.mxu0 0.0
      %1309 = vmatpush.msra.mxu0 0.0
      %1310 = vmatpush.msra.mxu0 0.0
      %1311 = vmatpush.msra.mxu0 0.0
      %1312 = vmatpush.msra.mxu0 0.0
      %1313 = vmatpush.msra.mxu0 0.0
      %1314 = vmatpush.msra.mxu0 0.0
      %1315 = vmatpush.msra.mxu0 0.0
      %1316 = vmatpush.msra.mxu0 0.0
      %1317 = vmatpush.msra.mxu0 0.0
      %1318 = vmatpush.msra.mxu0 0.0
      %1319 = vmatpush.msra.mxu0 0.0
      %1320 = vmatpush.msra.mxu0 0.0
      %1321 = vmatpush.msra.mxu0 %v1078
      %1322 = vmatmul.f32.gmra.mxu0 %v1304
      %v1323 = vpop.f32.mrf.mxu0
      %v1324 = vadd.f32 0.0, %v1323
      %1325 = vdwg.mxu0
      %v1326 = vadd.f32 %v1302, %v1324
      %vm1327 = vcmp.ge.f32.partialorder %v1326, 0.0
      %v1328 = vmul.f32 %v1326, 0.01
      %v1329 = vsel %vm1327, %v1326, %v1328
      %1330 = vst.msk [vmem:[%s577] sm:$0xff] %vm589, %v1329
      %p1331 = scmp.lt.s32.totalorder %s28, 1
      %s1332 = scalar_select %p1331, %s28, 1
      %s1333 = smul.addr %s1332, 8
      %s1334 = scalar_lea.vmem %s17, %s1333
      // Predicated region
      $region89: #{conv_attention_block.5} parent=87 // pred_check
        %p1335 = pneg %p418
      $region90: #{conv_attention_block.5} parent=87 // pred_check_branch
        %1337 = sbr.rel (%p1335) target = $region92
      $region91: #{conv_attention_block.5} parent=87 // pred_region
        _
      $region92: #{conv_attention_block.5} parent=87 // pred_fallthru
        _
    $region88: #{conv_attention_block.5} parent=5 // pred_fallthru
      _
    %p1338 = scmp.le.s32.totalorder 2, %s23
    // Predicated region
    $region93: #{conv_attention_block.5} parent=5 // pred_check
      %p1339 = pneg %p1338
    $region94: #{conv_attention_block.5} parent=5 // pred_check_branch
      %1341 = sbr.rel (%p1339) target = $region96
    $region95: #{conv_attention_block.5} parent=5 // pred_region
      %s1342 = ssub.s32 %s23, 2
      // Predicated region
      $region97: #{conv_attention_block.5} parent=95 // pred_check
        %p1343 = pneg %p424
      $region98: #{conv_attention_block.5} parent=95 // pred_check_branch
        %1345 = sbr.rel (%p1343) target = $region100
      $region99: #{conv_attention_block.5} parent=95 // pred_region
        %p1346 = scmp.lt.s32.totalorder %s29, 1
        %s1347 = scalar_select %p1346, %s29, 1
        %s1348 = smul.addr %s1347, 8
        %s1349 = scalar_lea.vmem %s17, %s1348
      $region100: #{conv_attention_block.5} parent=95 // pred_fallthru
        _
    $region96: #{conv_attention_block.5} parent=5 // pred_fallthru
      _
  $region6: #{conv_attention_block.5} parent=0 // loop_footer
    %s27 = sadd.s32 1, %s23
  $region7: #{conv_attention_block.5} parent=0 // loop_footer_branch
    %22 = sbr.rel target = $region3
  $region8: #{conv_attention_block.5} parent=0 // loop_exit
    _

</llo_original>
